<compile_context>
chip_gen: v6e
topology: v6e:2x2x1
jax: 0.10.0
libtpu: 0.0.40
codegen_flags: <defaults>
</compile_context>

<pallas_src>
import functools

import numpy as np
import jax
import jax.numpy as jnp
from jax.experimental import pallas as pl
from jax.experimental.pallas import tpu as pltpu

D_IN, D_HID, D_ATT = 1024, 512, 256   # size_dict['resnet50'] = [1024, 512, 256]
N_CLASSES = 2
K_SAMPLE = 8


def _round_up(x, m):
    return ((x + m - 1) // m) * m


def _tpu_defaults():
    """(tile_n, n_split) per TPU generation.  v5e -> smaller tile; v7x -> 2 TensorCores."""
    kind = ""
    try:
        kind = jax.devices()[0].device_kind.lower()
    except Exception:
        pass
    tile_n = 512 if "v5" in kind else 1024
    n_split = 2 if "v7" in kind else 1
    return tile_n, n_split


# ---------------------------------------------------------------------------
# Fused kernel: fc + gated attention + online-softmax pooling (per-split partials)
# ---------------------------------------------------------------------------
def _clam_fused_kernel(h_ref, w1_ref, b1_ref, wab_ref, bab_ref, wc_ref, bc_ref,
                       a_ref, m_part_ref, l_part_ref, acc_part_ref,
                       m_sc, l_sc, acc_sc, *, n_valid, tn, tiles_per_split):
    c = pl.program_id(0)          # bag split (parallel; one per TensorCore on v7x)
    i = pl.program_id(1)          # tile within split (arbitrary; carries accumulators)

    @pl.when(i == 0)
    def _():
        m_sc[...] = jnp.full_like(m_sc, -jnp.inf)
        l_sc[...] = jnp.zeros_like(l_sc)
        acc_sc[...] = jnp.zeros_like(acc_sc)

    # fc: Linear(1024, 512) + ReLU.  h arrives as raw f32 straight from HBM; cast to
    # bf16 in VMEM so both matmuls hit the MXU with f32 accumulation.
    x_bf = h_ref[...].astype(jnp.bfloat16)
    h1 = jnp.dot(x_bf, w1_ref[...], preferred_element_type=jnp.float32)
    h1 = jnp.maximum(h1 + b1_ref[...], 0.0)                           # [tn, 512] f32

    # Logical (unclamped) row index -> validity mask.  Rows past the bag (ragged last
    # tile / clamped duplicate tiles) are zeroed so garbage can never reach the
    # accumulators (0 * NaN would poison them).
    row = (c * tiles_per_split + i) * tn + jax.lax.broadcasted_iota(jnp.int32, (tn, 1), 0)
    valid = row < n_valid
    h1 = jnp.where(valid, h1, 0.0)

    # Gated attention: one fused [512, 512] weight, split at a 128-lane boundary.
    h1_bf = h1.astype(jnp.bfloat16)
    ab = jnp.dot(h1_bf, wab_ref[...],
                 preferred_element_type=jnp.float32) + bab_ref[...]   # [tn, 512]
    a = jnp.tanh(ab[:, :D_ATT])
    b = jax.nn.sigmoid(ab[:, D_ATT:])
    gated = a * b                                                     # [tn, 256]
    # attention_c: Linear(256, 1) as a lane reduction (wc stored as [1, 256]).
    score = jnp.sum(gated * wc_ref[...], axis=-1, keepdims=True) + bc_ref[...]
    a_ref[...] = score                                                # raw scores [tn, 1]

    # ---- online softmax + attention pooling (flash-style accumulators) ----
    s_m = jnp.where(valid, score, -jnp.inf)
    m_old = m_sc[...]
    m_new = jnp.maximum(m_old, jnp.max(s_m, axis=0, keepdims=True))
    # Guard: a split made only of padded / duplicate tiles keeps m = -inf, and
    # exp(-inf - (-inf)) would be NaN.
    alpha = jnp.where(m_new > -jnp.inf, jnp.exp(m_old - m_new), 0.0)
    p = jnp.where(valid, jnp.exp(score - m_new), 0.0)                 # [tn, 1]
    l_sc[...] = alpha * l_sc[...] + jnp.sum(p, axis=0, keepdims=True)
    acc_sc[...] = alpha * acc_sc[...] + jnp.sum(p * h1, axis=0, keepdims=True)
    m_sc[...] = m_new

    @pl.when(i == pl.num_programs(1) - 1)
    def _():
        m_part_ref[...] = m_sc[...]
        l_part_ref[...] = l_sc[...]
        acc_part_ref[...] = acc_sc[...]


def clam_attention_pool(h, params, tn=None, n_split=None):
    """Fused fc + gated attention + online-softmax pooling.

    Returns (A_col [N,1] raw scores, M [1,512] pooled bag feature, logits [1,n_classes]).
    """
    N = h.shape[0]                                  # NOTE: N >= 1 assumed (as in PyTorch)
    d_tn, d_split = _tpu_defaults()
    tn = d_tn if tn is None else tn
    n_split = d_split if n_split is None else n_split
    tn = max(8, min(tn, _round_up(N, 8)))           # don't over-tile tiny bags
    total_tiles = -(-N // tn)
    n_split = max(1, min(n_split, total_tiles))
    tiles_per_split = -(-total_tiles // n_split)
    last_tile = total_tiles - 1
    n_pad = n_split * tiles_per_split * tn          # logical rows covered by the grid

    # Duplicate (out-of-range) tiles of a split are clamped onto the last real tile for
    # the HBM read and fully masked via n_valid; their A rows land in the padded tail.
    h_idx = lambda c, i: (jnp.minimum(c * tiles_per_split + i, last_tile), 0)
    a_idx = lambda c, i: (c * tiles_per_split + i, 0)
    part_idx = lambda c, i: (c, 0, 0)
    const = lambda shape: pl.BlockSpec(shape, lambda c, i: (0, 0))

    kernel = functools.partial(_clam_fused_kernel, n_valid=N, tn=tn,
                               tiles_per_split=tiles_per_split)

    flops = 2 * N * (D_IN * D_HID + D_HID * 2 * D_ATT + D_ATT + D_HID)
    bytes_accessed = (N * D_IN * 4 + n_pad * 4
                      + 2 * (D_IN * D_HID + D_HID * 2 * D_ATT))

    a_col, m_part, l_part, acc_part = pl.pallas_call(
        kernel,
        out_shape=(jax.ShapeDtypeStruct((n_pad, 1), jnp.float32),
                   jax.ShapeDtypeStruct((n_split, 1, 1), jnp.float32),
                   jax.ShapeDtypeStruct((n_split, 1, 1), jnp.float32),
                   jax.ShapeDtypeStruct((n_split, 1, D_HID), jnp.float32)),
        grid_spec=pltpu.PrefetchScalarGridSpec(
            num_scalar_prefetch=0,
            grid=(n_split, tiles_per_split),
            in_specs=[pl.BlockSpec((tn, D_IN), h_idx),
                      const((D_IN, D_HID)), const((1, D_HID)),
                      const((D_HID, 2 * D_ATT)), const((1, 2 * D_ATT)),
                      const((1, D_ATT)), const((1, 1))],
            out_specs=(pl.BlockSpec((tn, 1), a_idx),
                       pl.BlockSpec((None, 1, 1), part_idx),
                       pl.BlockSpec((None, 1, 1), part_idx),
                       pl.BlockSpec((None, 1, D_HID), part_idx)),
            scratch_shapes=[pltpu.VMEM((1, 1), jnp.float32),        # running max
                            pltpu.VMEM((1, 1), jnp.float32),        # running denom
                            pltpu.VMEM((1, D_HID), jnp.float32)]),  # pooled acc
        compiler_params=pltpu.CompilerParams(
            dimension_semantics=("parallel", "arbitrary"),
            vmem_limit_bytes=32 * 1024 * 1024),
        cost_estimate=pl.CostEstimate(flops=flops,
                                      transcendentals=N * (2 * D_ATT + 1),
                                      bytes_accessed=bytes_accessed),
    )(h, params["w1_bf16"], params["b1"], params["wab_bf16"], params["bab"],
      params["wc"], params["bc"])

    # Merge per-split online-softmax partials (log-sum-exp combine) and compute the
    # bag logits in the wrapper (tiny [1,512]x[512,2] matmul; free in XLA).
    m_p = m_part[:, 0, :]                                   # [S, 1]
    l_p = l_part[:, 0, :]                                   # [S, 1]
    acc_p = acc_part[:, 0, :]                               # [S, 512]
    m_max = jnp.max(m_p, axis=0, keepdims=True)             # [1, 1]
    w = jnp.exp(m_p - m_max)                                # fully-padded split -> 0
    l = jnp.sum(w * l_p, axis=0, keepdims=True)             # [1, 1]
    acc = jnp.sum(w * acc_p, axis=0, keepdims=True)         # [1, 512]
    M = acc / l                                             # NaN only for an empty bag
    logits = jnp.dot(M, params["w_cls"]) + params["b_cls"]
    return a_col[:N], M, logits


# ---------------------------------------------------------------------------
# Glue: instance evaluation (top-k, gather, cross-entropy) — plain JAX
# ---------------------------------------------------------------------------
def _fc_f32(rows, params):
    # Recompute fc for the <=16 selected rows in f32 (avoids writing h1 [N,512] to HBM).
    return jnp.maximum(jnp.dot(rows, params["w1"]) + params["b1"], 0.0)


def _cross_entropy_mean(logits, targets):
    logp = jax.nn.log_softmax(logits, axis=-1)
    return -jnp.mean(jnp.take_along_axis(logp, targets[:, None], axis=-1)[:, 0])


def _inst_eval(A_row, h_raw, params, w, b):
    # mirrors CLAM_SB.inst_eval; A_row is the softmaxed [N] attention row
    top_p_ids = jax.lax.top_k(A_row, K_SAMPLE)[1]
    top_n_ids = jax.lax.top_k(-A_row, K_SAMPLE)[1]
    ids = jnp.concatenate([top_p_ids, top_n_ids])
    inst = _fc_f32(h_raw[ids], params)                          # [2k, 512]
    logits = jnp.dot(inst, w) + b                               # [2k, 2]
    targets = jnp.concatenate([jnp.ones((K_SAMPLE,), jnp.int32),
                               jnp.zeros((K_SAMPLE,), jnp.int32)])
    preds = jnp.argmax(logits, axis=1)
    return _cross_entropy_mean(logits, targets), preds, targets


def _inst_eval_out(A_row, h_raw, params, w, b):
    # mirrors CLAM_SB.inst_eval_out (used only when subtyping=True)
    top_p_ids = jax.lax.top_k(A_row, K_SAMPLE)[1]
    inst = _fc_f32(h_raw[top_p_ids], params)
    logits = jnp.dot(inst, w) + b
    targets = jnp.zeros((K_SAMPLE,), jnp.int32)
    preds = jnp.argmax(logits, axis=1)
    return _cross_entropy_mean(logits, targets), preds, targets


# ---------------------------------------------------------------------------
# Full CLAM_SB forward
# ---------------------------------------------------------------------------
def clam_sb_forward(h, params, label=None, instance_eval=True,
                    return_features=False, attention_only=False,
                    subtyping=False, tn=None, n_split=None):
    A_col, M, logits = clam_attention_pool(h, params, tn=tn, n_split=n_split)
    A_raw = A_col.T                                   # torch.transpose(A, 1, 0) -> [1, N]
    if attention_only:
        return A_raw

    results_dict = {}
    if instance_eval:
        total_inst_loss = 0.0
        all_preds, all_targets = [], []
        inst_labels = np.eye(N_CLASSES, dtype=np.int32)[int(label)]  # one-hot
        A_soft = jax.nn.softmax(A_raw, axis=1)[-1]    # same top-k indices as raw A
        for i in range(N_CLASSES):
            if inst_labels[i] == 1:
                loss, preds, targets = _inst_eval(
                    A_soft, h, params, params["inst_w"][i], params["inst_b"][i])
            elif subtyping:
                loss, preds, targets = _inst_eval_out(
                    A_soft, h, params, params["inst_w"][i], params["inst_b"][i])
            else:
                continue
            all_preds.extend(np.asarray(preds))
            all_targets.extend(np.asarray(targets))
            total_inst_loss = total_inst_loss + loss
        if subtyping:
            total_inst_loss = total_inst_loss / N_CLASSES
        results_dict = {"instance_loss": total_inst_loss,
                        "inst_labels": np.array(all_targets),
                        "inst_preds": np.array(all_preds)}

    if return_features:
        results_dict["features"] = M
    return logits, None, A_raw, results_dict


# ---------------------------------------------------------------------------
# Deterministic parameter init (synthetic; shapes from CLAM_SB.__init__) +
# hoisted kernel-operand prep (done once, not per forward call).
# ---------------------------------------------------------------------------
def init_params(key):
    ks = jax.random.split(key, 16)
    s = 0.02
    rnd = lambda k, shape: (s * jax.random.normal(k, shape)).astype(jnp.float32)
    p = {
        "w1": rnd(ks[0], (D_IN, D_HID)),   "b1": rnd(ks[1], (1, D_HID)),
        "wa": rnd(ks[2], (D_HID, D_ATT)),  "ba": rnd(ks[3], (1, D_ATT)),
        "wb": rnd(ks[4], (D_HID, D_ATT)),  "bb": rnd(ks[5], (1, D_ATT)),
        # attention_c weight stored as [1, 256] so the kernel does a lane reduce
        "wc": rnd(ks[6], (1, D_ATT)),      "bc": rnd(ks[7], (1, 1)),
        "w_cls": rnd(ks[8], (D_HID, N_CLASSES)), "b_cls": rnd(ks[9], (1, N_CLASSES)),
        "inst_w": [rnd(ks[10 + i], (D_HID, N_CLASSES)) for i in range(N_CLASSES)],
        "inst_b": [rnd(ks[12 + i], (1, N_CLASSES)) for i in range(N_CLASSES)],
    }
    p["w1_bf16"] = p["w1"].astype(jnp.bfloat16)
    p["wab_bf16"] = jnp.concatenate([p["wa"], p["wb"]], axis=1).astype(jnp.bfloat16)
    p["bab"] = jnp.concatenate([p["ba"], p["bb"]], axis=1)
    return p


def clam_reference(h, params):
    """Pure-JAX f32 reference of the attention/pooling path (for verification)."""
    h1 = jnp.maximum(jnp.dot(h, params["w1"]) + params["b1"], 0.0)
    a = jnp.tanh(jnp.dot(h1, params["wa"]) + params["ba"])
    b = jax.nn.sigmoid(jnp.dot(h1, params["wb"]) + params["bb"])
    A_col = jnp.dot(a * b, params["wc"].T) + params["bc"]
    A_soft = jax.nn.softmax(A_col.T, axis=1)
    M = jnp.dot(A_soft, h1)
    logits = jnp.dot(M, params["w_cls"]) + params["b_cls"]
    return A_col.T, M, logits


if __name__ == "__main__":
    key = jax.random.PRNGKey(0)
    pkey, hkey = jax.random.split(key)
    params = init_params(pkey)

    # (bag size, tile override, split override).  Overrides exercise the ragged last
    # tile, the clamped duplicate tile and the 2-split partial-combine path on every
    # TPU generation; (64, None, None) uses the per-generation defaults.
    configs = [(64, None, None), (256, 128, 2), (300, 128, 2)]
    for n, tn, n_split in configs:
        h = jax.random.normal(jax.random.fold_in(hkey, n), (n, D_IN), dtype=jnp.float32)
        A_ref, M_ref, logits_ref = clam_reference(h, params)

        logits, y_prob, A_raw, results = clam_sb_forward(
            h, params, label=1, instance_eval=True, return_features=True,
            tn=tn, n_split=n_split)
        jax.block_until_ready((logits, A_raw, results["instance_loss"],
                               results["features"]))

        assert logits.shape == (1, N_CLASSES)
        assert A_raw.shape == (1, n)
        assert results["features"].shape == (1, D_HID)
        np.testing.assert_allclose(np.asarray(A_raw), np.asarray(A_ref),
                                   rtol=5e-2, atol=2e-2)
        np.testing.assert_allclose(np.asarray(results["features"]), np.asarray(M_ref),
                                   rtol=5e-2, atol=2e-2)
        np.testing.assert_allclose(np.asarray(logits), np.asarray(logits_ref),
                                   rtol=5e-2, atol=2e-2)
        assert bool(jnp.isfinite(results["instance_loss"]))

    print("KERNEL_OK")
</pallas_src>

<mosaic_0001>
module attributes {stable_mosaic.version = 11 : i64} {
  func.func @_clam_fused_kernel(%arg0: i32, %arg1: i32, %arg2: memref<64x1024xf32, #tpu.memory_space<vmem>>, %arg3: memref<1024x512xbf16, #tpu.memory_space<vmem>>, %arg4: memref<1x512xf32, #tpu.memory_space<vmem>>, %arg5: memref<512x512xbf16, #tpu.memory_space<vmem>>, %arg6: memref<1x512xf32, #tpu.memory_space<vmem>>, %arg7: memref<1x256xf32, #tpu.memory_space<vmem>>, %arg8: memref<1x1xf32, #tpu.memory_space<vmem>>, %arg9: memref<64x1xf32, #tpu.memory_space<vmem>>, %arg10: memref<1x1x1xf32, #tpu.memory_space<vmem>>, %arg11: memref<1x1x1xf32, #tpu.memory_space<vmem>>, %arg12: memref<1x1x512xf32, #tpu.memory_space<vmem>>, %arg13: memref<1x1xf32, #tpu.memory_space<vmem>>, %arg14: memref<1x1xf32, #tpu.memory_space<vmem>>, %arg15: memref<1x512xf32, #tpu.memory_space<vmem>>) attributes {dimension_semantics = [#tpu.dimension_semantics<parallel>, #tpu.dimension_semantics<arbitrary>], iteration_bounds = array<i64: 1, 1>, scalar_prefetch = 0 : i64, scratch_operands = 3 : i64, tpu.core_type = #tpu.core_type<tc>, window_params = [{transform_indices = @transform_0, window_bounds = array<i64: 64, 1024>}, {pipeline_mode = #tpu.pipeline_mode<synchronous>, transform_indices = @transform_1, window_bounds = array<i64: 1024, 512>}, {pipeline_mode = #tpu.pipeline_mode<synchronous>, transform_indices = @transform_2, window_bounds = array<i64: 1, 512>}, {pipeline_mode = #tpu.pipeline_mode<synchronous>, transform_indices = @transform_3, window_bounds = array<i64: 512, 512>}, {pipeline_mode = #tpu.pipeline_mode<synchronous>, transform_indices = @transform_4, window_bounds = array<i64: 1, 512>}, {pipeline_mode = #tpu.pipeline_mode<synchronous>, transform_indices = @transform_5, window_bounds = array<i64: 1, 256>}, {pipeline_mode = #tpu.pipeline_mode<synchronous>, transform_indices = @transform_6, window_bounds = array<i64: 1, 1>}, {transform_indices = @transform_7, window_bounds = array<i64: 64, 1>}, {transform_indices = @transform_8, window_bounds = array<i64: 1, 1, 1>}, {transform_indices = @transform_9, window_bounds = array<i64: 1, 1, 1>}, {transform_indices = @transform_10, window_bounds = array<i64: 1, 1, 512>}]} {
    %c0_i32 = arith.constant 0 : i32
    %0 = arith.cmpi eq, %arg1, %c0_i32 : i32
    %1 = arith.extui %0 : i1 to i32
    %c0_i32_0 = arith.constant 0 : i32
    %2 = arith.cmpi ne, %1, %c0_i32_0 : i32
    scf.if %2 {
      %cst_43 = arith.constant 0xFF800000 : f32
      %84 = vector.broadcast %cst_43 : f32 to vector<1x1xf32>
      %c0_44 = arith.constant 0 : index
      %c0_45 = arith.constant 0 : index
      %85 = vector.load %arg13[%c0_44, %c0_45] : memref<1x1xf32, #tpu.memory_space<vmem>>, vector<1x1xf32>
      tpu.vector_store %arg13[%c0_44, %c0_45], %84 {strides = array<i32>} : memref<1x1xf32, #tpu.memory_space<vmem>>, vector<1x1xf32>,
      %cst_46 = arith.constant 0.000000e+00 : f32
      %86 = vector.broadcast %cst_46 : f32 to vector<1x1xf32>
      %c0_47 = arith.constant 0 : index
      %c0_48 = arith.constant 0 : index
      %87 = vector.load %arg14[%c0_47, %c0_48] : memref<1x1xf32, #tpu.memory_space<vmem>>, vector<1x1xf32>
      tpu.vector_store %arg14[%c0_47, %c0_48], %86 {strides = array<i32>} : memref<1x1xf32, #tpu.memory_space<vmem>>, vector<1x1xf32>,
      %cst_49 = arith.constant 0.000000e+00 : f32
      %88 = vector.broadcast %cst_49 : f32 to vector<1x512xf32>
      %c0_50 = arith.constant 0 : index
      %c0_51 = arith.constant 0 : index
      %89 = vector.load %arg15[%c0_50, %c0_51] : memref<1x512xf32, #tpu.memory_space<vmem>>, vector<1x512xf32>
      tpu.vector_store %arg15[%c0_50, %c0_51], %88 {strides = array<i32>} : memref<1x512xf32, #tpu.memory_space<vmem>>, vector<1x512xf32>,
    } else {
    }
    %c0 = arith.constant 0 : index
    %c0_1 = arith.constant 0 : index
    %3 = vector.load %arg2[%c0, %c0_1] : memref<64x1024xf32, #tpu.memory_space<vmem>>, vector<64x1024xf32>
    %4 = arith.truncf %3 : vector<64x1024xf32> to vector<64x1024xbf16>
    %c0_2 = arith.constant 0 : index
    %c0_3 = arith.constant 0 : index
    %5 = vector.load %arg3[%c0_2, %c0_3] : memref<1024x512xbf16, #tpu.memory_space<vmem>>, vector<1024x512xbf16>
    %cst = arith.constant dense<0.000000e+00> : vector<64x512xf32>
    %6 = tpu.matmul %4, %5, %cst {dimension_numbers = #tpu.dot_dimension_numbers<[1], [0], [0], [1], [0, 0, 1, 1], [], []>} : vector<64x1024xbf16>, vector<1024x512xbf16>, vector<64x512xf32> -> vector<64x512xf32>
    %c0_4 = arith.constant 0 : index
    %c0_5 = arith.constant 0 : index
    %7 = vector.load %arg4[%c0_4, %c0_5] : memref<1x512xf32, #tpu.memory_space<vmem>>, vector<1x512xf32>
    %8 = vector.broadcast %7 : vector<1x512xf32> to vector<64x512xf32>
    %9 = arith.addf %6, %8 : vector<64x512xf32>
    %cst_6 = arith.constant 0.000000e+00 : f32
    %10 = vector.broadcast %cst_6 : f32 to vector<64x512xf32>
    %11 = arith.maximumf %9, %10 : vector<64x512xf32>
    %c1_i32 = arith.constant 1 : i32
    %12 = arith.muli %arg0, %c1_i32 : i32
    %13 = arith.addi %12, %arg1 : i32
    %c64_i32 = arith.constant 64 : i32
    %14 = arith.muli %13, %c64_i32 : i32
    %15 = tpu.iota {dimensions = array<i32: 0>} : vector<64x1xi32>
    %16 = vector.broadcast %14 : i32 to vector<64x1xi32>
    %17 = arith.addi %16, %15 : vector<64x1xi32>
    %c64_i32_7 = arith.constant 64 : i32
    %18 = vector.broadcast %c64_i32_7 : i32 to vector<64x1xi32>
    %19 = arith.cmpi slt, %17, %18 : vector<64x1xi32>
    %cst_8 = arith.constant 0.000000e+00 : f32
    %20 = vector.shape_cast %19 : vector<64x1xi1> to vector<64x1xi1>
    %21 = vector.broadcast %20 : vector<64x1xi1> to vector<64x512xi1>
    %22 = vector.broadcast %cst_8 : f32 to vector<64x512xf32>
    %23 = arith.select %21, %11, %22 : vector<64x512xi1>, vector<64x512xf32>
    %24 = arith.truncf %23 : vector<64x512xf32> to vector<64x512xbf16>
    %c0_9 = arith.constant 0 : index
    %c0_10 = arith.constant 0 : index
    %25 = vector.load %arg5[%c0_9, %c0_10] : memref<512x512xbf16, #tpu.memory_space<vmem>>, vector<512x512xbf16>
    %cst_11 = arith.constant dense<0.000000e+00> : vector<64x512xf32>
    %26 = tpu.matmul %24, %25, %cst_11 {dimension_numbers = #tpu.dot_dimension_numbers<[1], [0], [0], [1], [0, 0, 1, 1], [], []>} : vector<64x512xbf16>, vector<512x512xbf16>, vector<64x512xf32> -> vector<64x512xf32>
    %c0_12 = arith.constant 0 : index
    %c0_13 = arith.constant 0 : index
    %27 = vector.load %arg6[%c0_12, %c0_13] : memref<1x512xf32, #tpu.memory_space<vmem>>, vector<1x512xf32>
    %28 = vector.broadcast %27 : vector<1x512xf32> to vector<64x512xf32>
    %29 = arith.addf %26, %28 : vector<64x512xf32>
    %30 = vector.extract_strided_slice %29 {offsets = [0, 0], sizes = [64, 256], strides = [1, 1]} : vector<64x512xf32> to vector<64x256xf32>
    %31 = math.tanh %30 : vector<64x256xf32>
    %32 = vector.extract_strided_slice %29 {offsets = [0, 256], sizes = [64, 256], strides = [1, 1]} : vector<64x512xf32> to vector<64x256xf32>
    %33 = arith.negf %32 : vector<64x256xf32>
    %34 = math.exp %33 : vector<64x256xf32>
    %cst_14 = arith.constant 1.000000e+00 : f32
    %35 = vector.broadcast %cst_14 : f32 to vector<64x256xf32>
    %36 = arith.addf %35, %34 : vector<64x256xf32>
    %37 = arith.divf %35, %36 : vector<64x256xf32>
    %38 = arith.mulf %31, %37 : vector<64x256xf32>
    %c0_15 = arith.constant 0 : index
    %c0_16 = arith.constant 0 : index
    %39 = vector.load %arg7[%c0_15, %c0_16] : memref<1x256xf32, #tpu.memory_space<vmem>>, vector<1x256xf32>
    %40 = vector.broadcast %39 : vector<1x256xf32> to vector<64x256xf32>
    %41 = arith.mulf %38, %40 : vector<64x256xf32>
    %cst_17 = arith.constant dense<0.000000e+00> : vector<64xf32>
    %42 = vector.multi_reduction <add>, %41, %cst_17 [1] : vector<64x256xf32> to vector<64xf32>
    %43 = vector.shape_cast %42 : vector<64xf32> to vector<64x1xf32>
    %c0_18 = arith.constant 0 : index
    %c0_19 = arith.constant 0 : index
    %44 = vector.load %arg8[%c0_18, %c0_19] : memref<1x1xf32, #tpu.memory_space<vmem>>, vector<1x1xf32>
    %45 = vector.broadcast %44 : vector<1x1xf32> to vector<64x1xf32>
    %46 = arith.addf %43, %45 : vector<64x1xf32>
    %c0_20 = arith.constant 0 : index
    %c0_21 = arith.constant 0 : index
    %47 = vector.load %arg9[%c0_20, %c0_21] : memref<64x1xf32, #tpu.memory_space<vmem>>, vector<64x1xf32>
    tpu.vector_store %arg9[%c0_20, %c0_21], %46 {strides = array<i32>} : memref<64x1xf32, #tpu.memory_space<vmem>>, vector<64x1xf32>,
    %cst_22 = arith.constant 0xFF800000 : f32
    %48 = vector.broadcast %cst_22 : f32 to vector<64x1xf32>
    %49 = arith.select %19, %46, %48 : vector<64x1xi1>, vector<64x1xf32>
    %c0_23 = arith.constant 0 : index
    %c0_24 = arith.constant 0 : index
    %50 = vector.load %arg13[%c0_23, %c0_24] : memref<1x1xf32, #tpu.memory_space<vmem>>, vector<1x1xf32>
    %cst_25 = arith.constant dense<0xFF800000> : vector<1xf32>
    %51 = vector.multi_reduction <maximumf>, %49, %cst_25 [0] : vector<64x1xf32> to vector<1xf32>
    %52 = vector.shape_cast %51 : vector<1xf32> to vector<1x1xf32>
    %53 = arith.maximumf %50, %52 : vector<1x1xf32>
    %cst_26 = arith.constant 0xFF800000 : f32
    %54 = vector.broadcast %cst_26 : f32 to vector<1x1xf32>
    %55 = arith.cmpf ogt, %53, %54 : vector<1x1xf32>
    %56 = arith.subf %50, %53 : vector<1x1xf32>
    %57 = math.exp %56 : vector<1x1xf32>
    %cst_27 = arith.constant 0.000000e+00 : f32
    %58 = vector.broadcast %cst_27 : f32 to vector<1x1xf32>
    %59 = arith.select %55, %57, %58 : vector<1x1xi1>, vector<1x1xf32>
    %60 = vector.broadcast %53 : vector<1x1xf32> to vector<64x1xf32>
    %61 = arith.subf %46, %60 : vector<64x1xf32>
    %62 = math.exp %61 : vector<64x1xf32>
    %cst_28 = arith.constant 0.000000e+00 : f32
    %63 = vector.broadcast %cst_28 : f32 to vector<64x1xf32>
    %64 = arith.select %19, %62, %63 : vector<64x1xi1>, vector<64x1xf32>
    %c0_29 = arith.constant 0 : index
    %c0_30 = arith.constant 0 : index
    %65 = vector.load %arg14[%c0_29, %c0_30] : memref<1x1xf32, #tpu.memory_space<vmem>>, vector<1x1xf32>
    %66 = arith.mulf %59, %65 : vector<1x1xf32>
    %cst_31 = arith.constant dense<0.000000e+00> : vector<1xf32>
    %67 = vector.multi_reduction <add>, %64, %cst_31 [0] : vector<64x1xf32> to vector<1xf32>
    %68 = vector.shape_cast %67 : vector<1xf32> to vector<1x1xf32>
    %69 = arith.addf %66, %68 : vector<1x1xf32>
    %c0_32 = arith.constant 0 : index
    %c0_33 = arith.constant 0 : index
    %70 = vector.load %arg14[%c0_32, %c0_33] : memref<1x1xf32, #tpu.memory_space<vmem>>, vector<1x1xf32>
    tpu.vector_store %arg14[%c0_32, %c0_33], %69 {strides = array<i32>} : memref<1x1xf32, #tpu.memory_space<vmem>>, vector<1x1xf32>,
    %c0_34 = arith.constant 0 : index
    %c0_35 = arith.constant 0 : index
    %71 = vector.load %arg15[%c0_34, %c0_35] : memref<1x512xf32, #tpu.memory_space<vmem>>, vector<1x512xf32>
    %72 = vector.broadcast %59 : vector<1x1xf32> to vector<1x512xf32>
    %73 = arith.mulf %72, %71 : vector<1x512xf32>
    %74 = vector.broadcast %64 : vector<64x1xf32> to vector<64x512xf32>
    %75 = arith.mulf %74, %23 : vector<64x512xf32>
    %cst_36 = arith.constant dense<0.000000e+00> : vector<512xf32>
    %76 = vector.multi_reduction <add>, %75, %cst_36 [0] : vector<64x512xf32> to vector<512xf32>
    %77 = vector.shape_cast %76 : vector<512xf32> to vector<1x512xf32>
    %78 = arith.addf %73, %77 : vector<1x512xf32>
    %c0_37 = arith.constant 0 : index
    %c0_38 = arith.constant 0 : index
    %79 = vector.load %arg15[%c0_37, %c0_38] : memref<1x512xf32, #tpu.memory_space<vmem>>, vector<1x512xf32>
    tpu.vector_store %arg15[%c0_37, %c0_38], %78 {strides = array<i32>} : memref<1x512xf32, #tpu.memory_space<vmem>>, vector<1x512xf32>,
    %c0_39 = arith.constant 0 : index
    %c0_40 = arith.constant 0 : index
    %80 = vector.load %arg13[%c0_39, %c0_40] : memref<1x1xf32, #tpu.memory_space<vmem>>, vector<1x1xf32>
    tpu.vector_store %arg13[%c0_39, %c0_40], %53 {strides = array<i32>} : memref<1x1xf32, #tpu.memory_space<vmem>>, vector<1x1xf32>,
    %c0_i32_41 = arith.constant 0 : i32
    %81 = arith.cmpi eq, %arg1, %c0_i32_41 : i32
    %82 = arith.extui %81 : i1 to i32
    %c0_i32_42 = arith.constant 0 : i32
    %83 = arith.cmpi ne, %82, %c0_i32_42 : i32
    scf.if %83 {
      %c0_43 = arith.constant 0 : index
      %c0_44 = arith.constant 0 : index
      %84 = vector.load %arg13[%c0_43, %c0_44] : memref<1x1xf32, #tpu.memory_space<vmem>>, vector<1x1xf32>
      %c0_45 = arith.constant 0 : index
      %c0_46 = arith.constant 0 : index
      %c0_47 = arith.constant 0 : index
      %85 = vector.load %arg10[%c0_45, %c0_46, %c0_47] : memref<1x1x1xf32, #tpu.memory_space<vmem>>, vector<1x1x1xf32>
      %86 = vector.shape_cast %85 : vector<1x1x1xf32> to vector<1x1xf32>
      %87 = vector.shape_cast %84 : vector<1x1xf32> to vector<1x1x1xf32>
      tpu.vector_store %arg10[%c0_45, %c0_46, %c0_47], %87 {strides = array<i32>} : memref<1x1x1xf32, #tpu.memory_space<vmem>>, vector<1x1x1xf32>,
      %c0_48 = arith.constant 0 : index
      %c0_49 = arith.constant 0 : index
      %88 = vector.load %arg14[%c0_48, %c0_49] : memref<1x1xf32, #tpu.memory_space<vmem>>, vector<1x1xf32>
      %c0_50 = arith.constant 0 : index
      %c0_51 = arith.constant 0 : index
      %c0_52 = arith.constant 0 : index
      %89 = vector.load %arg11[%c0_50, %c0_51, %c0_52] : memref<1x1x1xf32, #tpu.memory_space<vmem>>, vector<1x1x1xf32>
      %90 = vector.shape_cast %89 : vector<1x1x1xf32> to vector<1x1xf32>
      %91 = vector.shape_cast %88 : vector<1x1xf32> to vector<1x1x1xf32>
      tpu.vector_store %arg11[%c0_50, %c0_51, %c0_52], %91 {strides = array<i32>} : memref<1x1x1xf32, #tpu.memory_space<vmem>>, vector<1x1x1xf32>,
      %c0_53 = arith.constant 0 : index
      %c0_54 = arith.constant 0 : index
      %92 = vector.load %arg15[%c0_53, %c0_54] : memref<1x512xf32, #tpu.memory_space<vmem>>, vector<1x512xf32>
      %c0_55 = arith.constant 0 : index
      %c0_56 = arith.constant 0 : index
      %c0_57 = arith.constant 0 : index
      %93 = vector.load %arg12[%c0_55, %c0_56, %c0_57] : memref<1x1x512xf32, #tpu.memory_space<vmem>>, vector<1x1x512xf32>
      %94 = vector.shape_cast %93 : vector<1x1x512xf32> to vector<1x512xf32>
      %95 = vector.shape_cast %92 : vector<1x512xf32> to vector<1x1x512xf32>
      tpu.vector_store %arg12[%c0_55, %c0_56, %c0_57], %95 {strides = array<i32>} : memref<1x1x512xf32, #tpu.memory_space<vmem>>, vector<1x1x512xf32>,
    } else {
    }
    return
  }
  func.func @transform_0(%arg0: i32, %arg1: i32) -> (i32, i32) {
    %c1_i32 = arith.constant 1 : i32
    %0 = arith.muli %arg0, %c1_i32 : i32
    %1 = arith.addi %0, %arg1 : i32
    %c0_i32 = arith.constant 0 : i32
    %2 = arith.minsi %1, %c0_i32 : i32
    %c0_i32_0 = arith.constant 0 : i32
    %c0_i32_1 = arith.constant 0 : i32
    return %2, %c0_i32_0 : i32, i32
  }
  func.func @transform_1(%arg0: i32, %arg1: i32) -> (i32, i32) {
    %c0_i32 = arith.constant 0 : i32
    %c0_i32_0 = arith.constant 0 : i32
    %c0_i32_1 = arith.constant 0 : i32
    return %c0_i32, %c0_i32_0 : i32, i32
  }
  func.func @transform_2(%arg0: i32, %arg1: i32) -> (i32, i32) {
    %c0_i32 = arith.constant 0 : i32
    %c0_i32_0 = arith.constant 0 : i32
    %c0_i32_1 = arith.constant 0 : i32
    return %c0_i32, %c0_i32_0 : i32, i32
  }
  func.func @transform_3(%arg0: i32, %arg1: i32) -> (i32, i32) {
    %c0_i32 = arith.constant 0 : i32
    %c0_i32_0 = arith.constant 0 : i32
    %c0_i32_1 = arith.constant 0 : i32
    return %c0_i32, %c0_i32_0 : i32, i32
  }
  func.func @transform_4(%arg0: i32, %arg1: i32) -> (i32, i32) {
    %c0_i32 = arith.constant 0 : i32
    %c0_i32_0 = arith.constant 0 : i32
    %c0_i32_1 = arith.constant 0 : i32
    return %c0_i32, %c0_i32_0 : i32, i32
  }
  func.func @transform_5(%arg0: i32, %arg1: i32) -> (i32, i32) {
    %c0_i32 = arith.constant 0 : i32
    %c0_i32_0 = arith.constant 0 : i32
    %c0_i32_1 = arith.constant 0 : i32
    return %c0_i32, %c0_i32_0 : i32, i32
  }
  func.func @transform_6(%arg0: i32, %arg1: i32) -> (i32, i32) {
    %c0_i32 = arith.constant 0 : i32
    %c0_i32_0 = arith.constant 0 : i32
    %c0_i32_1 = arith.constant 0 : i32
    return %c0_i32, %c0_i32_0 : i32, i32
  }
  func.func @transform_7(%arg0: i32, %arg1: i32) -> (i32, i32) {
    %c1_i32 = arith.constant 1 : i32
    %0 = arith.muli %arg0, %c1_i32 : i32
    %1 = arith.addi %0, %arg1 : i32
    %c0_i32 = arith.constant 0 : i32
    %c0_i32_0 = arith.constant 0 : i32
    return %1, %c0_i32 : i32, i32
  }
  func.func @transform_8(%arg0: i32, %arg1: i32) -> (i32, i32, i32) {
    %c0_i32 = arith.constant 0 : i32
    %c0_i32_0 = arith.constant 0 : i32
    %c0_i32_1 = arith.constant 0 : i32
    return %arg0, %c0_i32, %c0_i32_0 : i32, i32, i32
  }
  func.func @transform_9(%arg0: i32, %arg1: i32) -> (i32, i32, i32) {
    %c0_i32 = arith.constant 0 : i32
    %c0_i32_0 = arith.constant 0 : i32
    %c0_i32_1 = arith.constant 0 : i32
    return %arg0, %c0_i32, %c0_i32_0 : i32, i32, i32
  }
  func.func @transform_10(%arg0: i32, %arg1: i32) -> (i32, i32, i32) {
    %c0_i32 = arith.constant 0 : i32
    %c0_i32_0 = arith.constant 0 : i32
    %c0_i32_1 = arith.constant 0 : i32
    return %arg0, %c0_i32, %c0_i32_0 : i32, i32, i32
  }
}

</mosaic_0001>

<llo_original>
// kernel: tpu_custom_call.1
$region0: #{tpu_custom_call.1}
  #allocation0 [shape = 'u32[]', space=smem, size = 0x4, offset = 0x4, fixed_abs, tag = 'smem constant byte address 0x4 - core index']
  #allocation1 [shape = 'u32[144,128]{1,0:T(1,128)}', space=vmem, size = 0x12000, scoped, tag = 'internal scratch']
  #allocation2 [shape = 'f32[1,1]{1,0:T(1,128)}', space=vmem, size = 0x200, scoped, tag = 'scratch operand']
  #allocation3 [shape = 'f32[1,1]{1,0:T(1,128)}', space=vmem, size = 0x200, scoped, tag = 'scratch operand']
  #allocation4 [shape = 'f32[1,512]{1,0:T(1,128)}', space=vmem, size = 0x800, scoped, tag = 'scratch operand']
  #allocation5 [shape = 'f32[1,1]{1,0:T(1,128)S(1)}', space=vmem, size = 0x200, scoped, tag = 'scoped memory for tpu_custom_call.1']
  %s0 = inlined_call_operand.hbm [shape: f32[64,1024], index: 0, kind: input, shape index: {}]
  %s1 = inlined_call_operand.hbm [shape: bf16[1024,512], index: 1, kind: input, shape index: {}]
  %s2 = inlined_call_operand.vmem [shape: f32[1,512], index: 2, kind: input, shape index: {}]
  %s3 = inlined_call_operand.hbm [shape: bf16[512,512], index: 3, kind: input, shape index: {}]
  %s4 = inlined_call_operand.vmem [shape: f32[1,512], index: 4, kind: input, shape index: {}]
  %s5 = inlined_call_operand.vmem [shape: f32[1,256], index: 5, kind: input, shape index: {}]
  %s6 = inlined_call_operand.<no memory space> [shape: f32[1,1], index: 6, kind: input, shape index: {}]
  %s7 = inlined_call_operand.vmem [shape: f32[64,1], index: 7, kind: output, shape index: {0}]
  %s8 = inlined_call_operand.hbm [shape: f32[1,1,1], index: 8, kind: output, shape index: {1}]
  %s9 = inlined_call_operand.hbm [shape: f32[1,1,1], index: 9, kind: output, shape index: {2}]
  %s10 = inlined_call_operand.hbm [shape: f32[1,1,512], index: 10, kind: output, shape index: {3}]
  %11 = xla_tuple %s7, %s8, %s9, %s10
  %s12 = sld [smem:[#allocation0]]
  $region82: #{tpu_custom_call.1} parent=0
    _
  %s14 = ssub.s32 1, %s12
  %s15 = scalar_select 0, %s14, %s12
  %v16 = vstv %s6
  %17 = vst [vmem:[#allocation5] sm:$0x1] %v16
  $region1: #{tpu_custom_call.1} parent=0
    #allocation6 [shape = 'u8[262144]{0}', space=vmem, size = 0x40000, scoped, tag = 'input window, operand 0, single buffered']
    #allocation7 [shape = 's32[1]{0}', space=sflag, size = 0x4, scoped, tag = 'scoped memory for tpu_custom_call.1']
    #allocation8 [shape = 's32[1]{0}', space=sflag, size = 0x4, scoped, tag = 'scoped memory for tpu_custom_call.1']
    #allocation9 [shape = 'u8[1048576]{0}', space=vmem, size = 0x100000, scoped, tag = 'input window, operand 1, single buffered']
    #allocation10 [shape = 's32[1]{0}', space=sflag, size = 0x4, scoped, tag = 'scoped memory for tpu_custom_call.1']
    #allocation11 [shape = 'u8[524288]{0}', space=vmem, size = 0x80000, scoped, tag = 'input window, operand 3, single buffered']
    #allocation12 [shape = 'u8[512]{0}', space=vmem, size = 0x400, scoped, tag = 'output window, operand 1, single buffered']
    #allocation13 [shape = 'u8[512]{0}', space=vmem, size = 0x400, scoped, tag = 'output window, operand 2, single buffered']
    #allocation14 [shape = 's32[1]{0}', space=sflag, size = 0x4, scoped, tag = 'scoped memory for tpu_custom_call.1']
    #allocation15 [shape = 'u8[2048]{0}', space=vmem, size = 0x800, scoped, tag = 'output window, operand 3, single buffered']
    %18 = vsyncpa [#allocation7], 0
    %19 = vsyncpa [#allocation10], 0
    %20 = vsyncpa [#allocation8], 0
    %21 = vsyncpa [#allocation14], 0
    // Predicated region
    $region2: #{tpu_custom_call.1} parent=1 // pred_check
      _
    $region3: #{tpu_custom_call.1} parent=1 // pred_check_branch
      %23 = sbr.rel (0) target = $region5
    $region4: #{tpu_custom_call.1} parent=1 // pred_region
      %s24 = sadd.s32 0, 0
      %p25 = scmp.lt.s32.totalorder %s24, 0
      %s26 = scalar_select %p25, %s24, 0
      %s27 = smul.u32 8, %s26
      %s29 = ssub.s32 8192, 8192
      %30 = vsyncadd [#allocation7], %s29
      %s31 = smul.addr %s27, 8
      %s32 = smul.addr %s31, 128
      %s33 = scalar_lea.hbm %s0, %s32
      %s34 = sshll.u32 [#allocation6], 4
      %s35 = int_to_ptr.vmem [resolvable:$true] %s34
      %40 = dma.hbm_to_vmem [thread:$0]  %s33, 8192, %s35, [#allocation7], 1024, 1024, 64
    $region5: #{tpu_custom_call.1} parent=1 // pred_fallthru
      _
    // Predicated region
    $region6: #{tpu_custom_call.1} parent=1 // pred_check
      _
    $region7: #{tpu_custom_call.1} parent=1 // pred_check_branch
      %42 = sbr.rel (0) target = $region9
    $region8: #{tpu_custom_call.1} parent=1 // pred_region
      %s44 = ssub.s32 32768, 32768
      %45 = vsyncadd [#allocation10], %s44
      %s46 = sshll.u32 [#allocation9], 4
      %s47 = int_to_ptr.vmem [resolvable:$true] %s46
      %52 = dma.hbm_to_vmem [thread:$0]  %s1, 32768, %s47, [#allocation10], 256, 256, 16
    $region9: #{tpu_custom_call.1} parent=1 // pred_fallthru
      _
    // Predicated region
    $region10: #{tpu_custom_call.1} parent=1 // pred_check
      _
    $region11: #{tpu_custom_call.1} parent=1 // pred_check_branch
      %54 = sbr.rel (0) target = $region13
    $region12: #{tpu_custom_call.1} parent=1 // pred_region
      _
    $region13: #{tpu_custom_call.1} parent=1 // pred_fallthru
      _
    // Predicated region
    $region14: #{tpu_custom_call.1} parent=1 // pred_check
      _
    $region15: #{tpu_custom_call.1} parent=1 // pred_check_branch
      %56 = sbr.rel (0) target = $region17
    $region16: #{tpu_custom_call.1} parent=1 // pred_region
      %s58 = ssub.s32 16384, 16384
      %59 = vsyncadd [#allocation10], %s58
      %s60 = sshll.u32 [#allocation11], 4
      %s61 = int_to_ptr.vmem [resolvable:$true] %s60
      %66 = dma.hbm_to_vmem [thread:$0]  %s3, 16384, %s61, [#allocation10], 256, 256, 16
    $region17: #{tpu_custom_call.1} parent=1 // pred_fallthru
      _
    // Predicated region
    $region18: #{tpu_custom_call.1} parent=1 // pred_check
      _
    $region19: #{tpu_custom_call.1} parent=1 // pred_check_branch
      %68 = sbr.rel (0) target = $region21
    $region20: #{tpu_custom_call.1} parent=1 // pred_region
      _
    $region21: #{tpu_custom_call.1} parent=1 // pred_fallthru
      _
    // Predicated region
    $region22: #{tpu_custom_call.1} parent=1 // pred_check
      _
    $region23: #{tpu_custom_call.1} parent=1 // pred_check_branch
      %70 = sbr.rel (0) target = $region25
    $region24: #{tpu_custom_call.1} parent=1 // pred_region
      _
    $region25: #{tpu_custom_call.1} parent=1 // pred_fallthru
      _
    // Predicated region
    $region26: #{tpu_custom_call.1} parent=1 // pred_check
      _
    $region27: #{tpu_custom_call.1} parent=1 // pred_check_branch
      %72 = sbr.rel (0) target = $region29
    $region28: #{tpu_custom_call.1} parent=1 // pred_region
      _
    $region29: #{tpu_custom_call.1} parent=1 // pred_fallthru
      _
    // Predicated region
    $region30: #{tpu_custom_call.1} parent=1 // pred_check
      _
    $region31: #{tpu_custom_call.1} parent=1 // pred_check_branch
      %74 = sbr.rel (0) target = $region33
    $region32: #{tpu_custom_call.1} parent=1 // pred_region
      %75 = dma.done [#allocation7], 8192
    $region33: #{tpu_custom_call.1} parent=1 // pred_fallthru
      _
    // Predicated region
    $region34: #{tpu_custom_call.1} parent=1 // pred_check
      _
    $region35: #{tpu_custom_call.1} parent=1 // pred_check_branch
      %77 = sbr.rel (0) target = $region37
    $region36: #{tpu_custom_call.1} parent=1 // pred_region
      %78 = dma.done [#allocation10], 32768
    $region37: #{tpu_custom_call.1} parent=1 // pred_fallthru
      _
    // Predicated region
    $region38: #{tpu_custom_call.1} parent=1 // pred_check
      _
    $region39: #{tpu_custom_call.1} parent=1 // pred_check_branch
      %80 = sbr.rel (0) target = $region41
    $region40: #{tpu_custom_call.1} parent=1 // pred_region
      %81 = dma.done [#allocation10], 16384
    $region41: #{tpu_custom_call.1} parent=1 // pred_fallthru
      _
    %s82 = sadd.s32 0, 0
    %s83 = smul.u32 8, %s82
    %p84 = scmp.lt.s32.totalorder %s83, 7
    %s85 = scalar_select %p84, %s83, 7
    %s86 = smul.addr %s85, 8
    %s87 = scalar_lea.vmem %s7, %s86
    %s88 = sadd.s32 0, 0
    %p89 = scmp.lt.s32.totalorder %s88, 0
    %s90 = scalar_select %p89, %s88, 0
    %s91 = smul.u32 8, %s90
    %s92 = sadd.s32 0, 0
    %s93 = smul.u32 8, %s92
    %p94 = scmp.lt.s32.totalorder %s93, 7
    %s95 = scalar_select %p94, %s93, 7
    %s96 = smul.addr %s95, 8
    %s97 = scalar_lea.vmem %s7, %s96
    %s98 = sadd.s32 0, 0
    %s99 = smul.u32 8, %s98
    %p100 = scmp.eq.s32.totalorder 0, 0
    // Predicated region
    $region42: #{tpu_custom_call.1} parent=1 // pred_check
      %p101 = pneg %p100
    $region43: #{tpu_custom_call.1} parent=1 // pred_check_branch
      %103 = sbr.rel (%p101) target = $region45
    $region44: #{tpu_custom_call.1} parent=1 // pred_region
      %vm104 = vcmask 0
      %105 = vst.msk [vmem:[#allocation2] sm:$0x1] %vm104, -inf
      %106 = vst.msk [vmem:[#allocation3] sm:$0x1] %vm104, 0.0
      %v107 = vlaneseq
      %vm108 = vcmp.ge.s32.totalorder %v107, 0
      %vm109 = vcmp.lt.s32.totalorder %v107, 512
      %vm110 = vmand %vm108, %vm109
      %111 = vst.msk [vmem:[#allocation4] sm:$0xf] %vm110, 0.0
    $region45: #{tpu_custom_call.1} parent=1 // pred_fallthru
      _
    %v112 = vld [vmem:[#allocation6] sm:$0xff]
    %v113 = vld [vmem:[#allocation6 + $0x8] sm:$0xff]
    %v114 = vld [vmem:[#allocation6 + $0x10] sm:$0xff]
    %v115 = vld [vmem:[#allocation6 + $0x18] sm:$0xff]
    %v116 = vld [vmem:[#allocation6 + $0x20] sm:$0xff]
    %v117 = vld [vmem:[#allocation6 + $0x28] sm:$0xff]
    %v118 = vld [vmem:[#allocation6 + $0x30] sm:$0xff]
    %v119 = vld [vmem:[#allocation6 + $0x38] sm:$0xff]
    %v120 = vld [vmem:[#allocation6 + $0x40] sm:$0xff]
    %v121 = vld [vmem:[#allocation6 + $0x48] sm:$0xff]
    %v122 = vld [vmem:[#allocation6 + $0x50] sm:$0xff]
    %v123 = vld [vmem:[#allocation6 + $0x58] sm:$0xff]
    %v124 = vld [vmem:[#allocation6 + $0x60] sm:$0xff]
    %v125 = vld [vmem:[#allocation6 + $0x68] sm:$0xff]
    %v126 = vld [vmem:[#allocation6 + $0x70] sm:$0xff]
    %v127 = vld [vmem:[#allocation6 + $0x78] sm:$0xff]
    %v128 = vld [vmem:[#allocation6 + $0x80] sm:$0xff]
    %v129 = vld [vmem:[#allocation6 + $0x88] sm:$0xff]
    %v130 = vld [vmem:[#allocation6 + $0x90] sm:$0xff]
    %v131 = vld [vmem:[#allocation6 + $0x98] sm:$0xff]
    %v132 = vld [vmem:[#allocation6 + $0xa0] sm:$0xff]
    %v133 = vld [vmem:[#allocation6 + $0xa8] sm:$0xff]
    %v134 = vld [vmem:[#allocation6 + $0xb0] sm:$0xff]
    %v135 = vld [vmem:[#allocation6 + $0xb8] sm:$0xff]
    %v136 = vld [vmem:[#allocation6 + $0xc0] sm:$0xff]
    %v137 = vld [vmem:[#allocation6 + $0xc8] sm:$0xff]
    %v138 = vld [vmem:[#allocation6 + $0xd0] sm:$0xff]
    %v139 = vld [vmem:[#allocation6 + $0xd8] sm:$0xff]
    %v140 = vld [vmem:[#allocation6 + $0xe0] sm:$0xff]
    %v141 = vld [vmem:[#allocation6 + $0xe8] sm:$0xff]
    %v142 = vld [vmem:[#allocation6 + $0xf0] sm:$0xff]
    %v143 = vld [vmem:[#allocation6 + $0xf8] sm:$0xff]
    %v144 = vld [vmem:[#allocation6 + $0x100] sm:$0xff]
    %v145 = vld [vmem:[#allocation6 + $0x108] sm:$0xff]
    %v146 = vld [vmem:[#allocation6 + $0x110] sm:$0xff]
    %v147 = vld [vmem:[#allocation6 + $0x118] sm:$0xff]
    %v148 = vld [vmem:[#allocation6 + $0x120] sm:$0xff]
    %v149 = vld [vmem:[#allocation6 + $0x128] sm:$0xff]
    %v150 = vld [vmem:[#allocation6 + $0x130] sm:$0xff]
    %v151 = vld [vmem:[#allocation6 + $0x138] sm:$0xff]
    %v152 = vld [vmem:[#allocation6 + $0x140] sm:$0xff]
    %v153 = vld [vmem:[#allocation6 + $0x148] sm:$0xff]
    %v154 = vld [vmem:[#allocation6 + $0x150] sm:$0xff]
    %v155 = vld [vmem:[#allocation6 + $0x158] sm:$0xff]
    %v156 = vld [vmem:[#allocation6 + $0x160] sm:$0xff]
    %v157 = vld [vmem:[#allocation6 + $0x168] sm:$0xff]
    %v158 = vld [vmem:[#allocation6 + $0x170] sm:$0xff]
    %v159 = vld [vmem:[#allocation6 + $0x178] sm:$0xff]
    %v160 = vld [vmem:[#allocation6 + $0x180] sm:$0xff]
    %v161 = vld [vmem:[#allocation6 + $0x188] sm:$0xff]
    %v162 = vld [vmem:[#allocation6 + $0x190] sm:$0xff]
    %v163 = vld [vmem:[#allocation6 + $0x198] sm:$0xff]
    %v164 = vld [vmem:[#allocation6 + $0x1a0] sm:$0xff]
    %v165 = vld [vmem:[#allocation6 + $0x1a8] sm:$0xff]
    %v166 = vld [vmem:[#allocation6 + $0x1b0] sm:$0xff]
    %v167 = vld [vmem:[#allocation6 + $0x1b8] sm:$0xff]
    %v168 = vld [vmem:[#allocation6 + $0x1c0] sm:$0xff]
    %v169 = vld [vmem:[#allocation6 + $0x1c8] sm:$0xff]
    %v170 = vld [vmem:[#allocation6 + $0x1d0] sm:$0xff]
    %v171 = vld [vmem:[#allocation6 + $0x1d8] sm:$0xff]
    %v172 = vld [vmem:[#allocation6 + $0x1e0] sm:$0xff]
    %v173 = vld [vmem:[#allocation6 + $0x1e8] sm:$0xff]
    %v174 = vld [vmem:[#allocation6 + $0x1f0] sm:$0xff]
    %v175 = vld [vmem:[#allocation6 + $0x1f8] sm:$0xff]
    %v176 = vpack.c.bf16 %v120, %v112
    %v177 = vpack.c.bf16 %v121, %v113
    %v178 = vpack.c.bf16 %v122, %v114
    %v179 = vpack.c.bf16 %v123, %v115
    %v180 = vpack.c.bf16 %v124, %v116
    %v181 = vpack.c.bf16 %v125, %v117
    %v182 = vpack.c.bf16 %v126, %v118
    %v183 = vpack.c.bf16 %v127, %v119
    %v184 = vpack.c.bf16 %v136, %v128
    %v185 = vpack.c.bf16 %v137, %v129
    %v186 = vpack.c.bf16 %v138, %v130
    %v187 = vpack.c.bf16 %v139, %v131
    %v188 = vpack.c.bf16 %v140, %v132
    %v189 = vpack.c.bf16 %v141, %v133
    %v190 = vpack.c.bf16 %v142, %v134
    %v191 = vpack.c.bf16 %v143, %v135
    %v192 = vpack.c.bf16 %v152, %v144
    %v193 = vpack.c.bf16 %v153, %v145
    %v194 = vpack.c.bf16 %v154, %v146
    %v195 = vpack.c.bf16 %v155, %v147
    %v196 = vpack.c.bf16 %v156, %v148
    %v197 = vpack.c.bf16 %v157, %v149
    %v198 = vpack.c.bf16 %v158, %v150
    %v199 = vpack.c.bf16 %v159, %v151
    %v200 = vpack.c.bf16 %v168, %v160
    %v201 = vpack.c.bf16 %v169, %v161
    %v202 = vpack.c.bf16 %v170, %v162
    %v203 = vpack.c.bf16 %v171, %v163
    %v204 = vpack.c.bf16 %v172, %v164
    %v205 = vpack.c.bf16 %v173, %v165
    %v206 = vpack.c.bf16 %v174, %v166
    %v207 = vpack.c.bf16 %v175, %v167
    %v208 = vld [vmem:[#allocation9] sm:$0xff]
    %v209 = vld [vmem:[#allocation9 + $0x8] sm:$0xff]
    %v210 = vld [vmem:[#allocation9 + $0x10] sm:$0xff]
    %v211 = vld [vmem:[#allocation9 + $0x18] sm:$0xff]
    %v212 = vld [vmem:[#allocation9 + $0x20] sm:$0xff]
    %v213 = vld [vmem:[#allocation9 + $0x28] sm:$0xff]
    %v214 = vld [vmem:[#allocation9 + $0x30] sm:$0xff]
    %v215 = vld [vmem:[#allocation9 + $0x38] sm:$0xff]
    %v216 = vld [vmem:[#allocation9 + $0x40] sm:$0xff]
    %v217 = vld [vmem:[#allocation9 + $0x48] sm:$0xff]
    %v218 = vld [vmem:[#allocation9 + $0x50] sm:$0xff]
    %v219 = vld [vmem:[#allocation9 + $0x58] sm:$0xff]
    %v220 = vld [vmem:[#allocation9 + $0x60] sm:$0xff]
    %v221 = vld [vmem:[#allocation9 + $0x68] sm:$0xff]
    %v222 = vld [vmem:[#allocation9 + $0x70] sm:$0xff]
    %v223 = vld [vmem:[#allocation9 + $0x78] sm:$0xff]
    %v224 = vld [vmem:[#allocation9 + $0x80] sm:$0xff]
    %v225 = vld [vmem:[#allocation9 + $0x88] sm:$0xff]
    %v226 = vld [vmem:[#allocation9 + $0x90] sm:$0xff]
    %v227 = vld [vmem:[#allocation9 + $0x98] sm:$0xff]
    %v228 = vld [vmem:[#allocation9 + $0xa0] sm:$0xff]
    %v229 = vld [vmem:[#allocation9 + $0xa8] sm:$0xff]
    %v230 = vld [vmem:[#allocation9 + $0xb0] sm:$0xff]
    %v231 = vld [vmem:[#allocation9 + $0xb8] sm:$0xff]
    %v232 = vld [vmem:[#allocation9 + $0xc0] sm:$0xff]
    %v233 = vld [vmem:[#allocation9 + $0xc8] sm:$0xff]
    %v234 = vld [vmem:[#allocation9 + $0xd0] sm:$0xff]
    %v235 = vld [vmem:[#allocation9 + $0xd8] sm:$0xff]
    %v236 = vld [vmem:[#allocation9 + $0xe0] sm:$0xff]
    %v237 = vld [vmem:[#allocation9 + $0xe8] sm:$0xff]
    %v238 = vld [vmem:[#allocation9 + $0xf0] sm:$0xff]
    %v239 = vld [vmem:[#allocation9 + $0xf8] sm:$0xff]
    %v240 = vld [vmem:[#allocation9 + $0x100] sm:$0xff]
    %v241 = vld [vmem:[#allocation9 + $0x108] sm:$0xff]
    %v242 = vld [vmem:[#allocation9 + $0x110] sm:$0xff]
    %v243 = vld [vmem:[#allocation9 + $0x118] sm:$0xff]
    %v244 = vld [vmem:[#allocation9 + $0x120] sm:$0xff]
    %v245 = vld [vmem:[#allocation9 + $0x128] sm:$0xff]
    %v246 = vld [vmem:[#allocation9 + $0x130] sm:$0xff]
    %v247 = vld [vmem:[#allocation9 + $0x138] sm:$0xff]
    %v248 = vld [vmem:[#allocation9 + $0x140] sm:$0xff]
    %v249 = vld [vmem:[#allocation9 + $0x148] sm:$0xff]
    %v250 = vld [vmem:[#allocation9 + $0x150] sm:$0xff]
    %v251 = vld [vmem:[#allocation9 + $0x158] sm:$0xff]
    %v252 = vld [vmem:[#allocation9 + $0x160] sm:$0xff]
    %v253 = vld [vmem:[#allocation9 + $0x168] sm:$0xff]
    %v254 = vld [vmem:[#allocation9 + $0x170] sm:$0xff]
    %v255 = vld [vmem:[#allocation9 + $0x178] sm:$0xff]
    %v256 = vld [vmem:[#allocation9 + $0x180] sm:$0xff]
    %v257 = vld [vmem:[#allocation9 + $0x188] sm:$0xff]
    %v258 = vld [vmem:[#allocation9 + $0x190] sm:$0xff]
    %v259 = vld [vmem:[#allocation9 + $0x198] sm:$0xff]
    %v260 = vld [vmem:[#allocation9 + $0x1a0] sm:$0xff]
    %v261 = vld [vmem:[#allocation9 + $0x1a8] sm:$0xff]
    %v262 = vld [vmem:[#allocation9 + $0x1b0] sm:$0xff]
    %v263 = vld [vmem:[#allocation9 + $0x1b8] sm:$0xff]
    %v264 = vld [vmem:[#allocation9 + $0x1c0] sm:$0xff]
    %v265 = vld [vmem:[#allocation9 + $0x1c8] sm:$0xff]
    %v266 = vld [vmem:[#allocation9 + $0x1d0] sm:$0xff]
    %v267 = vld [vmem:[#allocation9 + $0x1d8] sm:$0xff]
    %v268 = vld [vmem:[#allocation9 + $0x1e0] sm:$0xff]
    %v269 = vld [vmem:[#allocation9 + $0x1e8] sm:$0xff]
    %v270 = vld [vmem:[#allocation9 + $0x1f0] sm:$0xff]
    %v271 = vld [vmem:[#allocation9 + $0x1f8] sm:$0xff]
    %v272 = vld [vmem:[#allocation9 + $0x200] sm:$0xff]
    %v273 = vld [vmem:[#allocation9 + $0x208] sm:$0xff]
    %v274 = vld [vmem:[#allocation9 + $0x210] sm:$0xff]
    %v275 = vld [vmem:[#allocation9 + $0x218] sm:$0xff]
    %v276 = vld [vmem:[#allocation9 + $0x220] sm:$0xff]
    %v277 = vld [vmem:[#allocation9 + $0x228] sm:$0xff]
    %v278 = vld [vmem:[#allocation9 + $0x230] sm:$0xff]
    %v279 = vld [vmem:[#allocation9 + $0x238] sm:$0xff]
    %v280 = vld [vmem:[#allocation9 + $0x240] sm:$0xff]
    %v281 = vld [vmem:[#allocation9 + $0x248] sm:$0xff]
    %v282 = vld [vmem:[#allocation9 + $0x250] sm:$0xff]
    %v283 = vld [vmem:[#allocation9 + $0x258] sm:$0xff]
    %v284 = vld [vmem:[#allocation9 + $0x260] sm:$0xff]
    %v285 = vld [vmem:[#allocation9 + $0x268] sm:$0xff]
    %v286 = vld [vmem:[#allocation9 + $0x270] sm:$0xff]
    %v287 = vld [vmem:[#allocation9 + $0x278] sm:$0xff]
    %v288 = vld [vmem:[#allocation9 + $0x280] sm:$0xff]
    %v289 = vld [vmem:[#allocation9 + $0x288] sm:$0xff]
    %v290 = vld [vmem:[#allocation9 + $0x290] sm:$0xff]
    %v291 = vld [vmem:[#allocation9 + $0x298] sm:$0xff]
    %v292 = vld [vmem:[#allocation9 + $0x2a0] sm:$0xff]
    %v293 = vld [vmem:[#allocation9 + $0x2a8] sm:$0xff]
    %v294 = vld [vmem:[#allocation9 + $0x2b0] sm:$0xff]
    %v295 = vld [vmem:[#allocation9 + $0x2b8] sm:$0xff]
    %v296 = vld [vmem:[#allocation9 + $0x2c0] sm:$0xff]
    %v297 = vld [vmem:[#allocation9 + $0x2c8] sm:$0xff]
    %v298 = vld [vmem:[#allocation9 + $0x2d0] sm:$0xff]
    %v299 = vld [vmem:[#allocation9 + $0x2d8] sm:$0xff]
    %v300 = vld [vmem:[#allocation9 + $0x2e0] sm:$0xff]
    %v301 = vld [vmem:[#allocation9 + $0x2e8] sm:$0xff]
    %v302 = vld [vmem:[#allocation9 + $0x2f0] sm:$0xff]
    %v303 = vld [vmem:[#allocation9 + $0x2f8] sm:$0xff]
    %v304 = vld [vmem:[#allocation9 + $0x300] sm:$0xff]
    %v305 = vld [vmem:[#allocation9 + $0x308] sm:$0xff]
    %v306 = vld [vmem:[#allocation9 + $0x310] sm:$0xff]
    %v307 = vld [vmem:[#allocation9 + $0x318] sm:$0xff]
    %v308 = vld [vmem:[#allocation9 + $0x320] sm:$0xff]
    %v309 = vld [vmem:[#allocation9 + $0x328] sm:$0xff]
    %v310 = vld [vmem:[#allocation9 + $0x330] sm:$0xff]
    %v311 = vld [vmem:[#allocation9 + $0x338] sm:$0xff]
    %v312 = vld [vmem:[#allocation9 + $0x340] sm:$0xff]
    %v313 = vld [vmem:[#allocation9 + $0x348] sm:$0xff]
    %v314 = vld [vmem:[#allocation9 + $0x350] sm:$0xff]
    %v315 = vld [vmem:[#allocation9 + $0x358] sm:$0xff]
    %v316 = vld [vmem:[#allocation9 + $0x360] sm:$0xff]
    %v317 = vld [vmem:[#allocation9 + $0x368] sm:$0xff]
    %v318 = vld [vmem:[#allocation9 + $0x370] sm:$0xff]
    %v319 = vld [vmem:[#allocation9 + $0x378] sm:$0xff]
    %v320 = vld [vmem:[#allocation9 + $0x380] sm:$0xff]
    %v321 = vld [vmem:[#allocation9 + $0x388] sm:$0xff]
    %v322 = vld [vmem:[#allocation9 + $0x390] sm:$0xff]
    %v323 = vld [vmem:[#allocation9 + $0x398] sm:$0xff]
    %v324 = vld [vmem:[#allocation9 + $0x3a0] sm:$0xff]
    %v325 = vld [vmem:[#allocation9 + $0x3a8] sm:$0xff]
    %v326 = vld [vmem:[#allocation9 + $0x3b0] sm:$0xff]
    %v327 = vld [vmem:[#allocation9 + $0x3b8] sm:$0xff]
    %v328 = vld [vmem:[#allocation9 + $0x3c0] sm:$0xff]
    %v329 = vld [vmem:[#allocation9 + $0x3c8] sm:$0xff]
    %v330 = vld [vmem:[#allocation9 + $0x3d0] sm:$0xff]
    %v331 = vld [vmem:[#allocation9 + $0x3d8] sm:$0xff]
    %v332 = vld [vmem:[#allocation9 + $0x3e0] sm:$0xff]
    %v333 = vld [vmem:[#allocation9 + $0x3e8] sm:$0xff]
    %v334 = vld [vmem:[#allocation9 + $0x3f0] sm:$0xff]
    %v335 = vld [vmem:[#allocation9 + $0x3f8] sm:$0xff]
    %v336 = vld [vmem:[#allocation9 + $0x400] sm:$0xff]
    %v337 = vld [vmem:[#allocation9 + $0x408] sm:$0xff]
    %v338 = vld [vmem:[#allocation9 + $0x410] sm:$0xff]
    %v339 = vld [vmem:[#allocation9 + $0x418] sm:$0xff]
    %v340 = vld [vmem:[#allocation9 + $0x420] sm:$0xff]
    %v341 = vld [vmem:[#allocation9 + $0x428] sm:$0xff]
    %v342 = vld [vmem:[#allocation9 + $0x430] sm:$0xff]
    %v343 = vld [vmem:[#allocation9 + $0x438] sm:$0xff]
    %v344 = vld [vmem:[#allocation9 + $0x440] sm:$0xff]
    %v345 = vld [vmem:[#allocation9 + $0x448] sm:$0xff]
    %v346 = vld [vmem:[#allocation9 + $0x450] sm:$0xff]
    %v347 = vld [vmem:[#allocation9 + $0x458] sm:$0xff]
    %v348 = vld [vmem:[#allocation9 + $0x460] sm:$0xff]
    %v349 = vld [vmem:[#allocation9 + $0x468] sm:$0xff]
    %v350 = vld [vmem:[#allocation9 + $0x470] sm:$0xff]
    %v351 = vld [vmem:[#allocation9 + $0x478] sm:$0xff]
    %v352 = vld [vmem:[#allocation9 + $0x480] sm:$0xff]
    %v353 = vld [vmem:[#allocation9 + $0x488] sm:$0xff]
    %v354 = vld [vmem:[#allocation9 + $0x490] sm:$0xff]
    %v355 = vld [vmem:[#allocation9 + $0x498] sm:$0xff]
    %v356 = vld [vmem:[#allocation9 + $0x4a0] sm:$0xff]
    %v357 = vld [vmem:[#allocation9 + $0x4a8] sm:$0xff]
    %v358 = vld [vmem:[#allocation9 + $0x4b0] sm:$0xff]
    %v359 = vld [vmem:[#allocation9 + $0x4b8] sm:$0xff]
    %v360 = vld [vmem:[#allocation9 + $0x4c0] sm:$0xff]
    %v361 = vld [vmem:[#allocation9 + $0x4c8] sm:$0xff]
    %v362 = vld [vmem:[#allocation9 + $0x4d0] sm:$0xff]
    %v363 = vld [vmem:[#allocation9 + $0x4d8] sm:$0xff]
    %v364 = vld [vmem:[#allocation9 + $0x4e0] sm:$0xff]
    %v365 = vld [vmem:[#allocation9 + $0x4e8] sm:$0xff]
    %v366 = vld [vmem:[#allocation9 + $0x4f0] sm:$0xff]
    %v367 = vld [vmem:[#allocation9 + $0x4f8] sm:$0xff]
    %v368 = vld [vmem:[#allocation9 + $0x500] sm:$0xff]
    %v369 = vld [vmem:[#allocation9 + $0x508] sm:$0xff]
    %v370 = vld [vmem:[#allocation9 + $0x510] sm:$0xff]
    %v371 = vld [vmem:[#allocation9 + $0x518] sm:$0xff]
    %v372 = vld [vmem:[#allocation9 + $0x520] sm:$0xff]
    %v373 = vld [vmem:[#allocation9 + $0x528] sm:$0xff]
    %v374 = vld [vmem:[#allocation9 + $0x530] sm:$0xff]
    %v375 = vld [vmem:[#allocation9 + $0x538] sm:$0xff]
    %v376 = vld [vmem:[#allocation9 + $0x540] sm:$0xff]
    %v377 = vld [vmem:[#allocation9 + $0x548] sm:$0xff]
    %v378 = vld [vmem:[#allocation9 + $0x550] sm:$0xff]
    %v379 = vld [vmem:[#allocation9 + $0x558] sm:$0xff]
    %v380 = vld [vmem:[#allocation9 + $0x560] sm:$0xff]
    %v381 = vld [vmem:[#allocation9 + $0x568] sm:$0xff]
    %v382 = vld [vmem:[#allocation9 + $0x570] sm:$0xff]
    %v383 = vld [vmem:[#allocation9 + $0x578] sm:$0xff]
    %v384 = vld [vmem:[#allocation9 + $0x580] sm:$0xff]
    %v385 = vld [vmem:[#allocation9 + $0x588] sm:$0xff]
    %v386 = vld [vmem:[#allocation9 + $0x590] sm:$0xff]
    %v387 = vld [vmem:[#allocation9 + $0x598] sm:$0xff]
    %v388 = vld [vmem:[#allocation9 + $0x5a0] sm:$0xff]
    %v389 = vld [vmem:[#allocation9 + $0x5a8] sm:$0xff]
    %v390 = vld [vmem:[#allocation9 + $0x5b0] sm:$0xff]
    %v391 = vld [vmem:[#allocation9 + $0x5b8] sm:$0xff]
    %v392 = vld [vmem:[#allocation9 + $0x5c0] sm:$0xff]
    %v393 = vld [vmem:[#allocation9 + $0x5c8] sm:$0xff]
    %v394 = vld [vmem:[#allocation9 + $0x5d0] sm:$0xff]
    %v395 = vld [vmem:[#allocation9 + $0x5d8] sm:$0xff]
    %v396 = vld [vmem:[#allocation9 + $0x5e0] sm:$0xff]
    %v397 = vld [vmem:[#allocation9 + $0x5e8] sm:$0xff]
    %v398 = vld [vmem:[#allocation9 + $0x5f0] sm:$0xff]
    %v399 = vld [vmem:[#allocation9 + $0x5f8] sm:$0xff]
    %v400 = vld [vmem:[#allocation9 + $0x600] sm:$0xff]
    %v401 = vld [vmem:[#allocation9 + $0x608] sm:$0xff]
    %v402 = vld [vmem:[#allocation9 + $0x610] sm:$0xff]
    %v403 = vld [vmem:[#allocation9 + $0x618] sm:$0xff]
    %v404 = vld [vmem:[#allocation9 + $0x620] sm:$0xff]
    %v405 = vld [vmem:[#allocation9 + $0x628] sm:$0xff]
    %v406 = vld [vmem:[#allocation9 + $0x630] sm:$0xff]
    %v407 = vld [vmem:[#allocation9 + $0x638] sm:$0xff]
    %v408 = vld [vmem:[#allocation9 + $0x640] sm:$0xff]
    %v409 = vld [vmem:[#allocation9 + $0x648] sm:$0xff]
    %v410 = vld [vmem:[#allocation9 + $0x650] sm:$0xff]
    %v411 = vld [vmem:[#allocation9 + $0x658] sm:$0xff]
    %v412 = vld [vmem:[#allocation9 + $0x660] sm:$0xff]
    %v413 = vld [vmem:[#allocation9 + $0x668] sm:$0xff]
    %v414 = vld [vmem:[#allocation9 + $0x670] sm:$0xff]
    %v415 = vld [vmem:[#allocation9 + $0x678] sm:$0xff]
    %v416 = vld [vmem:[#allocation9 + $0x680] sm:$0xff]
    %v417 = vld [vmem:[#allocation9 + $0x688] sm:$0xff]
    %v418 = vld [vmem:[#allocation9 + $0x690] sm:$0xff]
    %v419 = vld [vmem:[#allocation9 + $0x698] sm:$0xff]
    %v420 = vld [vmem:[#allocation9 + $0x6a0] sm:$0xff]
    %v421 = vld [vmem:[#allocation9 + $0x6a8] sm:$0xff]
    %v422 = vld [vmem:[#allocation9 + $0x6b0] sm:$0xff]
    %v423 = vld [vmem:[#allocation9 + $0x6b8] sm:$0xff]
    %v424 = vld [vmem:[#allocation9 + $0x6c0] sm:$0xff]
    %v425 = vld [vmem:[#allocation9 + $0x6c8] sm:$0xff]
    %v426 = vld [vmem:[#allocation9 + $0x6d0] sm:$0xff]
    %v427 = vld [vmem:[#allocation9 + $0x6d8] sm:$0xff]
    %v428 = vld [vmem:[#allocation9 + $0x6e0] sm:$0xff]
    %v429 = vld [vmem:[#allocation9 + $0x6e8] sm:$0xff]
    %v430 = vld [vmem:[#allocation9 + $0x6f0] sm:$0xff]
    %v431 = vld [vmem:[#allocation9 + $0x6f8] sm:$0xff]
    %v432 = vld [vmem:[#allocation9 + $0x700] sm:$0xff]
    %v433 = vld [vmem:[#allocation9 + $0x708] sm:$0xff]
    %v434 = vld [vmem:[#allocation9 + $0x710] sm:$0xff]
    %v435 = vld [vmem:[#allocation9 + $0x718] sm:$0xff]
    %v436 = vld [vmem:[#allocation9 + $0x720] sm:$0xff]
    %v437 = vld [vmem:[#allocation9 + $0x728] sm:$0xff]
    %v438 = vld [vmem:[#allocation9 + $0x730] sm:$0xff]
    %v439 = vld [vmem:[#allocation9 + $0x738] sm:$0xff]
    %v440 = vld [vmem:[#allocation9 + $0x740] sm:$0xff]
    %v441 = vld [vmem:[#allocation9 + $0x748] sm:$0xff]
    %v442 = vld [vmem:[#allocation9 + $0x750] sm:$0xff]
    %v443 = vld [vmem:[#allocation9 + $0x758] sm:$0xff]
    %v444 = vld [vmem:[#allocation9 + $0x760] sm:$0xff]
    %v445 = vld [vmem:[#allocation9 + $0x768] sm:$0xff]
    %v446 = vld [vmem:[#allocation9 + $0x770] sm:$0xff]
    %v447 = vld [vmem:[#allocation9 + $0x778] sm:$0xff]
    %v448 = vld [vmem:[#allocation9 + $0x780] sm:$0xff]
    %v449 = vld [vmem:[#allocation9 + $0x788] sm:$0xff]
    %v450 = vld [vmem:[#allocation9 + $0x790] sm:$0xff]
    %v451 = vld [vmem:[#allocation9 + $0x798] sm:$0xff]
    %v452 = vld [vmem:[#allocation9 + $0x7a0] sm:$0xff]
    %v453 = vld [vmem:[#allocation9 + $0x7a8] sm:$0xff]
    %v454 = vld [vmem:[#allocation9 + $0x7b0] sm:$0xff]
    %v455 = vld [vmem:[#allocation9 + $0x7b8] sm:$0xff]
    %v456 = vld [vmem:[#allocation9 + $0x7c0] sm:$0xff]
    %v457 = vld [vmem:[#allocation9 + $0x7c8] sm:$0xff]
    %v458 = vld [vmem:[#allocation9 + $0x7d0] sm:$0xff]
    %v459 = vld [vmem:[#allocation9 + $0x7d8] sm:$0xff]
    %v460 = vld [vmem:[#allocation9 + $0x7e0] sm:$0xff]
    %v461 = vld [vmem:[#allocation9 + $0x7e8] sm:$0xff]
    %v462 = vld [vmem:[#allocation9 + $0x7f0] sm:$0xff]
    %v463 = vld [vmem:[#allocation9 + $0x7f8] sm:$0xff]
    %v464 = vld [vmem:[%s2] sm:$0xf]
    %v466 = vlaneseq
    %v467 = vshrl.u32 %v466, 7
    %v468 = vsub.s32 0, %v467
    %v469 = vrot.slane %v464, %v468
    %v470 = vlaneseq
    %v471 = vshrl.u32 %v470, 7
    %v472 = vsub.s32 1, %v471
    %v473 = vrot.slane %v464, %v472
    %v474 = vlaneseq
    %v475 = vshrl.u32 %v474, 7
    %v476 = vsub.s32 2, %v475
    %v477 = vrot.slane %v464, %v476
    %v478 = vlaneseq
    %v479 = vshrl.u32 %v478, 7
    %v480 = vsub.s32 3, %v479
    %v481 = vrot.slane %v464, %v480
    %v742 = vunpack.c.l.b16 %v208
    %v743 = vunpack.c.h.b16 %v208
    %v744 = vunpack.c.l.b16 %v209
    %v745 = vunpack.c.h.b16 %v209
    %v746 = vunpack.c.l.b16 %v210
    %v747 = vunpack.c.h.b16 %v210
    %v748 = vunpack.c.l.b16 %v211
    %v749 = vunpack.c.h.b16 %v211
    %v750 = vunpack.c.l.b16 %v212
    %v751 = vunpack.c.h.b16 %v212
    %v752 = vunpack.c.l.b16 %v213
    %v753 = vunpack.c.h.b16 %v213
    %v754 = vunpack.c.l.b16 %v214
    %v755 = vunpack.c.h.b16 %v214
    %v756 = vunpack.c.l.b16 %v215
    %v757 = vunpack.c.h.b16 %v215
    %v758 = vunpack.c.l.b16 %v216
    %v759 = vunpack.c.h.b16 %v216
    %v760 = vunpack.c.l.b16 %v217
    %v761 = vunpack.c.h.b16 %v217
    %v762 = vunpack.c.l.b16 %v218
    %v763 = vunpack.c.h.b16 %v218
    %v764 = vunpack.c.l.b16 %v219
    %v765 = vunpack.c.h.b16 %v219
    %v766 = vunpack.c.l.b16 %v220
    %v767 = vunpack.c.h.b16 %v220
    %v768 = vunpack.c.l.b16 %v221
    %v769 = vunpack.c.h.b16 %v221
    %v770 = vunpack.c.l.b16 %v222
    %v771 = vunpack.c.h.b16 %v222
    %v772 = vunpack.c.l.b16 %v223
    %v773 = vunpack.c.h.b16 %v223
    %v774 = vunpack.c.l.b16 %v224
    %v775 = vunpack.c.h.b16 %v224
    %v776 = vunpack.c.l.b16 %v225
    %v777 = vunpack.c.h.b16 %v225
    %v778 = vunpack.c.l.b16 %v226
    %v779 = vunpack.c.h.b16 %v226
    %v780 = vunpack.c.l.b16 %v227
    %v781 = vunpack.c.h.b16 %v227
    %v782 = vunpack.c.l.b16 %v228
    %v783 = vunpack.c.h.b16 %v228
    %v784 = vunpack.c.l.b16 %v229
    %v785 = vunpack.c.h.b16 %v229
    %v786 = vunpack.c.l.b16 %v230
    %v787 = vunpack.c.h.b16 %v230
    %v788 = vunpack.c.l.b16 %v231
    %v789 = vunpack.c.h.b16 %v231
    %v790 = vunpack.c.l.b16 %v232
    %v791 = vunpack.c.h.b16 %v232
    %v792 = vunpack.c.l.b16 %v233
    %v793 = vunpack.c.h.b16 %v233
    %v794 = vunpack.c.l.b16 %v234
    %v795 = vunpack.c.h.b16 %v234
    %v796 = vunpack.c.l.b16 %v235
    %v797 = vunpack.c.h.b16 %v235
    %v798 = vunpack.c.l.b16 %v236
    %v799 = vunpack.c.h.b16 %v236
    %v800 = vunpack.c.l.b16 %v237
    %v801 = vunpack.c.h.b16 %v237
    %v802 = vunpack.c.l.b16 %v238
    %v803 = vunpack.c.h.b16 %v238
    %v804 = vunpack.c.l.b16 %v239
    %v805 = vunpack.c.h.b16 %v239
    %v806 = vunpack.c.l.b16 %v240
    %v807 = vunpack.c.h.b16 %v240
    %v808 = vunpack.c.l.b16 %v241
    %v809 = vunpack.c.h.b16 %v241
    %v810 = vunpack.c.l.b16 %v242
    %v811 = vunpack.c.h.b16 %v242
    %v812 = vunpack.c.l.b16 %v243
    %v813 = vunpack.c.h.b16 %v243
    %v814 = vunpack.c.l.b16 %v244
    %v815 = vunpack.c.h.b16 %v244
    %v816 = vunpack.c.l.b16 %v245
    %v817 = vunpack.c.h.b16 %v245
    %v818 = vunpack.c.l.b16 %v246
    %v819 = vunpack.c.h.b16 %v246
    %v820 = vunpack.c.l.b16 %v247
    %v821 = vunpack.c.h.b16 %v247
    %v822 = vunpack.c.l.b16 %v248
    %v823 = vunpack.c.h.b16 %v248
    %v824 = vunpack.c.l.b16 %v249
    %v825 = vunpack.c.h.b16 %v249
    %v826 = vunpack.c.l.b16 %v250
    %v827 = vunpack.c.h.b16 %v250
    %v828 = vunpack.c.l.b16 %v251
    %v829 = vunpack.c.h.b16 %v251
    %v830 = vunpack.c.l.b16 %v252
    %v831 = vunpack.c.h.b16 %v252
    %v832 = vunpack.c.l.b16 %v253
    %v833 = vunpack.c.h.b16 %v253
    %v834 = vunpack.c.l.b16 %v254
    %v835 = vunpack.c.h.b16 %v254
    %v836 = vunpack.c.l.b16 %v255
    %v837 = vunpack.c.h.b16 %v255
    %v838 = vunpack.c.l.b16 %v256
    %v839 = vunpack.c.h.b16 %v256
    %v840 = vunpack.c.l.b16 %v257
    %v841 = vunpack.c.h.b16 %v257
    %v842 = vunpack.c.l.b16 %v258
    %v843 = vunpack.c.h.b16 %v258
    %v844 = vunpack.c.l.b16 %v259
    %v845 = vunpack.c.h.b16 %v259
    %v846 = vunpack.c.l.b16 %v260
    %v847 = vunpack.c.h.b16 %v260
    %v848 = vunpack.c.l.b16 %v261
    %v849 = vunpack.c.h.b16 %v261
    %v850 = vunpack.c.l.b16 %v262
    %v851 = vunpack.c.h.b16 %v262
    %v852 = vunpack.c.l.b16 %v263
    %v853 = vunpack.c.h.b16 %v263
    %v854 = vunpack.c.l.b16 %v264
    %v855 = vunpack.c.h.b16 %v264
    %v856 = vunpack.c.l.b16 %v265
    %v857 = vunpack.c.h.b16 %v265
    %v858 = vunpack.c.l.b16 %v266
    %v859 = vunpack.c.h.b16 %v266
    %v860 = vunpack.c.l.b16 %v267
    %v861 = vunpack.c.h.b16 %v267
    %v862 = vunpack.c.l.b16 %v268
    %v863 = vunpack.c.h.b16 %v268
    %v864 = vunpack.c.l.b16 %v269
    %v865 = vunpack.c.h.b16 %v269
    %v866 = vunpack.c.l.b16 %v270
    %v867 = vunpack.c.h.b16 %v270
    %v868 = vunpack.c.l.b16 %v271
    %v869 = vunpack.c.h.b16 %v271
    %v870 = vunpack.c.l.b16 %v272
    %v871 = vunpack.c.h.b16 %v272
    %v872 = vunpack.c.l.b16 %v273
    %v873 = vunpack.c.h.b16 %v273
    %v874 = vunpack.c.l.b16 %v274
    %v875 = vunpack.c.h.b16 %v274
    %v876 = vunpack.c.l.b16 %v275
    %v877 = vunpack.c.h.b16 %v275
    %v878 = vunpack.c.l.b16 %v276
    %v879 = vunpack.c.h.b16 %v276
    %v880 = vunpack.c.l.b16 %v277
    %v881 = vunpack.c.h.b16 %v277
    %v882 = vunpack.c.l.b16 %v278
    %v883 = vunpack.c.h.b16 %v278
    %v884 = vunpack.c.l.b16 %v279
    %v885 = vunpack.c.h.b16 %v279
    %v886 = vunpack.c.l.b16 %v280
    %v887 = vunpack.c.h.b16 %v280
    %v888 = vunpack.c.l.b16 %v281
    %v889 = vunpack.c.h.b16 %v281
    %v890 = vunpack.c.l.b16 %v282
    %v891 = vunpack.c.h.b16 %v282
    %v892 = vunpack.c.l.b16 %v283
    %v893 = vunpack.c.h.b16 %v283
    %v894 = vunpack.c.l.b16 %v284
    %v895 = vunpack.c.h.b16 %v284
    %v896 = vunpack.c.l.b16 %v285
    %v897 = vunpack.c.h.b16 %v285
    %v898 = vunpack.c.l.b16 %v286
    %v899 = vunpack.c.h.b16 %v286
    %v900 = vunpack.c.l.b16 %v287
    %v901 = vunpack.c.h.b16 %v287
    %v902 = vunpack.c.l.b16 %v288
    %v903 = vunpack.c.h.b16 %v288
    %v904 = vunpack.c.l.b16 %v289
    %v905 = vunpack.c.h.b16 %v289
    %v906 = vunpack.c.l.b16 %v290
    %v907 = vunpack.c.h.b16 %v290
    %v908 = vunpack.c.l.b16 %v291
    %v909 = vunpack.c.h.b16 %v291
    %v910 = vunpack.c.l.b16 %v292
    %v911 = vunpack.c.h.b16 %v292
    %v912 = vunpack.c.l.b16 %v293
    %v913 = vunpack.c.h.b16 %v293
    %v914 = vunpack.c.l.b16 %v294
    %v915 = vunpack.c.h.b16 %v294
    %v916 = vunpack.c.l.b16 %v295
    %v917 = vunpack.c.h.b16 %v295
    %v918 = vunpack.c.l.b16 %v296
    %v919 = vunpack.c.h.b16 %v296
    %v920 = vunpack.c.l.b16 %v297
    %v921 = vunpack.c.h.b16 %v297
    %v922 = vunpack.c.l.b16 %v298
    %v923 = vunpack.c.h.b16 %v298
    %v924 = vunpack.c.l.b16 %v299
    %v925 = vunpack.c.h.b16 %v299
    %v926 = vunpack.c.l.b16 %v300
    %v927 = vunpack.c.h.b16 %v300
    %v928 = vunpack.c.l.b16 %v301
    %v929 = vunpack.c.h.b16 %v301
    %v930 = vunpack.c.l.b16 %v302
    %v931 = vunpack.c.h.b16 %v302
    %v932 = vunpack.c.l.b16 %v303
    %v933 = vunpack.c.h.b16 %v303
    %v934 = vunpack.c.l.b16 %v304
    %v935 = vunpack.c.h.b16 %v304
    %v936 = vunpack.c.l.b16 %v305
    %v937 = vunpack.c.h.b16 %v305
    %v938 = vunpack.c.l.b16 %v306
    %v939 = vunpack.c.h.b16 %v306
    %v940 = vunpack.c.l.b16 %v307
    %v941 = vunpack.c.h.b16 %v307
    %v942 = vunpack.c.l.b16 %v308
    %v943 = vunpack.c.h.b16 %v308
    %v944 = vunpack.c.l.b16 %v309
    %v945 = vunpack.c.h.b16 %v309
    %v946 = vunpack.c.l.b16 %v310
    %v947 = vunpack.c.h.b16 %v310
    %v948 = vunpack.c.l.b16 %v311
    %v949 = vunpack.c.h.b16 %v311
    %v950 = vunpack.c.l.b16 %v312
    %v951 = vunpack.c.h.b16 %v312
    %v952 = vunpack.c.l.b16 %v313
    %v953 = vunpack.c.h.b16 %v313
    %v954 = vunpack.c.l.b16 %v314
    %v955 = vunpack.c.h.b16 %v314
    %v956 = vunpack.c.l.b16 %v315
    %v957 = vunpack.c.h.b16 %v315
    %v958 = vunpack.c.l.b16 %v316
    %v959 = vunpack.c.h.b16 %v316
    %v960 = vunpack.c.l.b16 %v317
    %v961 = vunpack.c.h.b16 %v317
    %v962 = vunpack.c.l.b16 %v318
    %v963 = vunpack.c.h.b16 %v318
    %v964 = vunpack.c.l.b16 %v319
    %v965 = vunpack.c.h.b16 %v319
    %v966 = vunpack.c.l.b16 %v320
    %v967 = vunpack.c.h.b16 %v320
    %v968 = vunpack.c.l.b16 %v321
    %v969 = vunpack.c.h.b16 %v321
    %v970 = vunpack.c.l.b16 %v322
    %v971 = vunpack.c.h.b16 %v322
    %v972 = vunpack.c.l.b16 %v323
    %v973 = vunpack.c.h.b16 %v323
    %v974 = vunpack.c.l.b16 %v324
    %v975 = vunpack.c.h.b16 %v324
    %v976 = vunpack.c.l.b16 %v325
    %v977 = vunpack.c.h.b16 %v325
    %v978 = vunpack.c.l.b16 %v326
    %v979 = vunpack.c.h.b16 %v326
    %v980 = vunpack.c.l.b16 %v327
    %v981 = vunpack.c.h.b16 %v327
    %v982 = vunpack.c.l.b16 %v328
    %v983 = vunpack.c.h.b16 %v328
    %v984 = vunpack.c.l.b16 %v329
    %v985 = vunpack.c.h.b16 %v329
    %v986 = vunpack.c.l.b16 %v330
    %v987 = vunpack.c.h.b16 %v330
    %v988 = vunpack.c.l.b16 %v331
    %v989 = vunpack.c.h.b16 %v331
    %v990 = vunpack.c.l.b16 %v332
    %v991 = vunpack.c.h.b16 %v332
    %v992 = vunpack.c.l.b16 %v333
    %v993 = vunpack.c.h.b16 %v333
    %v994 = vunpack.c.l.b16 %v334
    %v995 = vunpack.c.h.b16 %v334
    %v996 = vunpack.c.l.b16 %v335
    %v997 = vunpack.c.h.b16 %v335
    %v998 = vunpack.c.l.b16 %v336
    %v999 = vunpack.c.h.b16 %v336
    %v1000 = vunpack.c.l.b16 %v337
    %v1001 = vunpack.c.h.b16 %v337
    %v1002 = vunpack.c.l.b16 %v338
    %v1003 = vunpack.c.h.b16 %v338
    %v1004 = vunpack.c.l.b16 %v339
    %v1005 = vunpack.c.h.b16 %v339
    %v1006 = vunpack.c.l.b16 %v340
    %v1007 = vunpack.c.h.b16 %v340
    %v1008 = vunpack.c.l.b16 %v341
    %v1009 = vunpack.c.h.b16 %v341
    %v1010 = vunpack.c.l.b16 %v342
    %v1011 = vunpack.c.h.b16 %v342
    %v1012 = vunpack.c.l.b16 %v343
    %v1013 = vunpack.c.h.b16 %v343
    %v1014 = vunpack.c.l.b16 %v344
    %v1015 = vunpack.c.h.b16 %v344
    %v1016 = vunpack.c.l.b16 %v345
    %v1017 = vunpack.c.h.b16 %v345
    %v1018 = vunpack.c.l.b16 %v346
    %v1019 = vunpack.c.h.b16 %v346
    %v1020 = vunpack.c.l.b16 %v347
    %v1021 = vunpack.c.h.b16 %v347
    %v1022 = vunpack.c.l.b16 %v348
    %v1023 = vunpack.c.h.b16 %v348
    %v1024 = vunpack.c.l.b16 %v349
    %v1025 = vunpack.c.h.b16 %v349
    %v1026 = vunpack.c.l.b16 %v350
    %v1027 = vunpack.c.h.b16 %v350
    %v1028 = vunpack.c.l.b16 %v351
    %v1029 = vunpack.c.h.b16 %v351
    %v1030 = vunpack.c.l.b16 %v352
    %v1031 = vunpack.c.h.b16 %v352
    %v1032 = vunpack.c.l.b16 %v353
    %v1033 = vunpack.c.h.b16 %v353
    %v1034 = vunpack.c.l.b16 %v354
    %v1035 = vunpack.c.h.b16 %v354
    %v1036 = vunpack.c.l.b16 %v355
    %v1037 = vunpack.c.h.b16 %v355
    %v1038 = vunpack.c.l.b16 %v356
    %v1039 = vunpack.c.h.b16 %v356
    %v1040 = vunpack.c.l.b16 %v357
    %v1041 = vunpack.c.h.b16 %v357
    %v1042 = vunpack.c.l.b16 %v358
    %v1043 = vunpack.c.h.b16 %v358
    %v1044 = vunpack.c.l.b16 %v359
    %v1045 = vunpack.c.h.b16 %v359
    %v1046 = vunpack.c.l.b16 %v360
    %v1047 = vunpack.c.h.b16 %v360
    %v1048 = vunpack.c.l.b16 %v361
    %v1049 = vunpack.c.h.b16 %v361
    %v1050 = vunpack.c.l.b16 %v362
    %v1051 = vunpack.c.h.b16 %v362
    %v1052 = vunpack.c.l.b16 %v363
    %v1053 = vunpack.c.h.b16 %v363
    %v1054 = vunpack.c.l.b16 %v364
    %v1055 = vunpack.c.h.b16 %v364
    %v1056 = vunpack.c.l.b16 %v365
    %v1057 = vunpack.c.h.b16 %v365
    %v1058 = vunpack.c.l.b16 %v366
    %v1059 = vunpack.c.h.b16 %v366
    %v1060 = vunpack.c.l.b16 %v367
    %v1061 = vunpack.c.h.b16 %v367
    %v1062 = vunpack.c.l.b16 %v368
    %v1063 = vunpack.c.h.b16 %v368
    %v1064 = vunpack.c.l.b16 %v369
    %v1065 = vunpack.c.h.b16 %v369
    %v1066 = vunpack.c.l.b16 %v370
    %v1067 = vunpack.c.h.b16 %v370
    %v1068 = vunpack.c.l.b16 %v371
    %v1069 = vunpack.c.h.b16 %v371
    %v1070 = vunpack.c.l.b16 %v372
    %v1071 = vunpack.c.h.b16 %v372
    %v1072 = vunpack.c.l.b16 %v373
    %v1073 = vunpack.c.h.b16 %v373
    %v1074 = vunpack.c.l.b16 %v374
    %v1075 = vunpack.c.h.b16 %v374
    %v1076 = vunpack.c.l.b16 %v375
    %v1077 = vunpack.c.h.b16 %v375
    %v1078 = vunpack.c.l.b16 %v376
    %v1079 = vunpack.c.h.b16 %v376
    %v1080 = vunpack.c.l.b16 %v377
    %v1081 = vunpack.c.h.b16 %v377
    %v1082 = vunpack.c.l.b16 %v378
    %v1083 = vunpack.c.h.b16 %v378
    %v1084 = vunpack.c.l.b16 %v379
    %v1085 = vunpack.c.h.b16 %v379
    %v1086 = vunpack.c.l.b16 %v380
    %v1087 = vunpack.c.h.b16 %v380
    %v1088 = vunpack.c.l.b16 %v381
    %v1089 = vunpack.c.h.b16 %v381
    %v1090 = vunpack.c.l.b16 %v382
    %v1091 = vunpack.c.h.b16 %v382
    %v1092 = vunpack.c.l.b16 %v383
    %v1093 = vunpack.c.h.b16 %v383
    %v1094 = vunpack.c.l.b16 %v384
    %v1095 = vunpack.c.h.b16 %v384
    %v1096 = vunpack.c.l.b16 %v385
    %v1097 = vunpack.c.h.b16 %v385
    %v1098 = vunpack.c.l.b16 %v386
    %v1099 = vunpack.c.h.b16 %v386
    %v1100 = vunpack.c.l.b16 %v387
    %v1101 = vunpack.c.h.b16 %v387
    %v1102 = vunpack.c.l.b16 %v388
    %v1103 = vunpack.c.h.b16 %v388
    %v1104 = vunpack.c.l.b16 %v389
    %v1105 = vunpack.c.h.b16 %v389
    %v1106 = vunpack.c.l.b16 %v390
    %v1107 = vunpack.c.h.b16 %v390
    %v1108 = vunpack.c.l.b16 %v391
    %v1109 = vunpack.c.h.b16 %v391
    %v1110 = vunpack.c.l.b16 %v392
    %v1111 = vunpack.c.h.b16 %v392
    %v1112 = vunpack.c.l.b16 %v393
    %v1113 = vunpack.c.h.b16 %v393
    %v1114 = vunpack.c.l.b16 %v394
    %v1115 = vunpack.c.h.b16 %v394
    %v1116 = vunpack.c.l.b16 %v395
    %v1117 = vunpack.c.h.b16 %v395
    %v1118 = vunpack.c.l.b16 %v396
    %v1119 = vunpack.c.h.b16 %v396
    %v1120 = vunpack.c.l.b16 %v397
    %v1121 = vunpack.c.h.b16 %v397
    %v1122 = vunpack.c.l.b16 %v398
    %v1123 = vunpack.c.h.b16 %v398
    %v1124 = vunpack.c.l.b16 %v399
    %v1125 = vunpack.c.h.b16 %v399
    %v1126 = vunpack.c.l.b16 %v400
    %v1127 = vunpack.c.h.b16 %v400
    %v1128 = vunpack.c.l.b16 %v401
    %v1129 = vunpack.c.h.b16 %v401
    %v1130 = vunpack.c.l.b16 %v402
    %v1131 = vunpack.c.h.b16 %v402
    %v1132 = vunpack.c.l.b16 %v403
    %v1133 = vunpack.c.h.b16 %v403
    %v1134 = vunpack.c.l.b16 %v404
    %v1135 = vunpack.c.h.b16 %v404
    %v1136 = vunpack.c.l.b16 %v405
    %v1137 = vunpack.c.h.b16 %v405
    %v1138 = vunpack.c.l.b16 %v406
    %v1139 = vunpack.c.h.b16 %v406
    %v1140 = vunpack.c.l.b16 %v407
    %v1141 = vunpack.c.h.b16 %v407
    %v1142 = vunpack.c.l.b16 %v408
    %v1143 = vunpack.c.h.b16 %v408
    %v1144 = vunpack.c.l.b16 %v409
    %v1145 = vunpack.c.h.b16 %v409
    %v1146 = vunpack.c.l.b16 %v410
    %v1147 = vunpack.c.h.b16 %v410
    %v1148 = vunpack.c.l.b16 %v411
    %v1149 = vunpack.c.h.b16 %v411
    %v1150 = vunpack.c.l.b16 %v412
    %v1151 = vunpack.c.h.b16 %v412
    %v1152 = vunpack.c.l.b16 %v413
    %v1153 = vunpack.c.h.b16 %v413
    %v1154 = vunpack.c.l.b16 %v414
    %v1155 = vunpack.c.h.b16 %v414
    %v1156 = vunpack.c.l.b16 %v415
    %v1157 = vunpack.c.h.b16 %v415
    %v1158 = vunpack.c.l.b16 %v416
    %v1159 = vunpack.c.h.b16 %v416
    %v1160 = vunpack.c.l.b16 %v417
    %v1161 = vunpack.c.h.b16 %v417
    %v1162 = vunpack.c.l.b16 %v418
    %v1163 = vunpack.c.h.b16 %v418
    %v1164 = vunpack.c.l.b16 %v419
    %v1165 = vunpack.c.h.b16 %v419
    %v1166 = vunpack.c.l.b16 %v420
    %v1167 = vunpack.c.h.b16 %v420
    %v1168 = vunpack.c.l.b16 %v421
    %v1169 = vunpack.c.h.b16 %v421
    %v1170 = vunpack.c.l.b16 %v422
    %v1171 = vunpack.c.h.b16 %v422
    %v1172 = vunpack.c.l.b16 %v423
    %v1173 = vunpack.c.h.b16 %v423
    %v1174 = vunpack.c.l.b16 %v424
    %v1175 = vunpack.c.h.b16 %v424
    %v1176 = vunpack.c.l.b16 %v425
    %v1177 = vunpack.c.h.b16 %v425
    %v1178 = vunpack.c.l.b16 %v426
    %v1179 = vunpack.c.h.b16 %v426
    %v1180 = vunpack.c.l.b16 %v427
    %v1181 = vunpack.c.h.b16 %v427
    %v1182 = vunpack.c.l.b16 %v428
    %v1183 = vunpack.c.h.b16 %v428
    %v1184 = vunpack.c.l.b16 %v429
    %v1185 = vunpack.c.h.b16 %v429
    %v1186 = vunpack.c.l.b16 %v430
    %v1187 = vunpack.c.h.b16 %v430
    %v1188 = vunpack.c.l.b16 %v431
    %v1189 = vunpack.c.h.b16 %v431
    %v1190 = vunpack.c.l.b16 %v432
    %v1191 = vunpack.c.h.b16 %v432
    %v1192 = vunpack.c.l.b16 %v433
    %v1193 = vunpack.c.h.b16 %v433
    %v1194 = vunpack.c.l.b16 %v434
    %v1195 = vunpack.c.h.b16 %v434
    %v1196 = vunpack.c.l.b16 %v435
    %v1197 = vunpack.c.h.b16 %v435
    %v1198 = vunpack.c.l.b16 %v436
    %v1199 = vunpack.c.h.b16 %v436
    %v1200 = vunpack.c.l.b16 %v437
    %v1201 = vunpack.c.h.b16 %v437
    %v1202 = vunpack.c.l.b16 %v438
    %v1203 = vunpack.c.h.b16 %v438
    %v1204 = vunpack.c.l.b16 %v439
    %v1205 = vunpack.c.h.b16 %v439
    %v1206 = vunpack.c.l.b16 %v440
    %v1207 = vunpack.c.h.b16 %v440
    %v1208 = vunpack.c.l.b16 %v441
    %v1209 = vunpack.c.h.b16 %v441
    %v1210 = vunpack.c.l.b16 %v442
    %v1211 = vunpack.c.h.b16 %v442
    %v1212 = vunpack.c.l.b16 %v443
    %v1213 = vunpack.c.h.b16 %v443
    %v1214 = vunpack.c.l.b16 %v444
    %v1215 = vunpack.c.h.b16 %v444
    %v1216 = vunpack.c.l.b16 %v445
    %v1217 = vunpack.c.h.b16 %v445
    %v1218 = vunpack.c.l.b16 %v446
    %v1219 = vunpack.c.h.b16 %v446
    %v1220 = vunpack.c.l.b16 %v447
    %v1221 = vunpack.c.h.b16 %v447
    %v1222 = vunpack.c.l.b16 %v448
    %v1223 = vunpack.c.h.b16 %v448
    %v1224 = vunpack.c.l.b16 %v449
    %v1225 = vunpack.c.h.b16 %v449
    %v1226 = vunpack.c.l.b16 %v450
    %v1227 = vunpack.c.h.b16 %v450
    %v1228 = vunpack.c.l.b16 %v451
    %v1229 = vunpack.c.h.b16 %v451
    %v1230 = vunpack.c.l.b16 %v452
    %v1231 = vunpack.c.h.b16 %v452
    %v1232 = vunpack.c.l.b16 %v453
    %v1233 = vunpack.c.h.b16 %v453
    %v1234 = vunpack.c.l.b16 %v454
    %v1235 = vunpack.c.h.b16 %v454
    %v1236 = vunpack.c.l.b16 %v455
    %v1237 = vunpack.c.h.b16 %v455
    %v1238 = vunpack.c.l.b16 %v456
    %v1239 = vunpack.c.h.b16 %v456
    %v1240 = vunpack.c.l.b16 %v457
    %v1241 = vunpack.c.h.b16 %v457
    %v1242 = vunpack.c.l.b16 %v458
    %v1243 = vunpack.c.h.b16 %v458
    %v1244 = vunpack.c.l.b16 %v459
    %v1245 = vunpack.c.h.b16 %v459
    %v1246 = vunpack.c.l.b16 %v460
    %v1247 = vunpack.c.h.b16 %v460
    %v1248 = vunpack.c.l.b16 %v461
    %v1249 = vunpack.c.h.b16 %v461
    %v1250 = vunpack.c.l.b16 %v462
    %v1251 = vunpack.c.h.b16 %v462
    %v1252 = vunpack.c.l.b16 %v463
    %v1253 = vunpack.c.h.b16 %v463
    %v1254 = vpack.c.b16 %v746, %v742
    %v1255 = vpack.c.b16 %v747, %v743
    %v1256 = vpack.c.b16 %v748, %v744
    %v1257 = vpack.c.b16 %v749, %v745
    %v1258 = vpack.c.b16 %v754, %v750
    %v1259 = vpack.c.b16 %v755, %v751
    %v1260 = vpack.c.b16 %v756, %v752
    %v1261 = vpack.c.b16 %v757, %v753
    %v1262 = vpack.c.b16 %v762, %v758
    %v1263 = vpack.c.b16 %v763, %v759
    %v1264 = vpack.c.b16 %v764, %v760
    %v1265 = vpack.c.b16 %v765, %v761
    %v1266 = vpack.c.b16 %v770, %v766
    %v1267 = vpack.c.b16 %v771, %v767
    %v1268 = vpack.c.b16 %v772, %v768
    %v1269 = vpack.c.b16 %v773, %v769
    %v1270 = vpack.c.b16 %v778, %v774
    %v1271 = vpack.c.b16 %v779, %v775
    %v1272 = vpack.c.b16 %v780, %v776
    %v1273 = vpack.c.b16 %v781, %v777
    %v1274 = vpack.c.b16 %v786, %v782
    %v1275 = vpack.c.b16 %v787, %v783
    %v1276 = vpack.c.b16 %v788, %v784
    %v1277 = vpack.c.b16 %v789, %v785
    %v1278 = vpack.c.b16 %v794, %v790
    %v1279 = vpack.c.b16 %v795, %v791
    %v1280 = vpack.c.b16 %v796, %v792
    %v1281 = vpack.c.b16 %v797, %v793
    %v1282 = vpack.c.b16 %v802, %v798
    %v1283 = vpack.c.b16 %v803, %v799
    %v1284 = vpack.c.b16 %v804, %v800
    %v1285 = vpack.c.b16 %v805, %v801
    %v1286 = vpack.c.b16 %v810, %v806
    %v1287 = vpack.c.b16 %v811, %v807
    %v1288 = vpack.c.b16 %v812, %v808
    %v1289 = vpack.c.b16 %v813, %v809
    %v1290 = vpack.c.b16 %v818, %v814
    %v1291 = vpack.c.b16 %v819, %v815
    %v1292 = vpack.c.b16 %v820, %v816
    %v1293 = vpack.c.b16 %v821, %v817
    %v1294 = vpack.c.b16 %v826, %v822
    %v1295 = vpack.c.b16 %v827, %v823
    %v1296 = vpack.c.b16 %v828, %v824
    %v1297 = vpack.c.b16 %v829, %v825
    %v1298 = vpack.c.b16 %v834, %v830
    %v1299 = vpack.c.b16 %v835, %v831
    %v1300 = vpack.c.b16 %v836, %v832
    %v1301 = vpack.c.b16 %v837, %v833
    %v1302 = vpack.c.b16 %v842, %v838
    %v1303 = vpack.c.b16 %v843, %v839
    %v1304 = vpack.c.b16 %v844, %v840
    %v1305 = vpack.c.b16 %v845, %v841
    %v1306 = vpack.c.b16 %v850, %v846
    %v1307 = vpack.c.b16 %v851, %v847
    %v1308 = vpack.c.b16 %v852, %v848
    %v1309 = vpack.c.b16 %v853, %v849
    %v1310 = vpack.c.b16 %v858, %v854
    %v1311 = vpack.c.b16 %v859, %v855
    %v1312 = vpack.c.b16 %v860, %v856
    %v1313 = vpack.c.b16 %v861, %v857
    %v1314 = vpack.c.b16 %v866, %v862
    %v1315 = vpack.c.b16 %v867, %v863
    %v1316 = vpack.c.b16 %v868, %v864
    %v1317 = vpack.c.b16 %v869, %v865
    %v1318 = vpack.c.b16 %v874, %v870
    %v1319 = vpack.c.b16 %v875, %v871
    %v1320 = vpack.c.b16 %v876, %v872
    %v1321 = vpack.c.b16 %v877, %v873
    %v1322 = vpack.c.b16 %v882, %v878
    %v1323 = vpack.c.b16 %v883, %v879
    %v1324 = vpack.c.b16 %v884, %v880
    %v1325 = vpack.c.b16 %v885, %v881
    %v1326 = vpack.c.b16 %v890, %v886
    %v1327 = vpack.c.b16 %v891, %v887
    %v1328 = vpack.c.b16 %v892, %v888
    %v1329 = vpack.c.b16 %v893, %v889
    %v1330 = vpack.c.b16 %v898, %v894
    %v1331 = vpack.c.b16 %v899, %v895
    %v1332 = vpack.c.b16 %v900, %v896
    %v1333 = vpack.c.b16 %v901, %v897
    %v1334 = vpack.c.b16 %v906, %v902
    %v1335 = vpack.c.b16 %v907, %v903
    %v1336 = vpack.c.b16 %v908, %v904
    %v1337 = vpack.c.b16 %v909, %v905
    %v1338 = vpack.c.b16 %v914, %v910
    %v1339 = vpack.c.b16 %v915, %v911
    %v1340 = vpack.c.b16 %v916, %v912
    %v1341 = vpack.c.b16 %v917, %v913
    %v1342 = vpack.c.b16 %v922, %v918
    %v1343 = vpack.c.b16 %v923, %v919
    %v1344 = vpack.c.b16 %v924, %v920
    %v1345 = vpack.c.b16 %v925, %v921
    %v1346 = vpack.c.b16 %v930, %v926
    %v1347 = vpack.c.b16 %v931, %v927
    %v1348 = vpack.c.b16 %v932, %v928
    %v1349 = vpack.c.b16 %v933, %v929
    %v1350 = vpack.c.b16 %v938, %v934
    %v1351 = vpack.c.b16 %v939, %v935
    %v1352 = vpack.c.b16 %v940, %v936
    %v1353 = vpack.c.b16 %v941, %v937
    %v1354 = vpack.c.b16 %v946, %v942
    %v1355 = vpack.c.b16 %v947, %v943
    %v1356 = vpack.c.b16 %v948, %v944
    %v1357 = vpack.c.b16 %v949, %v945
    %v1358 = vpack.c.b16 %v954, %v950
    %v1359 = vpack.c.b16 %v955, %v951
    %v1360 = vpack.c.b16 %v956, %v952
    %v1361 = vpack.c.b16 %v957, %v953
    %v1362 = vpack.c.b16 %v962, %v958
    %v1363 = vpack.c.b16 %v963, %v959
    %v1364 = vpack.c.b16 %v964, %v960
    %v1365 = vpack.c.b16 %v965, %v961
    %v1366 = vpack.c.b16 %v970, %v966
    %v1367 = vpack.c.b16 %v971, %v967
    %v1368 = vpack.c.b16 %v972, %v968
    %v1369 = vpack.c.b16 %v973, %v969
    %v1370 = vpack.c.b16 %v978, %v974
    %v1371 = vpack.c.b16 %v979, %v975
    %v1372 = vpack.c.b16 %v980, %v976
    %v1373 = vpack.c.b16 %v981, %v977
    %v1374 = vpack.c.b16 %v986, %v982
    %v1375 = vpack.c.b16 %v987, %v983
    %v1376 = vpack.c.b16 %v988, %v984
    %v1377 = vpack.c.b16 %v989, %v985
    %v1378 = vpack.c.b16 %v994, %v990
    %v1379 = vpack.c.b16 %v995, %v991
    %v1380 = vpack.c.b16 %v996, %v992
    %v1381 = vpack.c.b16 %v997, %v993
    %v1382 = vpack.c.b16 %v1002, %v998
    %v1383 = vpack.c.b16 %v1003, %v999
    %v1384 = vpack.c.b16 %v1004, %v1000
    %v1385 = vpack.c.b16 %v1005, %v1001
    %v1386 = vpack.c.b16 %v1010, %v1006
    %v1387 = vpack.c.b16 %v1011, %v1007
    %v1388 = vpack.c.b16 %v1012, %v1008
    %v1389 = vpack.c.b16 %v1013, %v1009
    %v1390 = vpack.c.b16 %v1018, %v1014
    %v1391 = vpack.c.b16 %v1019, %v1015
    %v1392 = vpack.c.b16 %v1020, %v1016
    %v1393 = vpack.c.b16 %v1021, %v1017
    %v1394 = vpack.c.b16 %v1026, %v1022
    %v1395 = vpack.c.b16 %v1027, %v1023
    %v1396 = vpack.c.b16 %v1028, %v1024
    %v1397 = vpack.c.b16 %v1029, %v1025
    %v1398 = vpack.c.b16 %v1034, %v1030
    %v1399 = vpack.c.b16 %v1035, %v1031
    %v1400 = vpack.c.b16 %v1036, %v1032
    %v1401 = vpack.c.b16 %v1037, %v1033
    %v1402 = vpack.c.b16 %v1042, %v1038
    %v1403 = vpack.c.b16 %v1043, %v1039
    %v1404 = vpack.c.b16 %v1044, %v1040
    %v1405 = vpack.c.b16 %v1045, %v1041
    %v1406 = vpack.c.b16 %v1050, %v1046
    %v1407 = vpack.c.b16 %v1051, %v1047
    %v1408 = vpack.c.b16 %v1052, %v1048
    %v1409 = vpack.c.b16 %v1053, %v1049
    %v1410 = vpack.c.b16 %v1058, %v1054
    %v1411 = vpack.c.b16 %v1059, %v1055
    %v1412 = vpack.c.b16 %v1060, %v1056
    %v1413 = vpack.c.b16 %v1061, %v1057
    %v1414 = vpack.c.b16 %v1066, %v1062
    %v1415 = vpack.c.b16 %v1067, %v1063
    %v1416 = vpack.c.b16 %v1068, %v1064
    %v1417 = vpack.c.b16 %v1069, %v1065
    %v1418 = vpack.c.b16 %v1074, %v1070
    %v1419 = vpack.c.b16 %v1075, %v1071
    %v1420 = vpack.c.b16 %v1076, %v1072
    %v1421 = vpack.c.b16 %v1077, %v1073
    %v1422 = vpack.c.b16 %v1082, %v1078
    %v1423 = vpack.c.b16 %v1083, %v1079
    %v1424 = vpack.c.b16 %v1084, %v1080
    %v1425 = vpack.c.b16 %v1085, %v1081
    %v1426 = vpack.c.b16 %v1090, %v1086
    %v1427 = vpack.c.b16 %v1091, %v1087
    %v1428 = vpack.c.b16 %v1092, %v1088
    %v1429 = vpack.c.b16 %v1093, %v1089
    %v1430 = vpack.c.b16 %v1098, %v1094
    %v1431 = vpack.c.b16 %v1099, %v1095
    %v1432 = vpack.c.b16 %v1100, %v1096
    %v1433 = vpack.c.b16 %v1101, %v1097
    %v1434 = vpack.c.b16 %v1106, %v1102
    %v1435 = vpack.c.b16 %v1107, %v1103
    %v1436 = vpack.c.b16 %v1108, %v1104
    %v1437 = vpack.c.b16 %v1109, %v1105
    %v1438 = vpack.c.b16 %v1114, %v1110
    %v1439 = vpack.c.b16 %v1115, %v1111
    %v1440 = vpack.c.b16 %v1116, %v1112
    %v1441 = vpack.c.b16 %v1117, %v1113
    %v1442 = vpack.c.b16 %v1122, %v1118
    %v1443 = vpack.c.b16 %v1123, %v1119
    %v1444 = vpack.c.b16 %v1124, %v1120
    %v1445 = vpack.c.b16 %v1125, %v1121
    %v1446 = vpack.c.b16 %v1130, %v1126
    %v1447 = vpack.c.b16 %v1131, %v1127
    %v1448 = vpack.c.b16 %v1132, %v1128
    %v1449 = vpack.c.b16 %v1133, %v1129
    %v1450 = vpack.c.b16 %v1138, %v1134
    %v1451 = vpack.c.b16 %v1139, %v1135
    %v1452 = vpack.c.b16 %v1140, %v1136
    %v1453 = vpack.c.b16 %v1141, %v1137
    %v1454 = vpack.c.b16 %v1146, %v1142
    %v1455 = vpack.c.b16 %v1147, %v1143
    %v1456 = vpack.c.b16 %v1148, %v1144
    %v1457 = vpack.c.b16 %v1149, %v1145
    %v1458 = vpack.c.b16 %v1154, %v1150
    %v1459 = vpack.c.b16 %v1155, %v1151
    %v1460 = vpack.c.b16 %v1156, %v1152
    %v1461 = vpack.c.b16 %v1157, %v1153
    %v1462 = vpack.c.b16 %v1162, %v1158
    %v1463 = vpack.c.b16 %v1163, %v1159
    %v1464 = vpack.c.b16 %v1164, %v1160
    %v1465 = vpack.c.b16 %v1165, %v1161
    %v1466 = vpack.c.b16 %v1170, %v1166
    %v1467 = vpack.c.b16 %v1171, %v1167
    %v1468 = vpack.c.b16 %v1172, %v1168
    %v1469 = vpack.c.b16 %v1173, %v1169
    %v1470 = vpack.c.b16 %v1178, %v1174
    %v1471 = vpack.c.b16 %v1179, %v1175
    %v1472 = vpack.c.b16 %v1180, %v1176
    %v1473 = vpack.c.b16 %v1181, %v1177
    %v1474 = vpack.c.b16 %v1186, %v1182
    %v1475 = vpack.c.b16 %v1187, %v1183
    %v1476 = vpack.c.b16 %v1188, %v1184
    %v1477 = vpack.c.b16 %v1189, %v1185
    %v1478 = vpack.c.b16 %v1194, %v1190
    %v1479 = vpack.c.b16 %v1195, %v1191
    %v1480 = vpack.c.b16 %v1196, %v1192
    %v1481 = vpack.c.b16 %v1197, %v1193
    %v1482 = vpack.c.b16 %v1202, %v1198
    %v1483 = vpack.c.b16 %v1203, %v1199
    %v1484 = vpack.c.b16 %v1204, %v1200
    %v1485 = vpack.c.b16 %v1205, %v1201
    %v1486 = vpack.c.b16 %v1210, %v1206
    %v1487 = vpack.c.b16 %v1211, %v1207
    %v1488 = vpack.c.b16 %v1212, %v1208
    %v1489 = vpack.c.b16 %v1213, %v1209
    %v1490 = vpack.c.b16 %v1218, %v1214
    %v1491 = vpack.c.b16 %v1219, %v1215
    %v1492 = vpack.c.b16 %v1220, %v1216
    %v1493 = vpack.c.b16 %v1221, %v1217
    %v1494 = vpack.c.b16 %v1226, %v1222
    %v1495 = vpack.c.b16 %v1227, %v1223
    %v1496 = vpack.c.b16 %v1228, %v1224
    %v1497 = vpack.c.b16 %v1229, %v1225
    %v1498 = vpack.c.b16 %v1234, %v1230
    %v1499 = vpack.c.b16 %v1235, %v1231
    %v1500 = vpack.c.b16 %v1236, %v1232
    %v1501 = vpack.c.b16 %v1237, %v1233
    %v1502 = vpack.c.b16 %v1242, %v1238
    %v1503 = vpack.c.b16 %v1243, %v1239
    %v1504 = vpack.c.b16 %v1244, %v1240
    %v1505 = vpack.c.b16 %v1245, %v1241
    %v1506 = vpack.c.b16 %v1250, %v1246
    %v1507 = vpack.c.b16 %v1251, %v1247
    %v1508 = vpack.c.b16 %v1252, %v1248
    %v1509 = vpack.c.b16 %v1253, %v1249
    %1766 = vmatprep.subr.bf16.mxu0 %v1283
    %1767 = vmatpush1.bf16.msra.mxu0 %v1282
    %1768 = vmatprep.subr.bf16.mxu0 %v1279
    %1769 = vmatpush1.bf16.msra.mxu0 %v1278
    %1770 = vmatprep.subr.bf16.mxu0 %v1275
    %1771 = vmatpush1.bf16.msra.mxu0 %v1274
    %1772 = vmatprep.subr.bf16.mxu0 %v1271
    %1773 = vmatpush1.bf16.msra.mxu0 %v1270
    %1774 = vmatprep.subr.bf16.mxu0 %v1267
    %1775 = vmatpush1.bf16.msra.mxu0 %v1266
    %1776 = vmatprep.subr.bf16.mxu0 %v1263
    %1777 = vmatpush1.bf16.msra.mxu0 %v1262
    %1778 = vmatprep.subr.bf16.mxu0 %v1259
    %1779 = vmatpush1.bf16.msra.mxu0 %v1258
    %1780 = vmatprep.subr.bf16.mxu0 %v1255
    %1781 = vmatpush1.bf16.msra.mxu0 %v1254
    %1782 = vmatprep.subr.bf16.mxu0 %v1315
    %1783 = vmatpush2.bf16.msra.mxu0 %v1314
    %1784 = vmatprep.subr.bf16.mxu0 %v1311
    %1785 = vmatpush2.bf16.msra.mxu0 %v1310
    %1786 = vmatprep.subr.bf16.mxu0 %v1307
    %1787 = vmatpush2.bf16.msra.mxu0 %v1306
    %1788 = vmatprep.subr.bf16.mxu0 %v1303
    %1789 = vmatpush2.bf16.msra.mxu0 %v1302
    %1790 = vmatprep.subr.bf16.mxu0 %v1299
    %1791 = vmatpush2.bf16.msra.mxu0 %v1298
    %1792 = vmatprep.subr.bf16.mxu0 %v1295
    %1793 = vmatpush2.bf16.msra.mxu0 %v1294
    %1794 = vmatprep.subr.bf16.mxu0 %v1291
    %1795 = vmatpush2.bf16.msra.mxu0 %v1290
    %1796 = vmatprep.subr.bf16.mxu0 %v1287
    %1797 = vmatpush2.bf16.msra.mxu0 %v1286
    %1798 = vmatprep.mubr.bf16.mxu0 %v177
    %1799 = vmatmul.mubr.bf16.gmra.mxu0 %v176
    %v1800 = vpop.f32.mrf.mxu0
    %v1801 = vadd.f32 %v469, %v1800
    %v1802 = vpop.f32.mrf.mxu0
    %v1803 = vadd.f32 %v473, %v1802
    %v1804 = vpop.f32.mrf.mxu0
    %v1805 = vadd.f32 %v469, %v1804
    %v1806 = vpop.f32.mrf.mxu0
    %v1807 = vadd.f32 %v473, %v1806
    %1808 = vmatprep.mubr.bf16.mxu0 %v185
    %1809 = vmatmul.mubr.bf16.gmra.mxu0 %v184
    %v1810 = vpop.f32.mrf.mxu0
    %v1811 = vadd.f32 %v469, %v1810
    %v1812 = vpop.f32.mrf.mxu0
    %v1813 = vadd.f32 %v473, %v1812
    %v1814 = vpop.f32.mrf.mxu0
    %v1815 = vadd.f32 %v469, %v1814
    %v1816 = vpop.f32.mrf.mxu0
    %v1817 = vadd.f32 %v473, %v1816
    %1818 = vmatprep.mubr.bf16.mxu0 %v193
    %1819 = vmatmul.mubr.bf16.gmra.mxu0 %v192
    %v1820 = vpop.f32.mrf.mxu0
    %v1821 = vadd.f32 %v469, %v1820
    %v1822 = vpop.f32.mrf.mxu0
    %v1823 = vadd.f32 %v473, %v1822
    %v1824 = vpop.f32.mrf.mxu0
    %v1825 = vadd.f32 %v469, %v1824
    %v1826 = vpop.f32.mrf.mxu0
    %v1827 = vadd.f32 %v473, %v1826
    %1828 = vmatprep.mubr.bf16.mxu0 %v201
    %1829 = vmatmul.mubr.bf16.gmra.mxu0 %v200
    %v1830 = vpop.f32.mrf.mxu0
    %v1831 = vadd.f32 %v469, %v1830
    %v1832 = vpop.f32.mrf.mxu0
    %v1833 = vadd.f32 %v473, %v1832
    %v1834 = vpop.f32.mrf.mxu0
    %v1835 = vadd.f32 %v469, %v1834
    %v1836 = vpop.f32.mrf.mxu0
    %v1837 = vadd.f32 %v473, %v1836
    %1838 = vdwg.mxu0
    %1839 = vmatprep.subr.bf16.mxu0 %v1347
    %1840 = vmatpush1.bf16.msra.mxu0 %v1346
    %1841 = vmatprep.subr.bf16.mxu0 %v1343
    %1842 = vmatpush1.bf16.msra.mxu0 %v1342
    %1843 = vmatprep.subr.bf16.mxu0 %v1339
    %1844 = vmatpush1.bf16.msra.mxu0 %v1338
    %1845 = vmatprep.subr.bf16.mxu0 %v1335
    %1846 = vmatpush1.bf16.msra.mxu0 %v1334
    %1847 = vmatprep.subr.bf16.mxu0 %v1331
    %1848 = vmatpush1.bf16.msra.mxu0 %v1330
    %1849 = vmatprep.subr.bf16.mxu0 %v1327
    %1850 = vmatpush1.bf16.msra.mxu0 %v1326
    %1851 = vmatprep.subr.bf16.mxu0 %v1323
    %1852 = vmatpush1.bf16.msra.mxu0 %v1322
    %1853 = vmatprep.subr.bf16.mxu0 %v1319
    %1854 = vmatpush1.bf16.msra.mxu0 %v1318
    %1855 = vmatprep.subr.bf16.mxu0 %v1379
    %1856 = vmatpush2.bf16.msra.mxu0 %v1378
    %1857 = vmatprep.subr.bf16.mxu0 %v1375
    %1858 = vmatpush2.bf16.msra.mxu0 %v1374
    %1859 = vmatprep.subr.bf16.mxu0 %v1371
    %1860 = vmatpush2.bf16.msra.mxu0 %v1370
    %1861 = vmatprep.subr.bf16.mxu0 %v1367
    %1862 = vmatpush2.bf16.msra.mxu0 %v1366
    %1863 = vmatprep.subr.bf16.mxu0 %v1363
    %1864 = vmatpush2.bf16.msra.mxu0 %v1362
    %1865 = vmatprep.subr.bf16.mxu0 %v1359
    %1866 = vmatpush2.bf16.msra.mxu0 %v1358
    %1867 = vmatprep.subr.bf16.mxu0 %v1355
    %1868 = vmatpush2.bf16.msra.mxu0 %v1354
    %1869 = vmatprep.subr.bf16.mxu0 %v1351
    %1870 = vmatpush2.bf16.msra.mxu0 %v1350
    %1871 = vmatprep.mubr.bf16.mxu0 %v179
    %1872 = vmatmul.mubr.bf16.gmra.mxu0 %v178
    %v1873 = vpop.f32.mrf.mxu0
    %v1874 = vadd.f32 %v1801, %v1873
    %v1875 = vpop.f32.mrf.mxu0
    %v1876 = vadd.f32 %v1803, %v1875
    %v1877 = vpop.f32.mrf.mxu0
    %v1878 = vadd.f32 %v1805, %v1877
    %v1879 = vpop.f32.mrf.mxu0
    %v1880 = vadd.f32 %v1807, %v1879
    %1881 = vmatprep.mubr.bf16.mxu0 %v187
    %1882 = vmatmul.mubr.bf16.gmra.mxu0 %v186
    %v1883 = vpop.f32.mrf.mxu0
    %v1884 = vadd.f32 %v1811, %v1883
    %v1885 = vpop.f32.mrf.mxu0
    %v1886 = vadd.f32 %v1813, %v1885
    %v1887 = vpop.f32.mrf.mxu0
    %v1888 = vadd.f32 %v1815, %v1887
    %v1889 = vpop.f32.mrf.mxu0
    %v1890 = vadd.f32 %v1817, %v1889
    %1891 = vmatprep.mubr.bf16.mxu0 %v195
    %1892 = vmatmul.mubr.bf16.gmra.mxu0 %v194
    %v1893 = vpop.f32.mrf.mxu0
    %v1894 = vadd.f32 %v1821, %v1893
    %v1895 = vpop.f32.mrf.mxu0
    %v1896 = vadd.f32 %v1823, %v1895
    %v1897 = vpop.f32.mrf.mxu0
    %v1898 = vadd.f32 %v1825, %v1897
    %v1899 = vpop.f32.mrf.mxu0
    %v1900 = vadd.f32 %v1827, %v1899
    %1901 = vmatprep.mubr.bf16.mxu0 %v203
    %1902 = vmatmul.mubr.bf16.gmra.mxu0 %v202
    %v1903 = vpop.f32.mrf.mxu0
    %v1904 = vadd.f32 %v1831, %v1903
    %v1905 = vpop.f32.mrf.mxu0
    %v1906 = vadd.f32 %v1833, %v1905
    %v1907 = vpop.f32.mrf.mxu0
    %v1908 = vadd.f32 %v1835, %v1907
    %v1909 = vpop.f32.mrf.mxu0
    %v1910 = vadd.f32 %v1837, %v1909
    %1911 = vdwg.mxu0
    %1912 = vmatprep.subr.bf16.mxu0 %v1411
    %1913 = vmatpush1.bf16.msra.mxu0 %v1410
    %1914 = vmatprep.subr.bf16.mxu0 %v1407
    %1915 = vmatpush1.bf16.msra.mxu0 %v1406
    %1916 = vmatprep.subr.bf16.mxu0 %v1403
    %1917 = vmatpush1.bf16.msra.mxu0 %v1402
    %1918 = vmatprep.subr.bf16.mxu0 %v1399
    %1919 = vmatpush1.bf16.msra.mxu0 %v1398
    %1920 = vmatprep.subr.bf16.mxu0 %v1395
    %1921 = vmatpush1.bf16.msra.mxu0 %v1394
    %1922 = vmatprep.subr.bf16.mxu0 %v1391
    %1923 = vmatpush1.bf16.msra.mxu0 %v1390
    %1924 = vmatprep.subr.bf16.mxu0 %v1387
    %1925 = vmatpush1.bf16.msra.mxu0 %v1386
    %1926 = vmatprep.subr.bf16.mxu0 %v1383
    %1927 = vmatpush1.bf16.msra.mxu0 %v1382
    %1928 = vmatprep.subr.bf16.mxu0 %v1443
    %1929 = vmatpush2.bf16.msra.mxu0 %v1442
    %1930 = vmatprep.subr.bf16.mxu0 %v1439
    %1931 = vmatpush2.bf16.msra.mxu0 %v1438
    %1932 = vmatprep.subr.bf16.mxu0 %v1435
    %1933 = vmatpush2.bf16.msra.mxu0 %v1434
    %1934 = vmatprep.subr.bf16.mxu0 %v1431
    %1935 = vmatpush2.bf16.msra.mxu0 %v1430
    %1936 = vmatprep.subr.bf16.mxu0 %v1427
    %1937 = vmatpush2.bf16.msra.mxu0 %v1426
    %1938 = vmatprep.subr.bf16.mxu0 %v1423
    %1939 = vmatpush2.bf16.msra.mxu0 %v1422
    %1940 = vmatprep.subr.bf16.mxu0 %v1419
    %1941 = vmatpush2.bf16.msra.mxu0 %v1418
    %1942 = vmatprep.subr.bf16.mxu0 %v1415
    %1943 = vmatpush2.bf16.msra.mxu0 %v1414
    %1944 = vmatprep.mubr.bf16.mxu0 %v181
    %1945 = vmatmul.mubr.bf16.gmra.mxu0 %v180
    %v1946 = vpop.f32.mrf.mxu0
    %v1947 = vadd.f32 %v1874, %v1946
    %v1948 = vpop.f32.mrf.mxu0
    %v1949 = vadd.f32 %v1876, %v1948
    %v1950 = vpop.f32.mrf.mxu0
    %v1951 = vadd.f32 %v1878, %v1950
    %v1952 = vpop.f32.mrf.mxu0
    %v1953 = vadd.f32 %v1880, %v1952
    %1954 = vmatprep.mubr.bf16.mxu0 %v189
    %1955 = vmatmul.mubr.bf16.gmra.mxu0 %v188
    %v1956 = vpop.f32.mrf.mxu0
    %v1957 = vadd.f32 %v1884, %v1956
    %v1958 = vpop.f32.mrf.mxu0
    %v1959 = vadd.f32 %v1886, %v1958
    %v1960 = vpop.f32.mrf.mxu0
    %v1961 = vadd.f32 %v1888, %v1960
    %v1962 = vpop.f32.mrf.mxu0
    %v1963 = vadd.f32 %v1890, %v1962
    %1964 = vmatprep.mubr.bf16.mxu0 %v197
    %1965 = vmatmul.mubr.bf16.gmra.mxu0 %v196
    %v1966 = vpop.f32.mrf.mxu0
    %v1967 = vadd.f32 %v1894, %v1966
    %v1968 = vpop.f32.mrf.mxu0
    %v1969 = vadd.f32 %v1896, %v1968
    %v1970 = vpop.f32.mrf.mxu0
    %v1971 = vadd.f32 %v1898, %v1970
    %v1972 = vpop.f32.mrf.mxu0
    %v1973 = vadd.f32 %v1900, %v1972
    %1974 = vmatprep.mubr.bf16.mxu0 %v205
    %1975 = vmatmul.mubr.bf16.gmra.mxu0 %v204
    %v1976 = vpop.f32.mrf.mxu0
    %v1977 = vadd.f32 %v1904, %v1976
    %v1978 = vpop.f32.mrf.mxu0
    %v1979 = vadd.f32 %v1906, %v1978
    %v1980 = vpop.f32.mrf.mxu0
    %v1981 = vadd.f32 %v1908, %v1980
    %v1982 = vpop.f32.mrf.mxu0
    %v1983 = vadd.f32 %v1910, %v1982
    %1984 = vdwg.mxu0
    %1985 = vmatprep.subr.bf16.mxu0 %v1475
    %1986 = vmatpush1.bf16.msra.mxu0 %v1474
    %1987 = vmatprep.subr.bf16.mxu0 %v1471
    %1988 = vmatpush1.bf16.msra.mxu0 %v1470
    %1989 = vmatprep.subr.bf16.mxu0 %v1467
    %1990 = vmatpush1.bf16.msra.mxu0 %v1466
    %1991 = vmatprep.subr.bf16.mxu0 %v1463
    %1992 = vmatpush1.bf16.msra.mxu0 %v1462
    %1993 = vmatprep.subr.bf16.mxu0 %v1459
    %1994 = vmatpush1.bf16.msra.mxu0 %v1458
    %1995 = vmatprep.subr.bf16.mxu0 %v1455
    %1996 = vmatpush1.bf16.msra.mxu0 %v1454
    %1997 = vmatprep.subr.bf16.mxu0 %v1451
    %1998 = vmatpush1.bf16.msra.mxu0 %v1450
    %1999 = vmatprep.subr.bf16.mxu0 %v1447
    %2000 = vmatpush1.bf16.msra.mxu0 %v1446
    %2001 = vmatprep.subr.bf16.mxu0 %v1507
    %2002 = vmatpush2.bf16.msra.mxu0 %v1506
    %2003 = vmatprep.subr.bf16.mxu0 %v1503
    %2004 = vmatpush2.bf16.msra.mxu0 %v1502
    %2005 = vmatprep.subr.bf16.mxu0 %v1499
    %2006 = vmatpush2.bf16.msra.mxu0 %v1498
    %2007 = vmatprep.subr.bf16.mxu0 %v1495
    %2008 = vmatpush2.bf16.msra.mxu0 %v1494
    %2009 = vmatprep.subr.bf16.mxu0 %v1491
    %2010 = vmatpush2.bf16.msra.mxu0 %v1490
    %2011 = vmatprep.subr.bf16.mxu0 %v1487
    %2012 = vmatpush2.bf16.msra.mxu0 %v1486
    %2013 = vmatprep.subr.bf16.mxu0 %v1483
    %2014 = vmatpush2.bf16.msra.mxu0 %v1482
    %2015 = vmatprep.subr.bf16.mxu0 %v1479
    %2016 = vmatpush2.bf16.msra.mxu0 %v1478
    %2017 = vmatprep.mubr.bf16.mxu0 %v183
    %2018 = vmatmul.mubr.bf16.gmra.mxu0 %v182
    %v2019 = vpop.f32.mrf.mxu0
    %v2020 = vadd.f32 %v1947, %v2019
    %v2021 = vpop.f32.mrf.mxu0
    %v2022 = vadd.f32 %v1949, %v2021
    %v2023 = vpop.f32.mrf.mxu0
    %v2024 = vadd.f32 %v1951, %v2023
    %v2025 = vpop.f32.mrf.mxu0
    %v2026 = vadd.f32 %v1953, %v2025
    %2027 = vmatprep.mubr.bf16.mxu0 %v191
    %2028 = vmatmul.mubr.bf16.gmra.mxu0 %v190
    %v2029 = vpop.f32.mrf.mxu0
    %v2030 = vadd.f32 %v1957, %v2029
    %v2031 = vpop.f32.mrf.mxu0
    %v2032 = vadd.f32 %v1959, %v2031
    %v2033 = vpop.f32.mrf.mxu0
    %v2034 = vadd.f32 %v1961, %v2033
    %v2035 = vpop.f32.mrf.mxu0
    %v2036 = vadd.f32 %v1963, %v2035
    %2037 = vmatprep.mubr.bf16.mxu0 %v199
    %2038 = vmatmul.mubr.bf16.gmra.mxu0 %v198
    %v2039 = vpop.f32.mrf.mxu0
    %v2040 = vadd.f32 %v1967, %v2039
    %v2041 = vpop.f32.mrf.mxu0
    %v2042 = vadd.f32 %v1969, %v2041
    %v2043 = vpop.f32.mrf.mxu0
    %v2044 = vadd.f32 %v1971, %v2043
    %v2045 = vpop.f32.mrf.mxu0
    %v2046 = vadd.f32 %v1973, %v2045
    %2047 = vmatprep.mubr.bf16.mxu0 %v207
    %2048 = vmatmul.mubr.bf16.gmra.mxu0 %v206
    %v2049 = vpop.f32.mrf.mxu0
    %v2050 = vadd.f32 %v1977, %v2049
    %v2051 = vpop.f32.mrf.mxu0
    %v2052 = vadd.f32 %v1979, %v2051
    %v2053 = vpop.f32.mrf.mxu0
    %v2054 = vadd.f32 %v1981, %v2053
    %v2055 = vpop.f32.mrf.mxu0
    %v2056 = vadd.f32 %v1983, %v2055
    %2057 = vdwg.mxu0
    %2058 = vmatprep.subr.bf16.mxu0 %v1285
    %2059 = vmatpush1.bf16.msra.mxu0 %v1284
    %2060 = vmatprep.subr.bf16.mxu0 %v1281
    %2061 = vmatpush1.bf16.msra.mxu0 %v1280
    %2062 = vmatprep.subr.bf16.mxu0 %v1277
    %2063 = vmatpush1.bf16.msra.mxu0 %v1276
    %2064 = vmatprep.subr.bf16.mxu0 %v1273
    %2065 = vmatpush1.bf16.msra.mxu0 %v1272
    %2066 = vmatprep.subr.bf16.mxu0 %v1269
    %2067 = vmatpush1.bf16.msra.mxu0 %v1268
    %2068 = vmatprep.subr.bf16.mxu0 %v1265
    %2069 = vmatpush1.bf16.msra.mxu0 %v1264
    %2070 = vmatprep.subr.bf16.mxu0 %v1261
    %2071 = vmatpush1.bf16.msra.mxu0 %v1260
    %2072 = vmatprep.subr.bf16.mxu0 %v1257
    %2073 = vmatpush1.bf16.msra.mxu0 %v1256
    %2074 = vmatprep.subr.bf16.mxu0 %v1317
    %2075 = vmatpush2.bf16.msra.mxu0 %v1316
    %2076 = vmatprep.subr.bf16.mxu0 %v1313
    %2077 = vmatpush2.bf16.msra.mxu0 %v1312
    %2078 = vmatprep.subr.bf16.mxu0 %v1309
    %2079 = vmatpush2.bf16.msra.mxu0 %v1308
    %2080 = vmatprep.subr.bf16.mxu0 %v1305
    %2081 = vmatpush2.bf16.msra.mxu0 %v1304
    %2082 = vmatprep.subr.bf16.mxu0 %v1301
    %2083 = vmatpush2.bf16.msra.mxu0 %v1300
    %2084 = vmatprep.subr.bf16.mxu0 %v1297
    %2085 = vmatpush2.bf16.msra.mxu0 %v1296
    %2086 = vmatprep.subr.bf16.mxu0 %v1293
    %2087 = vmatpush2.bf16.msra.mxu0 %v1292
    %2088 = vmatprep.subr.bf16.mxu0 %v1289
    %2089 = vmatpush2.bf16.msra.mxu0 %v1288
    %2090 = vmatprep.mubr.bf16.mxu0 %v177
    %2091 = vmatmul.mubr.bf16.gmra.mxu0 %v176
    %v2092 = vpop.f32.mrf.mxu0
    %v2093 = vadd.f32 %v477, %v2092
    %v2094 = vpop.f32.mrf.mxu0
    %v2095 = vadd.f32 %v481, %v2094
    %v2096 = vpop.f32.mrf.mxu0
    %v2097 = vadd.f32 %v477, %v2096
    %v2098 = vpop.f32.mrf.mxu0
    %v2099 = vadd.f32 %v481, %v2098
    %2100 = vmatprep.mubr.bf16.mxu0 %v185
    %2101 = vmatmul.mubr.bf16.gmra.mxu0 %v184
    %v2102 = vpop.f32.mrf.mxu0
    %v2103 = vadd.f32 %v477, %v2102
    %v2104 = vpop.f32.mrf.mxu0
    %v2105 = vadd.f32 %v481, %v2104
    %v2106 = vpop.f32.mrf.mxu0
    %v2107 = vadd.f32 %v477, %v2106
    %v2108 = vpop.f32.mrf.mxu0
    %v2109 = vadd.f32 %v481, %v2108
    %2110 = vmatprep.mubr.bf16.mxu0 %v193
    %2111 = vmatmul.mubr.bf16.gmra.mxu0 %v192
    %v2112 = vpop.f32.mrf.mxu0
    %v2113 = vadd.f32 %v477, %v2112
    %v2114 = vpop.f32.mrf.mxu0
    %v2115 = vadd.f32 %v481, %v2114
    %v2116 = vpop.f32.mrf.mxu0
    %v2117 = vadd.f32 %v477, %v2116
    %v2118 = vpop.f32.mrf.mxu0
    %v2119 = vadd.f32 %v481, %v2118
    %2120 = vmatprep.mubr.bf16.mxu0 %v201
    %2121 = vmatmul.mubr.bf16.gmra.mxu0 %v200
    %v2122 = vpop.f32.mrf.mxu0
    %v2123 = vadd.f32 %v477, %v2122
    %v2124 = vpop.f32.mrf.mxu0
    %v2125 = vadd.f32 %v481, %v2124
    %v2126 = vpop.f32.mrf.mxu0
    %v2127 = vadd.f32 %v477, %v2126
    %v2128 = vpop.f32.mrf.mxu0
    %v2129 = vadd.f32 %v481, %v2128
    %2130 = vdwg.mxu0
    %2131 = vmatprep.subr.bf16.mxu0 %v1349
    %2132 = vmatpush1.bf16.msra.mxu0 %v1348
    %2133 = vmatprep.subr.bf16.mxu0 %v1345
    %2134 = vmatpush1.bf16.msra.mxu0 %v1344
    %2135 = vmatprep.subr.bf16.mxu0 %v1341
    %2136 = vmatpush1.bf16.msra.mxu0 %v1340
    %2137 = vmatprep.subr.bf16.mxu0 %v1337
    %2138 = vmatpush1.bf16.msra.mxu0 %v1336
    %2139 = vmatprep.subr.bf16.mxu0 %v1333
    %2140 = vmatpush1.bf16.msra.mxu0 %v1332
    %2141 = vmatprep.subr.bf16.mxu0 %v1329
    %2142 = vmatpush1.bf16.msra.mxu0 %v1328
    %2143 = vmatprep.subr.bf16.mxu0 %v1325
    %2144 = vmatpush1.bf16.msra.mxu0 %v1324
    %2145 = vmatprep.subr.bf16.mxu0 %v1321
    %2146 = vmatpush1.bf16.msra.mxu0 %v1320
    %2147 = vmatprep.subr.bf16.mxu0 %v1381
    %2148 = vmatpush2.bf16.msra.mxu0 %v1380
    %2149 = vmatprep.subr.bf16.mxu0 %v1377
    %2150 = vmatpush2.bf16.msra.mxu0 %v1376
    %2151 = vmatprep.subr.bf16.mxu0 %v1373
    %2152 = vmatpush2.bf16.msra.mxu0 %v1372
    %2153 = vmatprep.subr.bf16.mxu0 %v1369
    %2154 = vmatpush2.bf16.msra.mxu0 %v1368
    %2155 = vmatprep.subr.bf16.mxu0 %v1365
    %2156 = vmatpush2.bf16.msra.mxu0 %v1364
    %2157 = vmatprep.subr.bf16.mxu0 %v1361
    %2158 = vmatpush2.bf16.msra.mxu0 %v1360
    %2159 = vmatprep.subr.bf16.mxu0 %v1357
    %2160 = vmatpush2.bf16.msra.mxu0 %v1356
    %2161 = vmatprep.subr.bf16.mxu0 %v1353
    %2162 = vmatpush2.bf16.msra.mxu0 %v1352
    %2163 = vmatprep.mubr.bf16.mxu0 %v179
    %2164 = vmatmul.mubr.bf16.gmra.mxu0 %v178
    %v2165 = vpop.f32.mrf.mxu0
    %v2166 = vadd.f32 %v2093, %v2165
    %v2167 = vpop.f32.mrf.mxu0
    %v2168 = vadd.f32 %v2095, %v2167
    %v2169 = vpop.f32.mrf.mxu0
    %v2170 = vadd.f32 %v2097, %v2169
    %v2171 = vpop.f32.mrf.mxu0
    %v2172 = vadd.f32 %v2099, %v2171
    %2173 = vmatprep.mubr.bf16.mxu0 %v187
    %2174 = vmatmul.mubr.bf16.gmra.mxu0 %v186
    %v2175 = vpop.f32.mrf.mxu0
    %v2176 = vadd.f32 %v2103, %v2175
    %v2177 = vpop.f32.mrf.mxu0
    %v2178 = vadd.f32 %v2105, %v2177
    %v2179 = vpop.f32.mrf.mxu0
    %v2180 = vadd.f32 %v2107, %v2179
    %v2181 = vpop.f32.mrf.mxu0
    %v2182 = vadd.f32 %v2109, %v2181
    %2183 = vmatprep.mubr.bf16.mxu0 %v195
    %2184 = vmatmul.mubr.bf16.gmra.mxu0 %v194
    %v2185 = vpop.f32.mrf.mxu0
    %v2186 = vadd.f32 %v2113, %v2185
    %v2187 = vpop.f32.mrf.mxu0
    %v2188 = vadd.f32 %v2115, %v2187
    %v2189 = vpop.f32.mrf.mxu0
    %v2190 = vadd.f32 %v2117, %v2189
    %v2191 = vpop.f32.mrf.mxu0
    %v2192 = vadd.f32 %v2119, %v2191
    %2193 = vmatprep.mubr.bf16.mxu0 %v203
    %2194 = vmatmul.mubr.bf16.gmra.mxu0 %v202
    %v2195 = vpop.f32.mrf.mxu0
    %v2196 = vadd.f32 %v2123, %v2195
    %v2197 = vpop.f32.mrf.mxu0
    %v2198 = vadd.f32 %v2125, %v2197
    %v2199 = vpop.f32.mrf.mxu0
    %v2200 = vadd.f32 %v2127, %v2199
    %v2201 = vpop.f32.mrf.mxu0
    %v2202 = vadd.f32 %v2129, %v2201
    %2203 = vdwg.mxu0
    %2204 = vmatprep.subr.bf16.mxu0 %v1413
    %2205 = vmatpush1.bf16.msra.mxu0 %v1412
    %2206 = vmatprep.subr.bf16.mxu0 %v1409
    %2207 = vmatpush1.bf16.msra.mxu0 %v1408
    %2208 = vmatprep.subr.bf16.mxu0 %v1405
    %2209 = vmatpush1.bf16.msra.mxu0 %v1404
    %2210 = vmatprep.subr.bf16.mxu0 %v1401
    %2211 = vmatpush1.bf16.msra.mxu0 %v1400
    %2212 = vmatprep.subr.bf16.mxu0 %v1397
    %2213 = vmatpush1.bf16.msra.mxu0 %v1396
    %2214 = vmatprep.subr.bf16.mxu0 %v1393
    %2215 = vmatpush1.bf16.msra.mxu0 %v1392
    %2216 = vmatprep.subr.bf16.mxu0 %v1389
    %2217 = vmatpush1.bf16.msra.mxu0 %v1388
    %2218 = vmatprep.subr.bf16.mxu0 %v1385
    %2219 = vmatpush1.bf16.msra.mxu0 %v1384
    %2220 = vmatprep.subr.bf16.mxu0 %v1445
    %2221 = vmatpush2.bf16.msra.mxu0 %v1444
    %2222 = vmatprep.subr.bf16.mxu0 %v1441
    %2223 = vmatpush2.bf16.msra.mxu0 %v1440
    %2224 = vmatprep.subr.bf16.mxu0 %v1437
    %2225 = vmatpush2.bf16.msra.mxu0 %v1436
    %2226 = vmatprep.subr.bf16.mxu0 %v1433
    %2227 = vmatpush2.bf16.msra.mxu0 %v1432
    %2228 = vmatprep.subr.bf16.mxu0 %v1429
    %2229 = vmatpush2.bf16.msra.mxu0 %v1428
    %2230 = vmatprep.subr.bf16.mxu0 %v1425
    %2231 = vmatpush2.bf16.msra.mxu0 %v1424
    %2232 = vmatprep.subr.bf16.mxu0 %v1421
    %2233 = vmatpush2.bf16.msra.mxu0 %v1420
    %2234 = vmatprep.subr.bf16.mxu0 %v1417
    %2235 = vmatpush2.bf16.msra.mxu0 %v1416
    %2236 = vmatprep.mubr.bf16.mxu0 %v181
    %2237 = vmatmul.mubr.bf16.gmra.mxu0 %v180
    %v2238 = vpop.f32.mrf.mxu0
    %v2239 = vadd.f32 %v2166, %v2238
    %v2240 = vpop.f32.mrf.mxu0
    %v2241 = vadd.f32 %v2168, %v2240
    %v2242 = vpop.f32.mrf.mxu0
    %v2243 = vadd.f32 %v2170, %v2242
    %v2244 = vpop.f32.mrf.mxu0
    %v2245 = vadd.f32 %v2172, %v2244
    %2246 = vmatprep.mubr.bf16.mxu0 %v189
    %2247 = vmatmul.mubr.bf16.gmra.mxu0 %v188
    %v2248 = vpop.f32.mrf.mxu0
    %v2249 = vadd.f32 %v2176, %v2248
    %v2250 = vpop.f32.mrf.mxu0
    %v2251 = vadd.f32 %v2178, %v2250
    %v2252 = vpop.f32.mrf.mxu0
    %v2253 = vadd.f32 %v2180, %v2252
    %v2254 = vpop.f32.mrf.mxu0
    %v2255 = vadd.f32 %v2182, %v2254
    %2256 = vmatprep.mubr.bf16.mxu0 %v197
    %2257 = vmatmul.mubr.bf16.gmra.mxu0 %v196
    %v2258 = vpop.f32.mrf.mxu0
    %v2259 = vadd.f32 %v2186, %v2258
    %v2260 = vpop.f32.mrf.mxu0
    %v2261 = vadd.f32 %v2188, %v2260
    %v2262 = vpop.f32.mrf.mxu0
    %v2263 = vadd.f32 %v2190, %v2262
    %v2264 = vpop.f32.mrf.mxu0
    %v2265 = vadd.f32 %v2192, %v2264
    %2266 = vmatprep.mubr.bf16.mxu0 %v205
    %2267 = vmatmul.mubr.bf16.gmra.mxu0 %v204
    %v2268 = vpop.f32.mrf.mxu0
    %v2269 = vadd.f32 %v2196, %v2268
    %v2270 = vpop.f32.mrf.mxu0
    %v2271 = vadd.f32 %v2198, %v2270
    %v2272 = vpop.f32.mrf.mxu0
    %v2273 = vadd.f32 %v2200, %v2272
    %v2274 = vpop.f32.mrf.mxu0
    %v2275 = vadd.f32 %v2202, %v2274
    %2276 = vdwg.mxu0
    %2277 = vmatprep.subr.bf16.mxu0 %v1477
    %2278 = vmatpush1.bf16.msra.mxu0 %v1476
    %2279 = vmatprep.subr.bf16.mxu0 %v1473
    %2280 = vmatpush1.bf16.msra.mxu0 %v1472
    %2281 = vmatprep.subr.bf16.mxu0 %v1469
    %2282 = vmatpush1.bf16.msra.mxu0 %v1468
    %2283 = vmatprep.subr.bf16.mxu0 %v1465
    %2284 = vmatpush1.bf16.msra.mxu0 %v1464
    %2285 = vmatprep.subr.bf16.mxu0 %v1461
    %2286 = vmatpush1.bf16.msra.mxu0 %v1460
    %2287 = vmatprep.subr.bf16.mxu0 %v1457
    %2288 = vmatpush1.bf16.msra.mxu0 %v1456
    %2289 = vmatprep.subr.bf16.mxu0 %v1453
    %2290 = vmatpush1.bf16.msra.mxu0 %v1452
    %2291 = vmatprep.subr.bf16.mxu0 %v1449
    %2292 = vmatpush1.bf16.msra.mxu0 %v1448
    %2293 = vmatprep.subr.bf16.mxu0 %v1509
    %2294 = vmatpush2.bf16.msra.mxu0 %v1508
    %2295 = vmatprep.subr.bf16.mxu0 %v1505
    %2296 = vmatpush2.bf16.msra.mxu0 %v1504
    %2297 = vmatprep.subr.bf16.mxu0 %v1501
    %2298 = vmatpush2.bf16.msra.mxu0 %v1500
    %2299 = vmatprep.subr.bf16.mxu0 %v1497
    %2300 = vmatpush2.bf16.msra.mxu0 %v1496
    %2301 = vmatprep.subr.bf16.mxu0 %v1493
    %2302 = vmatpush2.bf16.msra.mxu0 %v1492
    %2303 = vmatprep.subr.bf16.mxu0 %v1489
    %2304 = vmatpush2.bf16.msra.mxu0 %v1488
    %2305 = vmatprep.subr.bf16.mxu0 %v1485
    %2306 = vmatpush2.bf16.msra.mxu0 %v1484
    %2307 = vmatprep.subr.bf16.mxu0 %v1481
    %2308 = vmatpush2.bf16.msra.mxu0 %v1480
    %2309 = vmatprep.mubr.bf16.mxu0 %v183
    %2310 = vmatmul.mubr.bf16.gmra.mxu0 %v182
    %v2311 = vpop.f32.mrf.mxu0
    %v2312 = vadd.f32 %v2239, %v2311
    %v2313 = vpop.f32.mrf.mxu0
    %v2314 = vadd.f32 %v2241, %v2313
    %v2315 = vpop.f32.mrf.mxu0
    %v2316 = vadd.f32 %v2243, %v2315
    %v2317 = vpop.f32.mrf.mxu0
    %v2318 = vadd.f32 %v2245, %v2317
    %2319 = vmatprep.mubr.bf16.mxu0 %v191
    %2320 = vmatmul.mubr.bf16.gmra.mxu0 %v190
    %v2321 = vpop.f32.mrf.mxu0
    %v2322 = vadd.f32 %v2249, %v2321
    %v2323 = vpop.f32.mrf.mxu0
    %v2324 = vadd.f32 %v2251, %v2323
    %v2325 = vpop.f32.mrf.mxu0
    %v2326 = vadd.f32 %v2253, %v2325
    %v2327 = vpop.f32.mrf.mxu0
    %v2328 = vadd.f32 %v2255, %v2327
    %2329 = vmatprep.mubr.bf16.mxu0 %v199
    %2330 = vmatmul.mubr.bf16.gmra.mxu0 %v198
    %v2331 = vpop.f32.mrf.mxu0
    %v2332 = vadd.f32 %v2259, %v2331
    %v2333 = vpop.f32.mrf.mxu0
    %v2334 = vadd.f32 %v2261, %v2333
    %v2335 = vpop.f32.mrf.mxu0
    %v2336 = vadd.f32 %v2263, %v2335
    %v2337 = vpop.f32.mrf.mxu0
    %v2338 = vadd.f32 %v2265, %v2337
    %2339 = vmatprep.mubr.bf16.mxu0 %v207
    %2340 = vmatmul.mubr.bf16.gmra.mxu0 %v206
    %v2341 = vpop.f32.mrf.mxu0
    %v2342 = vadd.f32 %v2269, %v2341
    %v2343 = vpop.f32.mrf.mxu0
    %v2344 = vadd.f32 %v2271, %v2343
    %v2345 = vpop.f32.mrf.mxu0
    %v2346 = vadd.f32 %v2273, %v2345
    %v2347 = vpop.f32.mrf.mxu0
    %v2348 = vadd.f32 %v2275, %v2347
    %2349 = vdwg.mxu0
    %v2350 = vmax.f32 %v2020, 0.0
    %v2351 = vmax.f32 %v2022, 0.0
    %v2352 = vmax.f32 %v2312, 0.0
    %v2353 = vmax.f32 %v2314, 0.0
    %v2354 = vmax.f32 %v2024, 0.0
    %v2355 = vmax.f32 %v2026, 0.0
    %v2356 = vmax.f32 %v2316, 0.0
    %v2357 = vmax.f32 %v2318, 0.0
    %v2358 = vmax.f32 %v2030, 0.0
    %v2359 = vmax.f32 %v2032, 0.0
    %v2360 = vmax.f32 %v2322, 0.0
    %v2361 = vmax.f32 %v2324, 0.0
    %v2362 = vmax.f32 %v2034, 0.0
    %v2363 = vmax.f32 %v2036, 0.0
    %v2364 = vmax.f32 %v2326, 0.0
    %v2365 = vmax.f32 %v2328, 0.0
    %v2366 = vmax.f32 %v2040, 0.0
    %v2367 = vmax.f32 %v2042, 0.0
    %v2368 = vmax.f32 %v2332, 0.0
    %v2369 = vmax.f32 %v2334, 0.0
    %v2370 = vmax.f32 %v2044, 0.0
    %v2371 = vmax.f32 %v2046, 0.0
    %v2372 = vmax.f32 %v2336, 0.0
    %v2373 = vmax.f32 %v2338, 0.0
    %v2374 = vmax.f32 %v2050, 0.0
    %v2375 = vmax.f32 %v2052, 0.0
    %v2376 = vmax.f32 %v2342, 0.0
    %v2377 = vmax.f32 %v2344, 0.0
    %v2378 = vmax.f32 %v2054, 0.0
    %v2379 = vmax.f32 %v2056, 0.0
    %v2380 = vmax.f32 %v2346, 0.0
    %v2381 = vmax.f32 %v2348, 0.0
    %s2382 = sadd.s32 0, 0
    %s2383 = smul.u32 %s2382, 64
    %v2384 = vlaneseq
    %v2385 = vshrl.u32 %v2384, 7
    %v2386 = vadd.s32 %v2385, 8
    %v2387 = vadd.s32 %v2385, 16
    %v2388 = vadd.s32 %v2385, 24
    %v2389 = vadd.s32 %v2385, 32
    %v2390 = vadd.s32 %v2385, 40
    %v2391 = vadd.s32 %v2385, 48
    %v2392 = vadd.s32 %v2385, 56
    %v2393 = vstv %s2383
    %v2394 = vadd.s32 %v2393, %v2385
    %v2395 = vadd.s32 %v2393, %v2386
    %v2396 = vadd.s32 %v2393, %v2387
    %v2397 = vadd.s32 %v2393, %v2388
    %v2398 = vadd.s32 %v2393, %v2389
    %v2399 = vadd.s32 %v2393, %v2390
    %v2400 = vadd.s32 %v2393, %v2391
    %v2401 = vadd.s32 %v2393, %v2392
    %vm2402 = vcmp.lt.s32.totalorder %v2394, 64
    %vm2403 = vcmp.lt.s32.totalorder %v2395, 64
    %vm2404 = vcmp.lt.s32.totalorder %v2396, 64
    %vm2405 = vcmp.lt.s32.totalorder %v2397, 64
    %vm2406 = vcmp.lt.s32.totalorder %v2398, 64
    %vm2407 = vcmp.lt.s32.totalorder %v2399, 64
    %vm2408 = vcmp.lt.s32.totalorder %v2400, 64
    %vm2409 = vcmp.lt.s32.totalorder %v2401, 64
    %v2410 = vsel %vm2402, 1, 0
    %v2411 = vsel %vm2403, 1, 0
    %v2412 = vsel %vm2404, 1, 0
    %v2413 = vsel %vm2405, 1, 0
    %v2414 = vsel %vm2406, 1, 0
    %v2415 = vsel %vm2407, 1, 0
    %v2416 = vsel %vm2408, 1, 0
    %v2417 = vsel %vm2409, 1, 0
    %vm2418 = vcmp.eq.s32.totalorder %v2410, 1
    %vm2419 = vcmp.eq.s32.totalorder %v2411, 1
    %vm2420 = vcmp.eq.s32.totalorder %v2412, 1
    %vm2421 = vcmp.eq.s32.totalorder %v2413, 1
    %vm2422 = vcmp.eq.s32.totalorder %v2414, 1
    %vm2423 = vcmp.eq.s32.totalorder %v2415, 1
    %vm2424 = vcmp.eq.s32.totalorder %v2416, 1
    %vm2425 = vcmp.eq.s32.totalorder %v2417, 1
    %v2426 = vsel %vm2418, %v2350, 0.0
    %v2427 = vsel %vm2418, %v2351, 0.0
    %v2428 = vsel %vm2418, %v2352, 0.0
    %v2429 = vsel %vm2418, %v2353, 0.0
    %v2430 = vsel %vm2419, %v2354, 0.0
    %v2431 = vsel %vm2419, %v2355, 0.0
    %v2432 = vsel %vm2419, %v2356, 0.0
    %v2433 = vsel %vm2419, %v2357, 0.0
    %v2434 = vsel %vm2420, %v2358, 0.0
    %v2435 = vsel %vm2420, %v2359, 0.0
    %v2436 = vsel %vm2420, %v2360, 0.0
    %v2437 = vsel %vm2420, %v2361, 0.0
    %v2438 = vsel %vm2421, %v2362, 0.0
    %v2439 = vsel %vm2421, %v2363, 0.0
    %v2440 = vsel %vm2421, %v2364, 0.0
    %v2441 = vsel %vm2421, %v2365, 0.0
    %v2442 = vsel %vm2422, %v2366, 0.0
    %v2443 = vsel %vm2422, %v2367, 0.0
    %v2444 = vsel %vm2422, %v2368, 0.0
    %v2445 = vsel %vm2422, %v2369, 0.0
    %v2446 = vsel %vm2423, %v2370, 0.0
    %v2447 = vsel %vm2423, %v2371, 0.0
    %v2448 = vsel %vm2423, %v2372, 0.0
    %v2449 = vsel %vm2423, %v2373, 0.0
    %v2450 = vsel %vm2424, %v2374, 0.0
    %v2451 = vsel %vm2424, %v2375, 0.0
    %v2452 = vsel %vm2424, %v2376, 0.0
    %v2453 = vsel %vm2424, %v2377, 0.0
    %v2454 = vsel %vm2425, %v2378, 0.0
    %v2455 = vsel %vm2425, %v2379, 0.0
    %v2456 = vsel %vm2425, %v2380, 0.0
    %v2457 = vsel %vm2425, %v2381, 0.0
    %v2458 = vpack.c.bf16 %v2430, %v2426
    %v2459 = vpack.c.bf16 %v2431, %v2427
    %v2460 = vpack.c.bf16 %v2432, %v2428
    %v2461 = vpack.c.bf16 %v2433, %v2429
    %v2462 = vpack.c.bf16 %v2438, %v2434
    %v2463 = vpack.c.bf16 %v2439, %v2435
    %v2464 = vpack.c.bf16 %v2440, %v2436
    %v2465 = vpack.c.bf16 %v2441, %v2437
    %v2466 = vpack.c.bf16 %v2446, %v2442
    %v2467 = vpack.c.bf16 %v2447, %v2443
    %v2468 = vpack.c.bf16 %v2448, %v2444
    %v2469 = vpack.c.bf16 %v2449, %v2445
    %v2470 = vpack.c.bf16 %v2454, %v2450
    %v2471 = vpack.c.bf16 %v2455, %v2451
    %v2472 = vpack.c.bf16 %v2456, %v2452
    %v2473 = vpack.c.bf16 %v2457, %v2453
    %v2474 = vld [vmem:[#allocation11] sm:$0xff]
    %v2475 = vld [vmem:[#allocation11 + $0x8] sm:$0xff]
    %v2476 = vld [vmem:[#allocation11 + $0x10] sm:$0xff]
    %v2477 = vld [vmem:[#allocation11 + $0x18] sm:$0xff]
    %v2478 = vld [vmem:[#allocation11 + $0x20] sm:$0xff]
    %v2479 = vld [vmem:[#allocation11 + $0x28] sm:$0xff]
    %v2480 = vld [vmem:[#allocation11 + $0x30] sm:$0xff]
    %v2481 = vld [vmem:[#allocation11 + $0x38] sm:$0xff]
    %v2482 = vld [vmem:[#allocation11 + $0x40] sm:$0xff]
    %v2483 = vld [vmem:[#allocation11 + $0x48] sm:$0xff]
    %v2484 = vld [vmem:[#allocation11 + $0x50] sm:$0xff]
    %v2485 = vld [vmem:[#allocation11 + $0x58] sm:$0xff]
    %v2486 = vld [vmem:[#allocation11 + $0x60] sm:$0xff]
    %v2487 = vld [vmem:[#allocation11 + $0x68] sm:$0xff]
    %v2488 = vld [vmem:[#allocation11 + $0x70] sm:$0xff]
    %v2489 = vld [vmem:[#allocation11 + $0x78] sm:$0xff]
    %v2490 = vld [vmem:[#allocation11 + $0x80] sm:$0xff]
    %v2491 = vld [vmem:[#allocation11 + $0x88] sm:$0xff]
    %v2492 = vld [vmem:[#allocation11 + $0x90] sm:$0xff]
    %v2493 = vld [vmem:[#allocation11 + $0x98] sm:$0xff]
    %v2494 = vld [vmem:[#allocation11 + $0xa0] sm:$0xff]
    %v2495 = vld [vmem:[#allocation11 + $0xa8] sm:$0xff]
    %v2496 = vld [vmem:[#allocation11 + $0xb0] sm:$0xff]
    %v2497 = vld [vmem:[#allocation11 + $0xb8] sm:$0xff]
    %v2498 = vld [vmem:[#allocation11 + $0xc0] sm:$0xff]
    %v2499 = vld [vmem:[#allocation11 + $0xc8] sm:$0xff]
    %v2500 = vld [vmem:[#allocation11 + $0xd0] sm:$0xff]
    %v2501 = vld [vmem:[#allocation11 + $0xd8] sm:$0xff]
    %v2502 = vld [vmem:[#allocation11 + $0xe0] sm:$0xff]
    %v2503 = vld [vmem:[#allocation11 + $0xe8] sm:$0xff]
    %v2504 = vld [vmem:[#allocation11 + $0xf0] sm:$0xff]
    %v2505 = vld [vmem:[#allocation11 + $0xf8] sm:$0xff]
    %v2506 = vld [vmem:[#allocation11 + $0x100] sm:$0xff]
    %v2507 = vld [vmem:[#allocation11 + $0x108] sm:$0xff]
    %v2508 = vld [vmem:[#allocation11 + $0x110] sm:$0xff]
    %v2509 = vld [vmem:[#allocation11 + $0x118] sm:$0xff]
    %v2510 = vld [vmem:[#allocation11 + $0x120] sm:$0xff]
    %v2511 = vld [vmem:[#allocation11 + $0x128] sm:$0xff]
    %v2512 = vld [vmem:[#allocation11 + $0x130] sm:$0xff]
    %v2513 = vld [vmem:[#allocation11 + $0x138] sm:$0xff]
    %v2514 = vld [vmem:[#allocation11 + $0x140] sm:$0xff]
    %v2515 = vld [vmem:[#allocation11 + $0x148] sm:$0xff]
    %v2516 = vld [vmem:[#allocation11 + $0x150] sm:$0xff]
    %v2517 = vld [vmem:[#allocation11 + $0x158] sm:$0xff]
    %v2518 = vld [vmem:[#allocation11 + $0x160] sm:$0xff]
    %v2519 = vld [vmem:[#allocation11 + $0x168] sm:$0xff]
    %v2520 = vld [vmem:[#allocation11 + $0x170] sm:$0xff]
    %v2521 = vld [vmem:[#allocation11 + $0x178] sm:$0xff]
    %v2522 = vld [vmem:[#allocation11 + $0x180] sm:$0xff]
    %v2523 = vld [vmem:[#allocation11 + $0x188] sm:$0xff]
    %v2524 = vld [vmem:[#allocation11 + $0x190] sm:$0xff]
    %v2525 = vld [vmem:[#allocation11 + $0x198] sm:$0xff]
    %v2526 = vld [vmem:[#allocation11 + $0x1a0] sm:$0xff]
    %v2527 = vld [vmem:[#allocation11 + $0x1a8] sm:$0xff]
    %v2528 = vld [vmem:[#allocation11 + $0x1b0] sm:$0xff]
    %v2529 = vld [vmem:[#allocation11 + $0x1b8] sm:$0xff]
    %v2530 = vld [vmem:[#allocation11 + $0x1c0] sm:$0xff]
    %v2531 = vld [vmem:[#allocation11 + $0x1c8] sm:$0xff]
    %v2532 = vld [vmem:[#allocation11 + $0x1d0] sm:$0xff]
    %v2533 = vld [vmem:[#allocation11 + $0x1d8] sm:$0xff]
    %v2534 = vld [vmem:[#allocation11 + $0x1e0] sm:$0xff]
    %v2535 = vld [vmem:[#allocation11 + $0x1e8] sm:$0xff]
    %v2536 = vld [vmem:[#allocation11 + $0x1f0] sm:$0xff]
    %v2537 = vld [vmem:[#allocation11 + $0x1f8] sm:$0xff]
    %v2538 = vld [vmem:[#allocation11 + $0x200] sm:$0xff]
    %v2539 = vld [vmem:[#allocation11 + $0x208] sm:$0xff]
    %v2540 = vld [vmem:[#allocation11 + $0x210] sm:$0xff]
    %v2541 = vld [vmem:[#allocation11 + $0x218] sm:$0xff]
    %v2542 = vld [vmem:[#allocation11 + $0x220] sm:$0xff]
    %v2543 = vld [vmem:[#allocation11 + $0x228] sm:$0xff]
    %v2544 = vld [vmem:[#allocation11 + $0x230] sm:$0xff]
    %v2545 = vld [vmem:[#allocation11 + $0x238] sm:$0xff]
    %v2546 = vld [vmem:[#allocation11 + $0x240] sm:$0xff]
    %v2547 = vld [vmem:[#allocation11 + $0x248] sm:$0xff]
    %v2548 = vld [vmem:[#allocation11 + $0x250] sm:$0xff]
    %v2549 = vld [vmem:[#allocation11 + $0x258] sm:$0xff]
    %v2550 = vld [vmem:[#allocation11 + $0x260] sm:$0xff]
    %v2551 = vld [vmem:[#allocation11 + $0x268] sm:$0xff]
    %v2552 = vld [vmem:[#allocation11 + $0x270] sm:$0xff]
    %v2553 = vld [vmem:[#allocation11 + $0x278] sm:$0xff]
    %v2554 = vld [vmem:[#allocation11 + $0x280] sm:$0xff]
    %v2555 = vld [vmem:[#allocation11 + $0x288] sm:$0xff]
    %v2556 = vld [vmem:[#allocation11 + $0x290] sm:$0xff]
    %v2557 = vld [vmem:[#allocation11 + $0x298] sm:$0xff]
    %v2558 = vld [vmem:[#allocation11 + $0x2a0] sm:$0xff]
    %v2559 = vld [vmem:[#allocation11 + $0x2a8] sm:$0xff]
    %v2560 = vld [vmem:[#allocation11 + $0x2b0] sm:$0xff]
    %v2561 = vld [vmem:[#allocation11 + $0x2b8] sm:$0xff]
    %v2562 = vld [vmem:[#allocation11 + $0x2c0] sm:$0xff]
    %v2563 = vld [vmem:[#allocation11 + $0x2c8] sm:$0xff]
    %v2564 = vld [vmem:[#allocation11 + $0x2d0] sm:$0xff]
    %v2565 = vld [vmem:[#allocation11 + $0x2d8] sm:$0xff]
    %v2566 = vld [vmem:[#allocation11 + $0x2e0] sm:$0xff]
    %v2567 = vld [vmem:[#allocation11 + $0x2e8] sm:$0xff]
    %v2568 = vld [vmem:[#allocation11 + $0x2f0] sm:$0xff]
    %v2569 = vld [vmem:[#allocation11 + $0x2f8] sm:$0xff]
    %v2570 = vld [vmem:[#allocation11 + $0x300] sm:$0xff]
    %v2571 = vld [vmem:[#allocation11 + $0x308] sm:$0xff]
    %v2572 = vld [vmem:[#allocation11 + $0x310] sm:$0xff]
    %v2573 = vld [vmem:[#allocation11 + $0x318] sm:$0xff]
    %v2574 = vld [vmem:[#allocation11 + $0x320] sm:$0xff]
    %v2575 = vld [vmem:[#allocation11 + $0x328] sm:$0xff]
    %v2576 = vld [vmem:[#allocation11 + $0x330] sm:$0xff]
    %v2577 = vld [vmem:[#allocation11 + $0x338] sm:$0xff]
    %v2578 = vld [vmem:[#allocation11 + $0x340] sm:$0xff]
    %v2579 = vld [vmem:[#allocation11 + $0x348] sm:$0xff]
    %v2580 = vld [vmem:[#allocation11 + $0x350] sm:$0xff]
    %v2581 = vld [vmem:[#allocation11 + $0x358] sm:$0xff]
    %v2582 = vld [vmem:[#allocation11 + $0x360] sm:$0xff]
    %v2583 = vld [vmem:[#allocation11 + $0x368] sm:$0xff]
    %v2584 = vld [vmem:[#allocation11 + $0x370] sm:$0xff]
    %v2585 = vld [vmem:[#allocation11 + $0x378] sm:$0xff]
    %v2586 = vld [vmem:[#allocation11 + $0x380] sm:$0xff]
    %v2587 = vld [vmem:[#allocation11 + $0x388] sm:$0xff]
    %v2588 = vld [vmem:[#allocation11 + $0x390] sm:$0xff]
    %v2589 = vld [vmem:[#allocation11 + $0x398] sm:$0xff]
    %v2590 = vld [vmem:[#allocation11 + $0x3a0] sm:$0xff]
    %v2591 = vld [vmem:[#allocation11 + $0x3a8] sm:$0xff]
    %v2592 = vld [vmem:[#allocation11 + $0x3b0] sm:$0xff]
    %v2593 = vld [vmem:[#allocation11 + $0x3b8] sm:$0xff]
    %v2594 = vld [vmem:[#allocation11 + $0x3c0] sm:$0xff]
    %v2595 = vld [vmem:[#allocation11 + $0x3c8] sm:$0xff]
    %v2596 = vld [vmem:[#allocation11 + $0x3d0] sm:$0xff]
    %v2597 = vld [vmem:[#allocation11 + $0x3d8] sm:$0xff]
    %v2598 = vld [vmem:[#allocation11 + $0x3e0] sm:$0xff]
    %v2599 = vld [vmem:[#allocation11 + $0x3e8] sm:$0xff]
    %v2600 = vld [vmem:[#allocation11 + $0x3f0] sm:$0xff]
    %v2601 = vld [vmem:[#allocation11 + $0x3f8] sm:$0xff]
    %v2602 = vld [vmem:[%s4] sm:$0xf]
    %v2604 = vlaneseq
    %v2605 = vshrl.u32 %v2604, 7
    %v2606 = vsub.s32 0, %v2605
    %v2607 = vrot.slane %v2602, %v2606
    %v2608 = vlaneseq
    %v2609 = vshrl.u32 %v2608, 7
    %v2610 = vsub.s32 1, %v2609
    %v2611 = vrot.slane %v2602, %v2610
    %v2612 = vlaneseq
    %v2613 = vshrl.u32 %v2612, 7
    %v2614 = vsub.s32 2, %v2613
    %v2615 = vrot.slane %v2602, %v2614
    %v2616 = vlaneseq
    %v2617 = vshrl.u32 %v2616, 7
    %v2618 = vsub.s32 3, %v2617
    %v2619 = vrot.slane %v2602, %v2618
    %v2752 = vunpack.c.l.b16 %v2474
    %v2753 = vunpack.c.h.b16 %v2474
    %v2754 = vunpack.c.l.b16 %v2475
    %v2755 = vunpack.c.h.b16 %v2475
    %v2756 = vunpack.c.l.b16 %v2476
    %v2757 = vunpack.c.h.b16 %v2476
    %v2758 = vunpack.c.l.b16 %v2477
    %v2759 = vunpack.c.h.b16 %v2477
    %v2760 = vunpack.c.l.b16 %v2478
    %v2761 = vunpack.c.h.b16 %v2478
    %v2762 = vunpack.c.l.b16 %v2479
    %v2763 = vunpack.c.h.b16 %v2479
    %v2764 = vunpack.c.l.b16 %v2480
    %v2765 = vunpack.c.h.b16 %v2480
    %v2766 = vunpack.c.l.b16 %v2481
    %v2767 = vunpack.c.h.b16 %v2481
    %v2768 = vunpack.c.l.b16 %v2482
    %v2769 = vunpack.c.h.b16 %v2482
    %v2770 = vunpack.c.l.b16 %v2483
    %v2771 = vunpack.c.h.b16 %v2483
    %v2772 = vunpack.c.l.b16 %v2484
    %v2773 = vunpack.c.h.b16 %v2484
    %v2774 = vunpack.c.l.b16 %v2485
    %v2775 = vunpack.c.h.b16 %v2485
    %v2776 = vunpack.c.l.b16 %v2486
    %v2777 = vunpack.c.h.b16 %v2486
    %v2778 = vunpack.c.l.b16 %v2487
    %v2779 = vunpack.c.h.b16 %v2487
    %v2780 = vunpack.c.l.b16 %v2488
    %v2781 = vunpack.c.h.b16 %v2488
    %v2782 = vunpack.c.l.b16 %v2489
    %v2783 = vunpack.c.h.b16 %v2489
    %v2784 = vunpack.c.l.b16 %v2490
    %v2785 = vunpack.c.h.b16 %v2490
    %v2786 = vunpack.c.l.b16 %v2491
    %v2787 = vunpack.c.h.b16 %v2491
    %v2788 = vunpack.c.l.b16 %v2492
    %v2789 = vunpack.c.h.b16 %v2492
    %v2790 = vunpack.c.l.b16 %v2493
    %v2791 = vunpack.c.h.b16 %v2493
    %v2792 = vunpack.c.l.b16 %v2494
    %v2793 = vunpack.c.h.b16 %v2494
    %v2794 = vunpack.c.l.b16 %v2495
    %v2795 = vunpack.c.h.b16 %v2495
    %v2796 = vunpack.c.l.b16 %v2496
    %v2797 = vunpack.c.h.b16 %v2496
    %v2798 = vunpack.c.l.b16 %v2497
    %v2799 = vunpack.c.h.b16 %v2497
    %v2800 = vunpack.c.l.b16 %v2498
    %v2801 = vunpack.c.h.b16 %v2498
    %v2802 = vunpack.c.l.b16 %v2499
    %v2803 = vunpack.c.h.b16 %v2499
    %v2804 = vunpack.c.l.b16 %v2500
    %v2805 = vunpack.c.h.b16 %v2500
    %v2806 = vunpack.c.l.b16 %v2501
    %v2807 = vunpack.c.h.b16 %v2501
    %v2808 = vunpack.c.l.b16 %v2502
    %v2809 = vunpack.c.h.b16 %v2502
    %v2810 = vunpack.c.l.b16 %v2503
    %v2811 = vunpack.c.h.b16 %v2503
    %v2812 = vunpack.c.l.b16 %v2504
    %v2813 = vunpack.c.h.b16 %v2504
    %v2814 = vunpack.c.l.b16 %v2505
    %v2815 = vunpack.c.h.b16 %v2505
    %v2816 = vunpack.c.l.b16 %v2506
    %v2817 = vunpack.c.h.b16 %v2506
    %v2818 = vunpack.c.l.b16 %v2507
    %v2819 = vunpack.c.h.b16 %v2507
    %v2820 = vunpack.c.l.b16 %v2508
    %v2821 = vunpack.c.h.b16 %v2508
    %v2822 = vunpack.c.l.b16 %v2509
    %v2823 = vunpack.c.h.b16 %v2509
    %v2824 = vunpack.c.l.b16 %v2510
    %v2825 = vunpack.c.h.b16 %v2510
    %v2826 = vunpack.c.l.b16 %v2511
    %v2827 = vunpack.c.h.b16 %v2511
    %v2828 = vunpack.c.l.b16 %v2512
    %v2829 = vunpack.c.h.b16 %v2512
    %v2830 = vunpack.c.l.b16 %v2513
    %v2831 = vunpack.c.h.b16 %v2513
    %v2832 = vunpack.c.l.b16 %v2514
    %v2833 = vunpack.c.h.b16 %v2514
    %v2834 = vunpack.c.l.b16 %v2515
    %v2835 = vunpack.c.h.b16 %v2515
    %v2836 = vunpack.c.l.b16 %v2516
    %v2837 = vunpack.c.h.b16 %v2516
    %v2838 = vunpack.c.l.b16 %v2517
    %v2839 = vunpack.c.h.b16 %v2517
    %v2840 = vunpack.c.l.b16 %v2518
    %v2841 = vunpack.c.h.b16 %v2518
    %v2842 = vunpack.c.l.b16 %v2519
    %v2843 = vunpack.c.h.b16 %v2519
    %v2844 = vunpack.c.l.b16 %v2520
    %v2845 = vunpack.c.h.b16 %v2520
    %v2846 = vunpack.c.l.b16 %v2521
    %v2847 = vunpack.c.h.b16 %v2521
    %v2848 = vunpack.c.l.b16 %v2522
    %v2849 = vunpack.c.h.b16 %v2522
    %v2850 = vunpack.c.l.b16 %v2523
    %v2851 = vunpack.c.h.b16 %v2523
    %v2852 = vunpack.c.l.b16 %v2524
    %v2853 = vunpack.c.h.b16 %v2524
    %v2854 = vunpack.c.l.b16 %v2525
    %v2855 = vunpack.c.h.b16 %v2525
    %v2856 = vunpack.c.l.b16 %v2526
    %v2857 = vunpack.c.h.b16 %v2526
    %v2858 = vunpack.c.l.b16 %v2527
    %v2859 = vunpack.c.h.b16 %v2527
    %v2860 = vunpack.c.l.b16 %v2528
    %v2861 = vunpack.c.h.b16 %v2528
    %v2862 = vunpack.c.l.b16 %v2529
    %v2863 = vunpack.c.h.b16 %v2529
    %v2864 = vunpack.c.l.b16 %v2530
    %v2865 = vunpack.c.h.b16 %v2530
    %v2866 = vunpack.c.l.b16 %v2531
    %v2867 = vunpack.c.h.b16 %v2531
    %v2868 = vunpack.c.l.b16 %v2532
    %v2869 = vunpack.c.h.b16 %v2532
    %v2870 = vunpack.c.l.b16 %v2533
    %v2871 = vunpack.c.h.b16 %v2533
    %v2872 = vunpack.c.l.b16 %v2534
    %v2873 = vunpack.c.h.b16 %v2534
    %v2874 = vunpack.c.l.b16 %v2535
    %v2875 = vunpack.c.h.b16 %v2535
    %v2876 = vunpack.c.l.b16 %v2536
    %v2877 = vunpack.c.h.b16 %v2536
    %v2878 = vunpack.c.l.b16 %v2537
    %v2879 = vunpack.c.h.b16 %v2537
    %v2880 = vunpack.c.l.b16 %v2538
    %v2881 = vunpack.c.h.b16 %v2538
    %v2882 = vunpack.c.l.b16 %v2539
    %v2883 = vunpack.c.h.b16 %v2539
    %v2884 = vunpack.c.l.b16 %v2540
    %v2885 = vunpack.c.h.b16 %v2540
    %v2886 = vunpack.c.l.b16 %v2541
    %v2887 = vunpack.c.h.b16 %v2541
    %v2888 = vunpack.c.l.b16 %v2542
    %v2889 = vunpack.c.h.b16 %v2542
    %v2890 = vunpack.c.l.b16 %v2543
    %v2891 = vunpack.c.h.b16 %v2543
    %v2892 = vunpack.c.l.b16 %v2544
    %v2893 = vunpack.c.h.b16 %v2544
    %v2894 = vunpack.c.l.b16 %v2545
    %v2895 = vunpack.c.h.b16 %v2545
    %v2896 = vunpack.c.l.b16 %v2546
    %v2897 = vunpack.c.h.b16 %v2546
    %v2898 = vunpack.c.l.b16 %v2547
    %v2899 = vunpack.c.h.b16 %v2547
    %v2900 = vunpack.c.l.b16 %v2548
    %v2901 = vunpack.c.h.b16 %v2548
    %v2902 = vunpack.c.l.b16 %v2549
    %v2903 = vunpack.c.h.b16 %v2549
    %v2904 = vunpack.c.l.b16 %v2550
    %v2905 = vunpack.c.h.b16 %v2550
    %v2906 = vunpack.c.l.b16 %v2551
    %v2907 = vunpack.c.h.b16 %v2551
    %v2908 = vunpack.c.l.b16 %v2552
    %v2909 = vunpack.c.h.b16 %v2552
    %v2910 = vunpack.c.l.b16 %v2553
    %v2911 = vunpack.c.h.b16 %v2553
    %v2912 = vunpack.c.l.b16 %v2554
    %v2913 = vunpack.c.h.b16 %v2554
    %v2914 = vunpack.c.l.b16 %v2555
    %v2915 = vunpack.c.h.b16 %v2555
    %v2916 = vunpack.c.l.b16 %v2556
    %v2917 = vunpack.c.h.b16 %v2556
    %v2918 = vunpack.c.l.b16 %v2557
    %v2919 = vunpack.c.h.b16 %v2557
    %v2920 = vunpack.c.l.b16 %v2558
    %v2921 = vunpack.c.h.b16 %v2558
    %v2922 = vunpack.c.l.b16 %v2559
    %v2923 = vunpack.c.h.b16 %v2559
    %v2924 = vunpack.c.l.b16 %v2560
    %v2925 = vunpack.c.h.b16 %v2560
    %v2926 = vunpack.c.l.b16 %v2561
    %v2927 = vunpack.c.h.b16 %v2561
    %v2928 = vunpack.c.l.b16 %v2562
    %v2929 = vunpack.c.h.b16 %v2562
    %v2930 = vunpack.c.l.b16 %v2563
    %v2931 = vunpack.c.h.b16 %v2563
    %v2932 = vunpack.c.l.b16 %v2564
    %v2933 = vunpack.c.h.b16 %v2564
    %v2934 = vunpack.c.l.b16 %v2565
    %v2935 = vunpack.c.h.b16 %v2565
    %v2936 = vunpack.c.l.b16 %v2566
    %v2937 = vunpack.c.h.b16 %v2566
    %v2938 = vunpack.c.l.b16 %v2567
    %v2939 = vunpack.c.h.b16 %v2567
    %v2940 = vunpack.c.l.b16 %v2568
    %v2941 = vunpack.c.h.b16 %v2568
    %v2942 = vunpack.c.l.b16 %v2569
    %v2943 = vunpack.c.h.b16 %v2569
    %v2944 = vunpack.c.l.b16 %v2570
    %v2945 = vunpack.c.h.b16 %v2570
    %v2946 = vunpack.c.l.b16 %v2571
    %v2947 = vunpack.c.h.b16 %v2571
    %v2948 = vunpack.c.l.b16 %v2572
    %v2949 = vunpack.c.h.b16 %v2572
    %v2950 = vunpack.c.l.b16 %v2573
    %v2951 = vunpack.c.h.b16 %v2573
    %v2952 = vunpack.c.l.b16 %v2574
    %v2953 = vunpack.c.h.b16 %v2574
    %v2954 = vunpack.c.l.b16 %v2575
    %v2955 = vunpack.c.h.b16 %v2575
    %v2956 = vunpack.c.l.b16 %v2576
    %v2957 = vunpack.c.h.b16 %v2576
    %v2958 = vunpack.c.l.b16 %v2577
    %v2959 = vunpack.c.h.b16 %v2577
    %v2960 = vunpack.c.l.b16 %v2578
    %v2961 = vunpack.c.h.b16 %v2578
    %v2962 = vunpack.c.l.b16 %v2579
    %v2963 = vunpack.c.h.b16 %v2579
    %v2964 = vunpack.c.l.b16 %v2580
    %v2965 = vunpack.c.h.b16 %v2580
    %v2966 = vunpack.c.l.b16 %v2581
    %v2967 = vunpack.c.h.b16 %v2581
    %v2968 = vunpack.c.l.b16 %v2582
    %v2969 = vunpack.c.h.b16 %v2582
    %v2970 = vunpack.c.l.b16 %v2583
    %v2971 = vunpack.c.h.b16 %v2583
    %v2972 = vunpack.c.l.b16 %v2584
    %v2973 = vunpack.c.h.b16 %v2584
    %v2974 = vunpack.c.l.b16 %v2585
    %v2975 = vunpack.c.h.b16 %v2585
    %v2976 = vunpack.c.l.b16 %v2586
    %v2977 = vunpack.c.h.b16 %v2586
    %v2978 = vunpack.c.l.b16 %v2587
    %v2979 = vunpack.c.h.b16 %v2587
    %v2980 = vunpack.c.l.b16 %v2588
    %v2981 = vunpack.c.h.b16 %v2588
    %v2982 = vunpack.c.l.b16 %v2589
    %v2983 = vunpack.c.h.b16 %v2589
    %v2984 = vunpack.c.l.b16 %v2590
    %v2985 = vunpack.c.h.b16 %v2590
    %v2986 = vunpack.c.l.b16 %v2591
    %v2987 = vunpack.c.h.b16 %v2591
    %v2988 = vunpack.c.l.b16 %v2592
    %v2989 = vunpack.c.h.b16 %v2592
    %v2990 = vunpack.c.l.b16 %v2593
    %v2991 = vunpack.c.h.b16 %v2593
    %v2992 = vunpack.c.l.b16 %v2594
    %v2993 = vunpack.c.h.b16 %v2594
    %v2994 = vunpack.c.l.b16 %v2595
    %v2995 = vunpack.c.h.b16 %v2595
    %v2996 = vunpack.c.l.b16 %v2596
    %v2997 = vunpack.c.h.b16 %v2596
    %v2998 = vunpack.c.l.b16 %v2597
    %v2999 = vunpack.c.h.b16 %v2597
    %v3000 = vunpack.c.l.b16 %v2598
    %v3001 = vunpack.c.h.b16 %v2598
    %v3002 = vunpack.c.l.b16 %v2599
    %v3003 = vunpack.c.h.b16 %v2599
    %v3004 = vunpack.c.l.b16 %v2600
    %v3005 = vunpack.c.h.b16 %v2600
    %v3006 = vunpack.c.l.b16 %v2601
    %v3007 = vunpack.c.h.b16 %v2601
    %v3008 = vpack.c.b16 %v2756, %v2752
    %v3009 = vpack.c.b16 %v2757, %v2753
    %v3010 = vpack.c.b16 %v2758, %v2754
    %v3011 = vpack.c.b16 %v2759, %v2755
    %v3012 = vpack.c.b16 %v2764, %v2760
    %v3013 = vpack.c.b16 %v2765, %v2761
    %v3014 = vpack.c.b16 %v2766, %v2762
    %v3015 = vpack.c.b16 %v2767, %v2763
    %v3016 = vpack.c.b16 %v2772, %v2768
    %v3017 = vpack.c.b16 %v2773, %v2769
    %v3018 = vpack.c.b16 %v2774, %v2770
    %v3019 = vpack.c.b16 %v2775, %v2771
    %v3020 = vpack.c.b16 %v2780, %v2776
    %v3021 = vpack.c.b16 %v2781, %v2777
    %v3022 = vpack.c.b16 %v2782, %v2778
    %v3023 = vpack.c.b16 %v2783, %v2779
    %v3024 = vpack.c.b16 %v2788, %v2784
    %v3025 = vpack.c.b16 %v2789, %v2785
    %v3026 = vpack.c.b16 %v2790, %v2786
    %v3027 = vpack.c.b16 %v2791, %v2787
    %v3028 = vpack.c.b16 %v2796, %v2792
    %v3029 = vpack.c.b16 %v2797, %v2793
    %v3030 = vpack.c.b16 %v2798, %v2794
    %v3031 = vpack.c.b16 %v2799, %v2795
    %v3032 = vpack.c.b16 %v2804, %v2800
    %v3033 = vpack.c.b16 %v2805, %v2801
    %v3034 = vpack.c.b16 %v2806, %v2802
    %v3035 = vpack.c.b16 %v2807, %v2803
    %v3036 = vpack.c.b16 %v2812, %v2808
    %v3037 = vpack.c.b16 %v2813, %v2809
    %v3038 = vpack.c.b16 %v2814, %v2810
    %v3039 = vpack.c.b16 %v2815, %v2811
    %v3040 = vpack.c.b16 %v2820, %v2816
    %v3041 = vpack.c.b16 %v2821, %v2817
    %v3042 = vpack.c.b16 %v2822, %v2818
    %v3043 = vpack.c.b16 %v2823, %v2819
    %v3044 = vpack.c.b16 %v2828, %v2824
    %v3045 = vpack.c.b16 %v2829, %v2825
    %v3046 = vpack.c.b16 %v2830, %v2826
    %v3047 = vpack.c.b16 %v2831, %v2827
    %v3048 = vpack.c.b16 %v2836, %v2832
    %v3049 = vpack.c.b16 %v2837, %v2833
    %v3050 = vpack.c.b16 %v2838, %v2834
    %v3051 = vpack.c.b16 %v2839, %v2835
    %v3052 = vpack.c.b16 %v2844, %v2840
    %v3053 = vpack.c.b16 %v2845, %v2841
    %v3054 = vpack.c.b16 %v2846, %v2842
    %v3055 = vpack.c.b16 %v2847, %v2843
    %v3056 = vpack.c.b16 %v2852, %v2848
    %v3057 = vpack.c.b16 %v2853, %v2849
    %v3058 = vpack.c.b16 %v2854, %v2850
    %v3059 = vpack.c.b16 %v2855, %v2851
    %v3060 = vpack.c.b16 %v2860, %v2856
    %v3061 = vpack.c.b16 %v2861, %v2857
    %v3062 = vpack.c.b16 %v2862, %v2858
    %v3063 = vpack.c.b16 %v2863, %v2859
    %v3064 = vpack.c.b16 %v2868, %v2864
    %v3065 = vpack.c.b16 %v2869, %v2865
    %v3066 = vpack.c.b16 %v2870, %v2866
    %v3067 = vpack.c.b16 %v2871, %v2867
    %v3068 = vpack.c.b16 %v2876, %v2872
    %v3069 = vpack.c.b16 %v2877, %v2873
    %v3070 = vpack.c.b16 %v2878, %v2874
    %v3071 = vpack.c.b16 %v2879, %v2875
    %v3072 = vpack.c.b16 %v2884, %v2880
    %v3073 = vpack.c.b16 %v2885, %v2881
    %v3074 = vpack.c.b16 %v2886, %v2882
    %v3075 = vpack.c.b16 %v2887, %v2883
    %v3076 = vpack.c.b16 %v2892, %v2888
    %v3077 = vpack.c.b16 %v2893, %v2889
    %v3078 = vpack.c.b16 %v2894, %v2890
    %v3079 = vpack.c.b16 %v2895, %v2891
    %v3080 = vpack.c.b16 %v2900, %v2896
    %v3081 = vpack.c.b16 %v2901, %v2897
    %v3082 = vpack.c.b16 %v2902, %v2898
    %v3083 = vpack.c.b16 %v2903, %v2899
    %v3084 = vpack.c.b16 %v2908, %v2904
    %v3085 = vpack.c.b16 %v2909, %v2905
    %v3086 = vpack.c.b16 %v2910, %v2906
    %v3087 = vpack.c.b16 %v2911, %v2907
    %v3088 = vpack.c.b16 %v2916, %v2912
    %v3089 = vpack.c.b16 %v2917, %v2913
    %v3090 = vpack.c.b16 %v2918, %v2914
    %v3091 = vpack.c.b16 %v2919, %v2915
    %v3092 = vpack.c.b16 %v2924, %v2920
    %v3093 = vpack.c.b16 %v2925, %v2921
    %v3094 = vpack.c.b16 %v2926, %v2922
    %v3095 = vpack.c.b16 %v2927, %v2923
    %v3096 = vpack.c.b16 %v2932, %v2928
    %v3097 = vpack.c.b16 %v2933, %v2929
    %v3098 = vpack.c.b16 %v2934, %v2930
    %v3099 = vpack.c.b16 %v2935, %v2931
    %v3100 = vpack.c.b16 %v2940, %v2936
    %v3101 = vpack.c.b16 %v2941, %v2937
    %v3102 = vpack.c.b16 %v2942, %v2938
    %v3103 = vpack.c.b16 %v2943, %v2939
    %v3104 = vpack.c.b16 %v2948, %v2944
    %v3105 = vpack.c.b16 %v2949, %v2945
    %v3106 = vpack.c.b16 %v2950, %v2946
    %v3107 = vpack.c.b16 %v2951, %v2947
    %v3108 = vpack.c.b16 %v2956, %v2952
    %v3109 = vpack.c.b16 %v2957, %v2953
    %v3110 = vpack.c.b16 %v2958, %v2954
    %v3111 = vpack.c.b16 %v2959, %v2955
    %v3112 = vpack.c.b16 %v2964, %v2960
    %v3113 = vpack.c.b16 %v2965, %v2961
    %v3114 = vpack.c.b16 %v2966, %v2962
    %v3115 = vpack.c.b16 %v2967, %v2963
    %v3116 = vpack.c.b16 %v2972, %v2968
    %v3117 = vpack.c.b16 %v2973, %v2969
    %v3118 = vpack.c.b16 %v2974, %v2970
    %v3119 = vpack.c.b16 %v2975, %v2971
    %v3120 = vpack.c.b16 %v2980, %v2976
    %v3121 = vpack.c.b16 %v2981, %v2977
    %v3122 = vpack.c.b16 %v2982, %v2978
    %v3123 = vpack.c.b16 %v2983, %v2979
    %v3124 = vpack.c.b16 %v2988, %v2984
    %v3125 = vpack.c.b16 %v2989, %v2985
    %v3126 = vpack.c.b16 %v2990, %v2986
    %v3127 = vpack.c.b16 %v2991, %v2987
    %v3128 = vpack.c.b16 %v2996, %v2992
    %v3129 = vpack.c.b16 %v2997, %v2993
    %v3130 = vpack.c.b16 %v2998, %v2994
    %v3131 = vpack.c.b16 %v2999, %v2995
    %v3132 = vpack.c.b16 %v3004, %v3000
    %v3133 = vpack.c.b16 %v3005, %v3001
    %v3134 = vpack.c.b16 %v3006, %v3002
    %v3135 = vpack.c.b16 %v3007, %v3003
    %3264 = vmatprep.subr.bf16.mxu0 %v3037
    %3265 = vmatpush1.bf16.msra.mxu0 %v3036
    %3266 = vmatprep.subr.bf16.mxu0 %v3033
    %3267 = vmatpush1.bf16.msra.mxu0 %v3032
    %3268 = vmatprep.subr.bf16.mxu0 %v3029
    %3269 = vmatpush1.bf16.msra.mxu0 %v3028
    %3270 = vmatprep.subr.bf16.mxu0 %v3025
    %3271 = vmatpush1.bf16.msra.mxu0 %v3024
    %3272 = vmatprep.subr.bf16.mxu0 %v3021
    %3273 = vmatpush1.bf16.msra.mxu0 %v3020
    %3274 = vmatprep.subr.bf16.mxu0 %v3017
    %3275 = vmatpush1.bf16.msra.mxu0 %v3016
    %3276 = vmatprep.subr.bf16.mxu0 %v3013
    %3277 = vmatpush1.bf16.msra.mxu0 %v3012
    %3278 = vmatprep.subr.bf16.mxu0 %v3009
    %3279 = vmatpush1.bf16.msra.mxu0 %v3008
    %3280 = vmatprep.subr.bf16.mxu0 %v3069
    %3281 = vmatpush2.bf16.msra.mxu0 %v3068
    %3282 = vmatprep.subr.bf16.mxu0 %v3065
    %3283 = vmatpush2.bf16.msra.mxu0 %v3064
    %3284 = vmatprep.subr.bf16.mxu0 %v3061
    %3285 = vmatpush2.bf16.msra.mxu0 %v3060
    %3286 = vmatprep.subr.bf16.mxu0 %v3057
    %3287 = vmatpush2.bf16.msra.mxu0 %v3056
    %3288 = vmatprep.subr.bf16.mxu0 %v3053
    %3289 = vmatpush2.bf16.msra.mxu0 %v3052
    %3290 = vmatprep.subr.bf16.mxu0 %v3049
    %3291 = vmatpush2.bf16.msra.mxu0 %v3048
    %3292 = vmatprep.subr.bf16.mxu0 %v3045
    %3293 = vmatpush2.bf16.msra.mxu0 %v3044
    %3294 = vmatprep.subr.bf16.mxu0 %v3041
    %3295 = vmatpush2.bf16.msra.mxu0 %v3040
    %3296 = vmatprep.mubr.bf16.mxu0 %v2459
    %3297 = vmatmul.mubr.bf16.gmra.mxu0 %v2458
    %v3298 = vpop.f32.mrf.mxu0
    %v3299 = vadd.f32 %v2607, %v3298
    %v3300 = vpop.f32.mrf.mxu0
    %v3301 = vadd.f32 %v2611, %v3300
    %v3302 = vpop.f32.mrf.mxu0
    %v3303 = vadd.f32 %v2607, %v3302
    %v3304 = vpop.f32.mrf.mxu0
    %v3305 = vadd.f32 %v2611, %v3304
    %3306 = vmatprep.mubr.bf16.mxu0 %v2463
    %3307 = vmatmul.mubr.bf16.gmra.mxu0 %v2462
    %v3308 = vpop.f32.mrf.mxu0
    %v3309 = vadd.f32 %v2607, %v3308
    %v3310 = vpop.f32.mrf.mxu0
    %v3311 = vadd.f32 %v2611, %v3310
    %v3312 = vpop.f32.mrf.mxu0
    %v3313 = vadd.f32 %v2607, %v3312
    %v3314 = vpop.f32.mrf.mxu0
    %v3315 = vadd.f32 %v2611, %v3314
    %3316 = vmatprep.mubr.bf16.mxu0 %v2467
    %3317 = vmatmul.mubr.bf16.gmra.mxu0 %v2466
    %v3318 = vpop.f32.mrf.mxu0
    %v3319 = vadd.f32 %v2607, %v3318
    %v3320 = vpop.f32.mrf.mxu0
    %v3321 = vadd.f32 %v2611, %v3320
    %v3322 = vpop.f32.mrf.mxu0
    %v3323 = vadd.f32 %v2607, %v3322
    %v3324 = vpop.f32.mrf.mxu0
    %v3325 = vadd.f32 %v2611, %v3324
    %3326 = vmatprep.mubr.bf16.mxu0 %v2471
    %3327 = vmatmul.mubr.bf16.gmra.mxu0 %v2470
    %v3328 = vpop.f32.mrf.mxu0
    %v3329 = vadd.f32 %v2607, %v3328
    %v3330 = vpop.f32.mrf.mxu0
    %v3331 = vadd.f32 %v2611, %v3330
    %v3332 = vpop.f32.mrf.mxu0
    %v3333 = vadd.f32 %v2607, %v3332
    %v3334 = vpop.f32.mrf.mxu0
    %v3335 = vadd.f32 %v2611, %v3334
    %3336 = vdwg.mxu0
    %3337 = vmatprep.subr.bf16.mxu0 %v3101
    %3338 = vmatpush1.bf16.msra.mxu0 %v3100
    %3339 = vmatprep.subr.bf16.mxu0 %v3097
    %3340 = vmatpush1.bf16.msra.mxu0 %v3096
    %3341 = vmatprep.subr.bf16.mxu0 %v3093
    %3342 = vmatpush1.bf16.msra.mxu0 %v3092
    %3343 = vmatprep.subr.bf16.mxu0 %v3089
    %3344 = vmatpush1.bf16.msra.mxu0 %v3088
    %3345 = vmatprep.subr.bf16.mxu0 %v3085
    %3346 = vmatpush1.bf16.msra.mxu0 %v3084
    %3347 = vmatprep.subr.bf16.mxu0 %v3081
    %3348 = vmatpush1.bf16.msra.mxu0 %v3080
    %3349 = vmatprep.subr.bf16.mxu0 %v3077
    %3350 = vmatpush1.bf16.msra.mxu0 %v3076
    %3351 = vmatprep.subr.bf16.mxu0 %v3073
    %3352 = vmatpush1.bf16.msra.mxu0 %v3072
    %3353 = vmatprep.subr.bf16.mxu0 %v3133
    %3354 = vmatpush2.bf16.msra.mxu0 %v3132
    %3355 = vmatprep.subr.bf16.mxu0 %v3129
    %3356 = vmatpush2.bf16.msra.mxu0 %v3128
    %3357 = vmatprep.subr.bf16.mxu0 %v3125
    %3358 = vmatpush2.bf16.msra.mxu0 %v3124
    %3359 = vmatprep.subr.bf16.mxu0 %v3121
    %3360 = vmatpush2.bf16.msra.mxu0 %v3120
    %3361 = vmatprep.subr.bf16.mxu0 %v3117
    %3362 = vmatpush2.bf16.msra.mxu0 %v3116
    %3363 = vmatprep.subr.bf16.mxu0 %v3113
    %3364 = vmatpush2.bf16.msra.mxu0 %v3112
    %3365 = vmatprep.subr.bf16.mxu0 %v3109
    %3366 = vmatpush2.bf16.msra.mxu0 %v3108
    %3367 = vmatprep.subr.bf16.mxu0 %v3105
    %3368 = vmatpush2.bf16.msra.mxu0 %v3104
    %3369 = vmatprep.mubr.bf16.mxu0 %v2461
    %3370 = vmatmul.mubr.bf16.gmra.mxu0 %v2460
    %v3371 = vpop.f32.mrf.mxu0
    %v3372 = vadd.f32 %v3299, %v3371
    %v3373 = vpop.f32.mrf.mxu0
    %v3374 = vadd.f32 %v3301, %v3373
    %v3375 = vpop.f32.mrf.mxu0
    %v3376 = vadd.f32 %v3303, %v3375
    %v3377 = vpop.f32.mrf.mxu0
    %v3378 = vadd.f32 %v3305, %v3377
    %3379 = vmatprep.mubr.bf16.mxu0 %v2465
    %3380 = vmatmul.mubr.bf16.gmra.mxu0 %v2464
    %v3381 = vpop.f32.mrf.mxu0
    %v3382 = vadd.f32 %v3309, %v3381
    %v3383 = vpop.f32.mrf.mxu0
    %v3384 = vadd.f32 %v3311, %v3383
    %v3385 = vpop.f32.mrf.mxu0
    %v3386 = vadd.f32 %v3313, %v3385
    %v3387 = vpop.f32.mrf.mxu0
    %v3388 = vadd.f32 %v3315, %v3387
    %3389 = vmatprep.mubr.bf16.mxu0 %v2469
    %3390 = vmatmul.mubr.bf16.gmra.mxu0 %v2468
    %v3391 = vpop.f32.mrf.mxu0
    %v3392 = vadd.f32 %v3319, %v3391
    %v3393 = vpop.f32.mrf.mxu0
    %v3394 = vadd.f32 %v3321, %v3393
    %v3395 = vpop.f32.mrf.mxu0
    %v3396 = vadd.f32 %v3323, %v3395
    %v3397 = vpop.f32.mrf.mxu0
    %v3398 = vadd.f32 %v3325, %v3397
    %3399 = vmatprep.mubr.bf16.mxu0 %v2473
    %3400 = vmatmul.mubr.bf16.gmra.mxu0 %v2472
    %v3401 = vpop.f32.mrf.mxu0
    %v3402 = vadd.f32 %v3329, %v3401
    %v3403 = vpop.f32.mrf.mxu0
    %v3404 = vadd.f32 %v3331, %v3403
    %v3405 = vpop.f32.mrf.mxu0
    %v3406 = vadd.f32 %v3333, %v3405
    %v3407 = vpop.f32.mrf.mxu0
    %v3408 = vadd.f32 %v3335, %v3407
    %3409 = vdwg.mxu0
    %3410 = vmatprep.subr.bf16.mxu0 %v3039
    %3411 = vmatpush1.bf16.msra.mxu0 %v3038
    %3412 = vmatprep.subr.bf16.mxu0 %v3035
    %3413 = vmatpush1.bf16.msra.mxu0 %v3034
    %3414 = vmatprep.subr.bf16.mxu0 %v3031
    %3415 = vmatpush1.bf16.msra.mxu0 %v3030
    %3416 = vmatprep.subr.bf16.mxu0 %v3027
    %3417 = vmatpush1.bf16.msra.mxu0 %v3026
    %3418 = vmatprep.subr.bf16.mxu0 %v3023
    %3419 = vmatpush1.bf16.msra.mxu0 %v3022
    %3420 = vmatprep.subr.bf16.mxu0 %v3019
    %3421 = vmatpush1.bf16.msra.mxu0 %v3018
    %3422 = vmatprep.subr.bf16.mxu0 %v3015
    %3423 = vmatpush1.bf16.msra.mxu0 %v3014
    %3424 = vmatprep.subr.bf16.mxu0 %v3011
    %3425 = vmatpush1.bf16.msra.mxu0 %v3010
    %3426 = vmatprep.subr.bf16.mxu0 %v3071
    %3427 = vmatpush2.bf16.msra.mxu0 %v3070
    %3428 = vmatprep.subr.bf16.mxu0 %v3067
    %3429 = vmatpush2.bf16.msra.mxu0 %v3066
    %3430 = vmatprep.subr.bf16.mxu0 %v3063
    %3431 = vmatpush2.bf16.msra.mxu0 %v3062
    %3432 = vmatprep.subr.bf16.mxu0 %v3059
    %3433 = vmatpush2.bf16.msra.mxu0 %v3058
    %3434 = vmatprep.subr.bf16.mxu0 %v3055
    %3435 = vmatpush2.bf16.msra.mxu0 %v3054
    %3436 = vmatprep.subr.bf16.mxu0 %v3051
    %3437 = vmatpush2.bf16.msra.mxu0 %v3050
    %3438 = vmatprep.subr.bf16.mxu0 %v3047
    %3439 = vmatpush2.bf16.msra.mxu0 %v3046
    %3440 = vmatprep.subr.bf16.mxu0 %v3043
    %3441 = vmatpush2.bf16.msra.mxu0 %v3042
    %3442 = vmatprep.mubr.bf16.mxu0 %v2459
    %3443 = vmatmul.mubr.bf16.gmra.mxu0 %v2458
    %v3444 = vpop.f32.mrf.mxu0
    %v3445 = vadd.f32 %v2615, %v3444
    %v3446 = vpop.f32.mrf.mxu0
    %v3447 = vadd.f32 %v2619, %v3446
    %v3448 = vpop.f32.mrf.mxu0
    %v3449 = vadd.f32 %v2615, %v3448
    %v3450 = vpop.f32.mrf.mxu0
    %v3451 = vadd.f32 %v2619, %v3450
    %3452 = vmatprep.mubr.bf16.mxu0 %v2463
    %3453 = vmatmul.mubr.bf16.gmra.mxu0 %v2462
    %v3454 = vpop.f32.mrf.mxu0
    %v3455 = vadd.f32 %v2615, %v3454
    %v3456 = vpop.f32.mrf.mxu0
    %v3457 = vadd.f32 %v2619, %v3456
    %v3458 = vpop.f32.mrf.mxu0
    %v3459 = vadd.f32 %v2615, %v3458
    %v3460 = vpop.f32.mrf.mxu0
    %v3461 = vadd.f32 %v2619, %v3460
    %3462 = vmatprep.mubr.bf16.mxu0 %v2467
    %3463 = vmatmul.mubr.bf16.gmra.mxu0 %v2466
    %v3464 = vpop.f32.mrf.mxu0
    %v3465 = vadd.f32 %v2615, %v3464
    %v3466 = vpop.f32.mrf.mxu0
    %v3467 = vadd.f32 %v2619, %v3466
    %v3468 = vpop.f32.mrf.mxu0
    %v3469 = vadd.f32 %v2615, %v3468
    %v3470 = vpop.f32.mrf.mxu0
    %v3471 = vadd.f32 %v2619, %v3470
    %3472 = vmatprep.mubr.bf16.mxu0 %v2471
    %3473 = vmatmul.mubr.bf16.gmra.mxu0 %v2470
    %v3474 = vpop.f32.mrf.mxu0
    %v3475 = vadd.f32 %v2615, %v3474
    %v3476 = vpop.f32.mrf.mxu0
    %v3477 = vadd.f32 %v2619, %v3476
    %v3478 = vpop.f32.mrf.mxu0
    %v3479 = vadd.f32 %v2615, %v3478
    %v3480 = vpop.f32.mrf.mxu0
    %v3481 = vadd.f32 %v2619, %v3480
    %3482 = vdwg.mxu0
    %3483 = vmatprep.subr.bf16.mxu0 %v3103
    %3484 = vmatpush1.bf16.msra.mxu0 %v3102
    %3485 = vmatprep.subr.bf16.mxu0 %v3099
    %3486 = vmatpush1.bf16.msra.mxu0 %v3098
    %3487 = vmatprep.subr.bf16.mxu0 %v3095
    %3488 = vmatpush1.bf16.msra.mxu0 %v3094
    %3489 = vmatprep.subr.bf16.mxu0 %v3091
    %3490 = vmatpush1.bf16.msra.mxu0 %v3090
    %3491 = vmatprep.subr.bf16.mxu0 %v3087
    %3492 = vmatpush1.bf16.msra.mxu0 %v3086
    %3493 = vmatprep.subr.bf16.mxu0 %v3083
    %3494 = vmatpush1.bf16.msra.mxu0 %v3082
    %3495 = vmatprep.subr.bf16.mxu0 %v3079
    %3496 = vmatpush1.bf16.msra.mxu0 %v3078
    %3497 = vmatprep.subr.bf16.mxu0 %v3075
    %3498 = vmatpush1.bf16.msra.mxu0 %v3074
    %3499 = vmatprep.subr.bf16.mxu0 %v3135
    %3500 = vmatpush2.bf16.msra.mxu0 %v3134
    %3501 = vmatprep.subr.bf16.mxu0 %v3131
    %3502 = vmatpush2.bf16.msra.mxu0 %v3130
    %3503 = vmatprep.subr.bf16.mxu0 %v3127
    %3504 = vmatpush2.bf16.msra.mxu0 %v3126
    %3505 = vmatprep.subr.bf16.mxu0 %v3123
    %3506 = vmatpush2.bf16.msra.mxu0 %v3122
    %3507 = vmatprep.subr.bf16.mxu0 %v3119
    %3508 = vmatpush2.bf16.msra.mxu0 %v3118
    %3509 = vmatprep.subr.bf16.mxu0 %v3115
    %3510 = vmatpush2.bf16.msra.mxu0 %v3114
    %3511 = vmatprep.subr.bf16.mxu0 %v3111
    %3512 = vmatpush2.bf16.msra.mxu0 %v3110
    %3513 = vmatprep.subr.bf16.mxu0 %v3107
    %3514 = vmatpush2.bf16.msra.mxu0 %v3106
    %3515 = vmatprep.mubr.bf16.mxu0 %v2461
    %3516 = vmatmul.mubr.bf16.gmra.mxu0 %v2460
    %v3517 = vpop.f32.mrf.mxu0
    %v3518 = vadd.f32 %v3445, %v3517
    %v3519 = vpop.f32.mrf.mxu0
    %v3520 = vadd.f32 %v3447, %v3519
    %v3521 = vpop.f32.mrf.mxu0
    %v3522 = vadd.f32 %v3449, %v3521
    %v3523 = vpop.f32.mrf.mxu0
    %v3524 = vadd.f32 %v3451, %v3523
    %3525 = vmatprep.mubr.bf16.mxu0 %v2465
    %3526 = vmatmul.mubr.bf16.gmra.mxu0 %v2464
    %v3527 = vpop.f32.mrf.mxu0
    %v3528 = vadd.f32 %v3455, %v3527
    %v3529 = vpop.f32.mrf.mxu0
    %v3530 = vadd.f32 %v3457, %v3529
    %v3531 = vpop.f32.mrf.mxu0
    %v3532 = vadd.f32 %v3459, %v3531
    %v3533 = vpop.f32.mrf.mxu0
    %v3534 = vadd.f32 %v3461, %v3533
    %3535 = vmatprep.mubr.bf16.mxu0 %v2469
    %3536 = vmatmul.mubr.bf16.gmra.mxu0 %v2468
    %v3537 = vpop.f32.mrf.mxu0
    %v3538 = vadd.f32 %v3465, %v3537
    %v3539 = vpop.f32.mrf.mxu0
    %v3540 = vadd.f32 %v3467, %v3539
    %v3541 = vpop.f32.mrf.mxu0
    %v3542 = vadd.f32 %v3469, %v3541
    %v3543 = vpop.f32.mrf.mxu0
    %v3544 = vadd.f32 %v3471, %v3543
    %3545 = vmatprep.mubr.bf16.mxu0 %v2473
    %3546 = vmatmul.mubr.bf16.gmra.mxu0 %v2472
    %v3547 = vpop.f32.mrf.mxu0
    %v3548 = vadd.f32 %v3475, %v3547
    %v3549 = vpop.f32.mrf.mxu0
    %v3550 = vadd.f32 %v3477, %v3549
    %v3551 = vpop.f32.mrf.mxu0
    %v3552 = vadd.f32 %v3479, %v3551
    %v3553 = vpop.f32.mrf.mxu0
    %v3554 = vadd.f32 %v3481, %v3553
    %3555 = vdwg.mxu0
    %v3556 = vtanh.pop %v3372
    %v3557 = vtanh.pop %v3374
    %v3558 = vtanh.pop %v3376
    %v3559 = vtanh.pop %v3378
    %v3560 = vtanh.pop %v3382
    %v3561 = vtanh.pop %v3384
    %v3562 = vtanh.pop %v3386
    %v3563 = vtanh.pop %v3388
    %v3564 = vtanh.pop %v3392
    %v3565 = vtanh.pop %v3394
    %v3566 = vtanh.pop %v3396
    %v3567 = vtanh.pop %v3398
    %v3568 = vtanh.pop %v3402
    %v3569 = vtanh.pop %v3404
    %v3570 = vtanh.pop %v3406
    %v3571 = vtanh.pop %v3408
    %v3572 = vxor.u32 %v3518, 2147483648
    %v3573 = vxor.u32 %v3520, 2147483648
    %v3574 = vxor.u32 %v3522, 2147483648
    %v3575 = vxor.u32 %v3524, 2147483648
    %v3576 = vxor.u32 %v3528, 2147483648
    %v3577 = vxor.u32 %v3530, 2147483648
    %v3578 = vxor.u32 %v3532, 2147483648
    %v3579 = vxor.u32 %v3534, 2147483648
    %v3580 = vxor.u32 %v3538, 2147483648
    %v3581 = vxor.u32 %v3540, 2147483648
    %v3582 = vxor.u32 %v3542, 2147483648
    %v3583 = vxor.u32 %v3544, 2147483648
    %v3584 = vxor.u32 %v3548, 2147483648
    %v3585 = vxor.u32 %v3550, 2147483648
    %v3586 = vxor.u32 %v3552, 2147483648
    %v3587 = vxor.u32 %v3554, 2147483648
    %v3588 = vmul.f32 %v3572, 1.442695
    %v3589 = vpow.pop %v3588
    %v3590 = vmul.f32 %v3573, 1.442695
    %v3591 = vpow.pop %v3590
    %v3592 = vmul.f32 %v3574, 1.442695
    %v3593 = vpow.pop %v3592
    %v3594 = vmul.f32 %v3575, 1.442695
    %v3595 = vpow.pop %v3594
    %v3596 = vmul.f32 %v3576, 1.442695
    %v3597 = vpow.pop %v3596
    %v3598 = vmul.f32 %v3577, 1.442695
    %v3599 = vpow.pop %v3598
    %v3600 = vmul.f32 %v3578, 1.442695
    %v3601 = vpow.pop %v3600
    %v3602 = vmul.f32 %v3579, 1.442695
    %v3603 = vpow.pop %v3602
    %v3604 = vmul.f32 %v3580, 1.442695
    %v3605 = vpow.pop %v3604
    %v3606 = vmul.f32 %v3581, 1.442695
    %v3607 = vpow.pop %v3606
    %v3608 = vmul.f32 %v3582, 1.442695
    %v3609 = vpow.pop %v3608
    %v3610 = vmul.f32 %v3583, 1.442695
    %v3611 = vpow.pop %v3610
    %v3612 = vmul.f32 %v3584, 1.442695
    %v3613 = vpow.pop %v3612
    %v3614 = vmul.f32 %v3585, 1.442695
    %v3615 = vpow.pop %v3614
    %v3616 = vmul.f32 %v3586, 1.442695
    %v3617 = vpow.pop %v3616
    %v3618 = vmul.f32 %v3587, 1.442695
    %v3619 = vpow.pop %v3618
    %v3620 = vadd.f32 %v3589, 1.0
    %v3621 = vadd.f32 %v3591, 1.0
    %v3622 = vadd.f32 %v3593, 1.0
    %v3623 = vadd.f32 %v3595, 1.0
    %v3624 = vadd.f32 %v3597, 1.0
    %v3625 = vadd.f32 %v3599, 1.0
    %v3626 = vadd.f32 %v3601, 1.0
    %v3627 = vadd.f32 %v3603, 1.0
    %v3628 = vadd.f32 %v3605, 1.0
    %v3629 = vadd.f32 %v3607, 1.0
    %v3630 = vadd.f32 %v3609, 1.0
    %v3631 = vadd.f32 %v3611, 1.0
    %v3632 = vadd.f32 %v3613, 1.0
    %v3633 = vadd.f32 %v3615, 1.0
    %v3634 = vadd.f32 %v3617, 1.0
    %v3635 = vadd.f32 %v3619, 1.0
    %v3636 = vrcp.pop %v3620
    %v3637 = vmul.f32 1.0, %v3636
    %v3638 = vrcp.pop %v3621
    %v3639 = vmul.f32 1.0, %v3638
    %v3640 = vrcp.pop %v3622
    %v3641 = vmul.f32 1.0, %v3640
    %v3642 = vrcp.pop %v3623
    %v3643 = vmul.f32 1.0, %v3642
    %v3644 = vrcp.pop %v3624
    %v3645 = vmul.f32 1.0, %v3644
    %v3646 = vrcp.pop %v3625
    %v3647 = vmul.f32 1.0, %v3646
    %v3648 = vrcp.pop %v3626
    %v3649 = vmul.f32 1.0, %v3648
    %v3650 = vrcp.pop %v3627
    %v3651 = vmul.f32 1.0, %v3650
    %v3652 = vrcp.pop %v3628
    %v3653 = vmul.f32 1.0, %v3652
    %v3654 = vrcp.pop %v3629
    %v3655 = vmul.f32 1.0, %v3654
    %v3656 = vrcp.pop %v3630
    %v3657 = vmul.f32 1.0, %v3656
    %v3658 = vrcp.pop %v3631
    %v3659 = vmul.f32 1.0, %v3658
    %v3660 = vrcp.pop %v3632
    %v3661 = vmul.f32 1.0, %v3660
    %v3662 = vrcp.pop %v3633
    %v3663 = vmul.f32 1.0, %v3662
    %v3664 = vrcp.pop %v3634
    %v3665 = vmul.f32 1.0, %v3664
    %v3666 = vrcp.pop %v3635
    %v3667 = vmul.f32 1.0, %v3666
    %v3668 = vmul.f32 %v3556, %v3637
    %v3669 = vmul.f32 %v3557, %v3639
    %v3670 = vmul.f32 %v3558, %v3641
    %v3671 = vmul.f32 %v3559, %v3643
    %v3672 = vmul.f32 %v3560, %v3645
    %v3673 = vmul.f32 %v3561, %v3647
    %v3674 = vmul.f32 %v3562, %v3649
    %v3675 = vmul.f32 %v3563, %v3651
    %v3676 = vmul.f32 %v3564, %v3653
    %v3677 = vmul.f32 %v3565, %v3655
    %v3678 = vmul.f32 %v3566, %v3657
    %v3679 = vmul.f32 %v3567, %v3659
    %v3680 = vmul.f32 %v3568, %v3661
    %v3681 = vmul.f32 %v3569, %v3663
    %v3682 = vmul.f32 %v3570, %v3665
    %v3683 = vmul.f32 %v3571, %v3667
    %v3684 = vld [vmem:[%s5] sm:$0x3]
    %v3686 = vlaneseq
    %v3687 = vshrl.u32 %v3686, 7
    %v3688 = vsub.s32 0, %v3687
    %v3689 = vrot.slane %v3684, %v3688
    %v3690 = vlaneseq
    %v3691 = vshrl.u32 %v3690, 7
    %v3692 = vsub.s32 1, %v3691
    %v3693 = vrot.slane %v3684, %v3692
    %v3696 = vmul.f32 %v3668, %v3689
    %v3697 = vmul.f32 %v3669, %v3693
    %v3698 = vmul.f32 %v3670, %v3689
    %v3699 = vmul.f32 %v3671, %v3693
    %v3700 = vmul.f32 %v3672, %v3689
    %v3701 = vmul.f32 %v3673, %v3693
    %v3702 = vmul.f32 %v3674, %v3689
    %v3703 = vmul.f32 %v3675, %v3693
    %v3704 = vmul.f32 %v3676, %v3689
    %v3705 = vmul.f32 %v3677, %v3693
    %v3706 = vmul.f32 %v3678, %v3689
    %v3707 = vmul.f32 %v3679, %v3693
    %v3708 = vmul.f32 %v3680, %v3689
    %v3709 = vmul.f32 %v3681, %v3693
    %v3710 = vmul.f32 %v3682, %v3689
    %v3711 = vmul.f32 %v3683, %v3693
    %v3712 = vadd.f32 %v3696, %v3697
    %3713 = vadd.xlane.f32.xlu0 %v3712
    %v3714 = vpop.xlane.xlu0 %3713
    %v3715 = vadd.f32 %v3698, %v3699
    %3716 = vadd.xlane.f32.xlu0 %v3715
    %v3717 = vpop.xlane.xlu0 %3716
    %v3718 = vadd.f32 %v3700, %v3701
    %3719 = vadd.xlane.f32.xlu0 %v3718
    %v3720 = vpop.xlane.xlu0 %3719
    %v3721 = vadd.f32 %v3702, %v3703
    %3722 = vadd.xlane.f32.xlu0 %v3721
    %v3723 = vpop.xlane.xlu0 %3722
    %v3724 = vadd.f32 %v3704, %v3705
    %3725 = vadd.xlane.f32.xlu0 %v3724
    %v3726 = vpop.xlane.xlu0 %3725
    %v3727 = vadd.f32 %v3706, %v3707
    %3728 = vadd.xlane.f32.xlu0 %v3727
    %v3729 = vpop.xlane.xlu0 %3728
    %v3730 = vadd.f32 %v3708, %v3709
    %3731 = vadd.xlane.f32.xlu0 %v3730
    %v3732 = vpop.xlane.xlu0 %3731
    %v3733 = vadd.f32 %v3710, %v3711
    %3734 = vadd.xlane.f32.xlu0 %v3733
    %v3735 = vpop.xlane.xlu0 %3734
    %v3736 = vld [vmem:[#allocation5] sm:$0x1]
    %v3738 = vlaneseq
    %v3739 = vshrl.u32 %v3738, 7
    %v3740 = vsub.s32 0, %v3739
    %v3741 = vrot.slane %v3736, %v3740
    %v3743 = vadd.f32 %v3714, %v3741
    %v3744 = vadd.f32 %v3717, %v3741
    %v3745 = vadd.f32 %v3720, %v3741
    %v3746 = vadd.f32 %v3723, %v3741
    %v3747 = vadd.f32 %v3726, %v3741
    %v3748 = vadd.f32 %v3729, %v3741
    %v3749 = vadd.f32 %v3732, %v3741
    %v3750 = vadd.f32 %v3735, %v3741
    %vm3751 = vcmask 7168
    %3752 = vst.msk [vmem:[%s97] sm:$0xff] %vm3751, %v3743
    %3753 = vst.msk [vmem:[%s97 + $0x8] sm:$0xff] %vm3751, %v3744
    %3754 = vst.msk [vmem:[%s97 + $0x10] sm:$0xff] %vm3751, %v3745
    %3755 = vst.msk [vmem:[%s97 + $0x18] sm:$0xff] %vm3751, %v3746
    %3756 = vst.msk [vmem:[%s97 + $0x20] sm:$0xff] %vm3751, %v3747
    %3757 = vst.msk [vmem:[%s97 + $0x28] sm:$0xff] %vm3751, %v3748
    %3758 = vst.msk [vmem:[%s97 + $0x30] sm:$0xff] %vm3751, %v3749
    %3759 = vst.msk [vmem:[%s97 + $0x38] sm:$0xff] %vm3751, %v3750
    %v3760 = vsel %vm2402, %v3743, -inf
    %v3761 = vsel %vm2403, %v3744, -inf
    %v3762 = vsel %vm2404, %v3745, -inf
    %v3763 = vsel %vm2405, %v3746, -inf
    %v3764 = vsel %vm2406, %v3747, -inf
    %v3765 = vsel %vm2407, %v3748, -inf
    %v3766 = vsel %vm2408, %v3749, -inf
    %v3767 = vsel %vm2409, %v3750, -inf
    %v3768 = vld [vmem:[#allocation2] sm:$0x1]
    %v3769 = vsel %vm3751, %v3760, -inf
    %v3770 = vsel %vm3751, %v3761, -inf
    %v3771 = vsel %vm3751, %v3762, -inf
    %v3772 = vsel %vm3751, %v3763, -inf
    %v3773 = vsel %vm3751, %v3764, -inf
    %v3774 = vmax.f32 %v3769, %v3773
    %v3775 = vsel %vm3751, %v3765, -inf
    %v3776 = vmax.f32 %v3770, %v3775
    %v3777 = vsel %vm3751, %v3766, -inf
    %v3778 = vmax.f32 %v3771, %v3777
    %v3779 = vsel %vm3751, %v3767, -inf
    %v3780 = vmax.f32 %v3772, %v3779
    %v3781 = vmax.f32 %v3774, %v3776
    %v3782 = vmax.f32 %v3778, %v3780
    %v3783 = vmax.f32 %v3781, %v3782
    %v3784 = vrot.slane %v3783, 4
    %v3785 = vmax.f32 %v3783, %v3784
    %v3786 = vrot.slane %v3785, 2
    %v3787 = vmax.f32 %v3785, %v3786
    %v3788 = vrot.slane %v3787, 1
    %v3789 = vmax.f32 %v3787, %v3788
    %v3790 = vmax.f32 %v3768, %v3789
    %vm3791 = vcmp.gt.f32.partialorder %v3790, -inf
    %v3792 = vsub.f32 %v3768, %v3790
    %v3793 = vmul.f32 %v3792, 1.442695
    %v3794 = vpow.pop %v3793
    %v3795 = vsel %vm3791, %v3794, 0.0
    %v3797 = vlaneseq
    %v3798 = vshrl.u32 %v3797, 7
    %v3799 = vsub.s32 0, %v3798
    %v3800 = vrot.slane %v3790, %v3799
    %v3802 = vsub.f32 %v3743, %v3800
    %v3803 = vsub.f32 %v3744, %v3800
    %v3804 = vsub.f32 %v3745, %v3800
    %v3805 = vsub.f32 %v3746, %v3800
    %v3806 = vsub.f32 %v3747, %v3800
    %v3807 = vsub.f32 %v3748, %v3800
    %v3808 = vsub.f32 %v3749, %v3800
    %v3809 = vsub.f32 %v3750, %v3800
    %v3810 = vmul.f32 %v3802, 1.442695
    %v3811 = vpow.pop %v3810
    %v3812 = vmul.f32 %v3803, 1.442695
    %v3813 = vpow.pop %v3812
    %v3814 = vmul.f32 %v3804, 1.442695
    %v3815 = vpow.pop %v3814
    %v3816 = vmul.f32 %v3805, 1.442695
    %v3817 = vpow.pop %v3816
    %v3818 = vmul.f32 %v3806, 1.442695
    %v3819 = vpow.pop %v3818
    %v3820 = vmul.f32 %v3807, 1.442695
    %v3821 = vpow.pop %v3820
    %v3822 = vmul.f32 %v3808, 1.442695
    %v3823 = vpow.pop %v3822
    %v3824 = vmul.f32 %v3809, 1.442695
    %v3825 = vpow.pop %v3824
    %v3826 = vsel %vm2402, %v3811, 0.0
    %v3827 = vsel %vm2403, %v3813, 0.0
    %v3828 = vsel %vm2404, %v3815, 0.0
    %v3829 = vsel %vm2405, %v3817, 0.0
    %v3830 = vsel %vm2406, %v3819, 0.0
    %v3831 = vsel %vm2407, %v3821, 0.0
    %v3832 = vsel %vm2408, %v3823, 0.0
    %v3833 = vsel %vm2409, %v3825, 0.0
    %v3834 = vld [vmem:[#allocation3] sm:$0x1]
    %v3835 = vmul.f32 %v3795, %v3834
    %v3836 = vsel %vm3751, %v3826, 0.0
    %v3837 = vsel %vm3751, %v3827, 0.0
    %v3838 = vadd.f32 %v3836, %v3837
    %v3839 = vsel %vm3751, %v3828, 0.0
    %v3840 = vadd.f32 %v3838, %v3839
    %v3841 = vsel %vm3751, %v3829, 0.0
    %v3842 = vadd.f32 %v3840, %v3841
    %v3843 = vsel %vm3751, %v3830, 0.0
    %v3844 = vadd.f32 %v3842, %v3843
    %v3845 = vsel %vm3751, %v3831, 0.0
    %v3846 = vadd.f32 %v3844, %v3845
    %v3847 = vsel %vm3751, %v3832, 0.0
    %v3848 = vadd.f32 %v3846, %v3847
    %v3849 = vsel %vm3751, %v3833, 0.0
    %v3850 = vadd.f32 %v3848, %v3849
    %v3851 = vrot.slane %v3850, 4
    %v3852 = vadd.f32 %v3850, %v3851
    %v3853 = vrot.slane %v3852, 2
    %v3854 = vadd.f32 %v3852, %v3853
    %v3855 = vrot.slane %v3854, 1
    %v3856 = vadd.f32 %v3854, %v3855
    %v3857 = vadd.f32 %v3835, %v3856
    %vm3858 = vcmask 0
    %3859 = vst.msk [vmem:[#allocation3] sm:$0x1] %vm3858, %v3857
    %v3860 = vld [vmem:[#allocation4] sm:$0xf]
    %3862 = vset.pattern.permute.xlu0 0
    %3863 = vperm.xlu0 %3862, %v3795
    %v3864 = vpop.permute.xlu0 %3863
    %v3866 = vlaneseq
    %v3867 = vshrl.u32 %v3866, 7
    %v3868 = vsub.s32 0, %v3867
    %v3869 = vrot.slane %v3864, %v3868
    %v3870 = vmul.f32 %v3869, %v3860
    %3872 = vset.pattern.permute.xlu0 0
    %3873 = vperm.xlu0 %3872, %v3826
    %v3874 = vpop.permute.xlu0 %3873
    %3877 = vset.pattern.permute.xlu0 0
    %3878 = vperm.xlu0 %3877, %v3827
    %v3879 = vpop.permute.xlu0 %3878
    %3882 = vset.pattern.permute.xlu0 0
    %3883 = vperm.xlu0 %3882, %v3828
    %v3884 = vpop.permute.xlu0 %3883
    %3887 = vset.pattern.permute.xlu0 0
    %3888 = vperm.xlu0 %3887, %v3829
    %v3889 = vpop.permute.xlu0 %3888
    %3892 = vset.pattern.permute.xlu0 0
    %3893 = vperm.xlu0 %3892, %v3830
    %v3894 = vpop.permute.xlu0 %3893
    %3897 = vset.pattern.permute.xlu0 0
    %3898 = vperm.xlu0 %3897, %v3831
    %v3899 = vpop.permute.xlu0 %3898
    %3902 = vset.pattern.permute.xlu0 0
    %3903 = vperm.xlu0 %3902, %v3832
    %v3904 = vpop.permute.xlu0 %3903
    %3907 = vset.pattern.permute.xlu0 0
    %3908 = vperm.xlu0 %3907, %v3833
    %v3909 = vpop.permute.xlu0 %3908
    %v3911 = vmul.f32 %v3874, %v2426
    %v3912 = vmul.f32 %v3874, %v2427
    %v3913 = vmul.f32 %v3874, %v2428
    %v3914 = vmul.f32 %v3874, %v2429
    %v3915 = vmul.f32 %v3879, %v2430
    %v3916 = vmul.f32 %v3879, %v2431
    %v3917 = vmul.f32 %v3879, %v2432
    %v3918 = vmul.f32 %v3879, %v2433
    %v3919 = vmul.f32 %v3884, %v2434
    %v3920 = vmul.f32 %v3884, %v2435
    %v3921 = vmul.f32 %v3884, %v2436
    %v3922 = vmul.f32 %v3884, %v2437
    %v3923 = vmul.f32 %v3889, %v2438
    %v3924 = vmul.f32 %v3889, %v2439
    %v3925 = vmul.f32 %v3889, %v2440
    %v3926 = vmul.f32 %v3889, %v2441
    %v3927 = vmul.f32 %v3894, %v2442
    %v3928 = vmul.f32 %v3894, %v2443
    %v3929 = vmul.f32 %v3894, %v2444
    %v3930 = vmul.f32 %v3894, %v2445
    %v3931 = vmul.f32 %v3899, %v2446
    %v3932 = vmul.f32 %v3899, %v2447
    %v3933 = vmul.f32 %v3899, %v2448
    %v3934 = vmul.f32 %v3899, %v2449
    %v3935 = vmul.f32 %v3904, %v2450
    %v3936 = vmul.f32 %v3904, %v2451
    %v3937 = vmul.f32 %v3904, %v2452
    %v3938 = vmul.f32 %v3904, %v2453
    %v3939 = vmul.f32 %v3909, %v2454
    %v3940 = vmul.f32 %v3909, %v2455
    %v3941 = vmul.f32 %v3909, %v2456
    %v3942 = vmul.f32 %v3909, %v2457
    %v3943 = vadd.f32 %v3911, %v3915
    %v3944 = vadd.f32 %v3943, %v3919
    %v3945 = vadd.f32 %v3944, %v3923
    %v3946 = vadd.f32 %v3945, %v3927
    %v3947 = vadd.f32 %v3946, %v3931
    %v3948 = vadd.f32 %v3947, %v3935
    %v3949 = vadd.f32 %v3948, %v3939
    %v3950 = vrot.slane %v3949, 4
    %v3951 = vadd.f32 %v3949, %v3950
    %v3952 = vrot.slane %v3951, 2
    %v3953 = vadd.f32 %v3951, %v3952
    %v3954 = vrot.slane %v3953, 1
    %v3955 = vadd.f32 %v3953, %v3954
    %v3956 = vadd.f32 %v3912, %v3916
    %v3957 = vadd.f32 %v3956, %v3920
    %v3958 = vadd.f32 %v3957, %v3924
    %v3959 = vadd.f32 %v3958, %v3928
    %v3960 = vadd.f32 %v3959, %v3932
    %v3961 = vadd.f32 %v3960, %v3936
    %v3962 = vadd.f32 %v3961, %v3940
    %v3963 = vrot.slane %v3962, 4
    %v3964 = vadd.f32 %v3962, %v3963
    %v3965 = vrot.slane %v3964, 2
    %v3966 = vadd.f32 %v3964, %v3965
    %v3967 = vrot.slane %v3966, 1
    %v3968 = vadd.f32 %v3966, %v3967
    %v3969 = vadd.f32 %v3913, %v3917
    %v3970 = vadd.f32 %v3969, %v3921
    %v3971 = vadd.f32 %v3970, %v3925
    %v3972 = vadd.f32 %v3971, %v3929
    %v3973 = vadd.f32 %v3972, %v3933
    %v3974 = vadd.f32 %v3973, %v3937
    %v3975 = vadd.f32 %v3974, %v3941
    %v3976 = vrot.slane %v3975, 4
    %v3977 = vadd.f32 %v3975, %v3976
    %v3978 = vrot.slane %v3977, 2
    %v3979 = vadd.f32 %v3977, %v3978
    %v3980 = vrot.slane %v3979, 1
    %v3981 = vadd.f32 %v3979, %v3980
    %v3982 = vadd.f32 %v3914, %v3918
    %v3983 = vadd.f32 %v3982, %v3922
    %v3984 = vadd.f32 %v3983, %v3926
    %v3985 = vadd.f32 %v3984, %v3930
    %v3986 = vadd.f32 %v3985, %v3934
    %v3987 = vadd.f32 %v3986, %v3938
    %v3988 = vadd.f32 %v3987, %v3942
    %v3989 = vrot.slane %v3988, 4
    %v3990 = vadd.f32 %v3988, %v3989
    %v3991 = vrot.slane %v3990, 2
    %v3992 = vadd.f32 %v3990, %v3991
    %v3993 = vrot.slane %v3992, 1
    %v3994 = vadd.f32 %v3992, %v3993
    %v3999 = vcombine.low %v3955, %v3968
    %v4000 = vcombine.low %v3981, %v3994
    %v4002 = vunpack.c.l.s4 1966171168
    %v4003 = vunpack.c.0.s8 %v4002
    %v4004 = vlaneseq
    %v4005 = vshrl.u32 %v4004, 7
    %v4006 = vsub.s32 %v4003, %v4005
    %v4007 = vrot.slane %v3999, %v4006
    %v4009 = vunpack.c.l.s4 1966171168
    %v4010 = vunpack.c.0.s8 %v4009
    %v4011 = vlaneseq
    %v4012 = vshrl.u32 %v4011, 7
    %v4013 = vsub.s32 %v4010, %v4012
    %v4014 = vrot.slane %v4000, %v4013
    %v4015 = vcombine.low %v4007, %v4014
    %v4017 = vunpack.c.l.s4 1966171168
    %v4018 = vunpack.c.0.s8 %v4017
    %v4019 = vlaneseq
    %v4020 = vshrl.u32 %v4019, 7
    %v4021 = vsub.s32 %v4018, %v4020
    %v4022 = vrot.slane %v4015, %v4021
    %v4024 = vadd.f32 %v3870, %v4022
    %v4025 = vlaneseq
    %vm4026 = vcmp.ge.s32.totalorder %v4025, 0
    %vm4027 = vcmp.lt.s32.totalorder %v4025, 512
    %vm4028 = vmand %vm4026, %vm4027
    %4029 = vst.msk [vmem:[#allocation4] sm:$0xf] %vm4028, %v4024
    %4030 = vst.msk [vmem:[#allocation2] sm:$0x1] %vm3858, %v3790
    // Predicated region
    $region46: #{tpu_custom_call.1} parent=1 // pred_check
      %p4031 = pneg %p100
    $region47: #{tpu_custom_call.1} parent=1 // pred_check_branch
      %4033 = sbr.rel (%p4031) target = $region49
    $region48: #{tpu_custom_call.1} parent=1 // pred_region
      %v4034 = vld [vmem:[#allocation2] sm:$0x1]
      %4035 = vst.msk [vmem:[#allocation12] sm:$0x1] %vm3858, %v4034
      %v4036 = vld [vmem:[#allocation3] sm:$0x1]
      %4037 = vst.msk [vmem:[#allocation13] sm:$0x1] %vm3858, %v4036
      %v4038 = vld [vmem:[#allocation4] sm:$0xf]
      %4039 = vst.msk [vmem:[#allocation15] sm:$0xf] %vm4028, %v4038
    $region49: #{tpu_custom_call.1} parent=1 // pred_fallthru
      _
    %s4040 = sadd.s32 0, 0
    %s4041 = smul.u32 8, %s4040
    %p4042 = scmp.lt.s32.totalorder %s4041, 7
    %s4043 = scalar_select %p4042, %s4041, 7
    %s4044 = smul.addr %s4043, 8
    %s4045 = scalar_lea.vmem %s7, %s4044
    // Predicated region
    $region50: #{tpu_custom_call.1} parent=1 // pred_check
      _
    $region51: #{tpu_custom_call.1} parent=1 // pred_check_branch
      %4047 = sbr.rel (0) target = $region53
    $region52: #{tpu_custom_call.1} parent=1 // pred_region
      %s4048 = sadd.s32 0, 0
      %s4049 = smul.u32 8, %s4048
    $region53: #{tpu_custom_call.1} parent=1 // pred_fallthru
      _
    // Predicated region
    $region54: #{tpu_custom_call.1} parent=1 // pred_check
      _
    $region55: #{tpu_custom_call.1} parent=1 // pred_check_branch
      %4051 = sbr.rel (0) target = $region57
    $region56: #{tpu_custom_call.1} parent=1 // pred_region
      %s4053 = ssub.s32 16, 16
      %4054 = vsyncadd [#allocation8], %s4053
      %s4056 = sshll.u32 [#allocation12], 4
      %s4057 = int_to_ptr.vmem [resolvable:$true] %s4056
      %4059 = dma.vmem_to_hbm [thread:$0]  %s4057, 16, %s8, [#allocation8]
    $region57: #{tpu_custom_call.1} parent=1 // pred_fallthru
      _
    // Predicated region
    $region58: #{tpu_custom_call.1} parent=1 // pred_check
      _
    $region59: #{tpu_custom_call.1} parent=1 // pred_check_branch
      %4061 = sbr.rel (0) target = $region61
    $region60: #{tpu_custom_call.1} parent=1 // pred_region
      %s4063 = ssub.s32 16, 16
      %4064 = vsyncadd [#allocation14], %s4063
      %s4066 = sshll.u32 [#allocation13], 4
      %s4067 = int_to_ptr.vmem [resolvable:$true] %s4066
      %4069 = dma.vmem_to_hbm [thread:$0]  %s4067, 16, %s9, [#allocation14]
    $region61: #{tpu_custom_call.1} parent=1 // pred_fallthru
      _
    // Predicated region
    $region62: #{tpu_custom_call.1} parent=1 // pred_check
      _
    $region63: #{tpu_custom_call.1} parent=1 // pred_check_branch
      %4071 = sbr.rel (0) target = $region65
    $region64: #{tpu_custom_call.1} parent=1 // pred_region
      %s4073 = ssub.s32 64, 64
      %4074 = vsyncadd [#allocation14], %s4073
      %s4076 = sshll.u32 [#allocation15], 4
      %s4077 = int_to_ptr.vmem [resolvable:$true] %s4076
      %4079 = dma.vmem_to_hbm [thread:$0]  %s4077, 64, %s10, [#allocation14]
    $region65: #{tpu_custom_call.1} parent=1 // pred_fallthru
      _
    // Predicated region
    $region66: #{tpu_custom_call.1} parent=1 // pred_check
      _
    $region67: #{tpu_custom_call.1} parent=1 // pred_check_branch
      %4081 = sbr.rel (0) target = $region69
    $region68: #{tpu_custom_call.1} parent=1 // pred_region
      %s4082 = sadd.s32 0, 0
      %s4083 = smul.u32 8, %s4082
      %p4084 = scmp.lt.s32.totalorder %s4083, 7
      %s4085 = scalar_select %p4084, %s4083, 7
      %s4086 = smul.addr %s4085, 8
      %s4087 = scalar_lea.vmem %s7, %s4086
    $region69: #{tpu_custom_call.1} parent=1 // pred_fallthru
      _
    // Predicated region
    $region70: #{tpu_custom_call.1} parent=1 // pred_check
      _
    $region71: #{tpu_custom_call.1} parent=1 // pred_check_branch
      %4089 = sbr.rel (0) target = $region73
    $region72: #{tpu_custom_call.1} parent=1 // pred_region
      %4090 = dma.done [#allocation8], 16
    $region73: #{tpu_custom_call.1} parent=1 // pred_fallthru
      _
    // Predicated region
    $region74: #{tpu_custom_call.1} parent=1 // pred_check
      _
    $region75: #{tpu_custom_call.1} parent=1 // pred_check_branch
      %4092 = sbr.rel (0) target = $region77
    $region76: #{tpu_custom_call.1} parent=1 // pred_region
      %4093 = dma.done [#allocation14], 16
    $region77: #{tpu_custom_call.1} parent=1 // pred_fallthru
      _
    // Predicated region
    $region78: #{tpu_custom_call.1} parent=1 // pred_check
      _
    $region79: #{tpu_custom_call.1} parent=1 // pred_check_branch
      %4095 = sbr.rel (0) target = $region81
    $region80: #{tpu_custom_call.1} parent=1 // pred_region
      %4096 = dma.done [#allocation14], 64
    $region81: #{tpu_custom_call.1} parent=1 // pred_fallthru
      _
    %4097 = vsyncpa [#allocation7], 1
    %4098 = vsyncpa [#allocation10], 1
    %4099 = vsyncpa [#allocation8], 1
    %4100 = vsyncpa [#allocation14], 1

</llo_original>
